<compile_context>
chip_gen: v5e
topology: v5e:2x2
jax: 0.10.0
libtpu: 0.0.40
codegen_flags: <defaults>
</compile_context>

<pallas_src>
import functools
import math

import jax
import jax.numpy as jnp
from jax.experimental import pallas as pl
from jax.experimental.pallas import tpu as pltpu

D_FF = 2048        # matches module-level d_ff = 2048
LN_EPS = 1e-5      # PyTorch nn.LayerNorm default


# ----------------------------------------------------------------------------
# Kernel
# ----------------------------------------------------------------------------
def _layer_norm(y, gamma, beta):
    # f32 LayerNorm over the last (feature) axis; rsqrt -> EUP slot.
    mean = jnp.mean(y, axis=-1, keepdims=True)
    var = jnp.mean((y - mean) * (y - mean), axis=-1, keepdims=True)
    return (y - mean) * jax.lax.rsqrt(var + LN_EPS) * gamma + beta


def decoder_kernel(dec_ref, enc_ref,
                   wq_ref, bq_ref, wkv_ref, bkv_ref, wo_ref, bo_ref,
                   g1_ref, be1_ref,
                   w1_ref, b1_ref, w2_ref, b2_ref,
                   g2_ref, be2_ref,
                   out_ref, *, n_heads: int):
    """One (batch element, layer) step of the fused decoder stack.

    The output block's index depends only on the batch grid axis, so the same
    VMEM buffer is revisited across the layer axis and acts as the hidden
    state carry between layers.
    """
    l = pl.program_id(1)

    @pl.when(l == 0)
    def _():
        # TODO(synk): GPT-2 embedding sub-module not reproduced; identity.
        out_ref[0] = dec_ref[0]

    x = out_ref[0]                       # (Sq, D)  f32 hidden state / residual
    e = enc_ref[0]                       # (Sk, D)  f32 encoder output

    Sq, D = x.shape
    Sk = e.shape[0]
    d_k = D // n_heads
    scale = 1.0 / math.sqrt(d_k)

    x_bf = x.astype(jnp.bfloat16)
    e_bf = e.astype(jnp.bfloat16)

    # ---- Multi-head cross attention (Q from decoder, K/V from encoder) ----
    q = jnp.dot(x_bf, wq_ref[0], preferred_element_type=jnp.float32) + bq_ref[0]
    kv = jnp.dot(e_bf, wkv_ref[0], preferred_element_type=jnp.float32) + bkv_ref[0]
    k = kv[:, :D]
    v = kv[:, D:]

    # (S, D) -> (H, S, d_k): all heads handled by one batched contraction.
    q_h = jnp.swapaxes(q.reshape(Sq, n_heads, d_k), 0, 1).astype(jnp.bfloat16)
    k_h = jnp.swapaxes(k.reshape(Sk, n_heads, d_k), 0, 1).astype(jnp.bfloat16)
    v_h = jnp.swapaxes(v.reshape(Sk, n_heads, d_k), 0, 1).astype(jnp.bfloat16)

    scores = jnp.einsum('hqd,hkd->hqk', q_h, k_h,
                        preferred_element_type=jnp.float32) * scale
    m = jnp.max(scores, axis=-1, keepdims=True)
    p = jnp.exp(scores - m)
    denom = jnp.sum(p, axis=-1, keepdims=True)
    attn = p * pl.reciprocal(denom, approx=True)

    ctx = jnp.einsum('hqk,hkd->hqd', attn.astype(jnp.bfloat16), v_h,
                     preferred_element_type=jnp.float32)
    ctx = jnp.swapaxes(ctx, 0, 1).reshape(Sq, D)          # (Sq, D)

    o = jnp.dot(ctx.astype(jnp.bfloat16), wo_ref[0],
                preferred_element_type=jnp.float32) + bo_ref[0]
    y = _layer_norm(o + x, g1_ref[0], be1_ref[0])          # residual + LN (f32)

    # ---- Position-wise FFN (Conv1d k=1 == per-position linear) ----
    h1 = jnp.dot(y.astype(jnp.bfloat16), w1_ref[0],
                 preferred_element_type=jnp.float32) + b1_ref[0]
    h1 = jnp.maximum(h1, 0.0)                              # ReLU
    h2 = jnp.dot(h1.astype(jnp.bfloat16), w2_ref[0],
                 preferred_element_type=jnp.float32) + b2_ref[0]
    y2 = _layer_norm(h2 + y, g2_ref[0], be2_ref[0])        # residual + LN (f32)

    out_ref[0] = y2                                        # carry to next layer


# ----------------------------------------------------------------------------
# Wrapper
# ----------------------------------------------------------------------------
def decoder_forward(dec_inputs, enc_outputs, params, n_heads):
    """Runs the full n_layers decoder stack in a single pallas_call."""
    B, Sq, D = dec_inputs.shape
    _, Sk, _ = enc_outputs.shape
    L = params["wq"].shape[0]
    dff = params["w1"].shape[2]

    act_map = lambda b, l: (b, 0, 0)     # activations / output: per-batch block
    w_map = lambda b, l: (l, 0, 0)       # stacked weights: per-layer block

    kernel = functools.partial(decoder_kernel, n_heads=n_heads)

    return pl.pallas_call(
        kernel,
        out_shape=jax.ShapeDtypeStruct((B, Sq, D), jnp.float32),
        grid=(B, L),
        in_specs=[
            pl.BlockSpec((1, Sq, D), act_map),        # dec hidden (layer-0 input)
            pl.BlockSpec((1, Sk, D), act_map),        # encoder outputs
            pl.BlockSpec((1, D, D), w_map),           # W_Q
            pl.BlockSpec((1, 1, D), w_map),           # b_Q
            pl.BlockSpec((1, D, 2 * D), w_map),       # W_K | W_V fused
            pl.BlockSpec((1, 1, 2 * D), w_map),       # b_K | b_V fused
            pl.BlockSpec((1, D, D), w_map),           # li1 (W_O)
            pl.BlockSpec((1, 1, D), w_map),           # b_O
            pl.BlockSpec((1, 1, D), w_map),           # attn LN gamma
            pl.BlockSpec((1, 1, D), w_map),           # attn LN beta
            pl.BlockSpec((1, D, dff), w_map),         # conv1 (k=1) weight
            pl.BlockSpec((1, 1, dff), w_map),         # conv1 bias
            pl.BlockSpec((1, dff, D), w_map),         # conv2 (k=1) weight
            pl.BlockSpec((1, 1, D), w_map),           # conv2 bias
            pl.BlockSpec((1, 1, D), w_map),           # ffn LN gamma
            pl.BlockSpec((1, 1, D), w_map),           # ffn LN beta
        ],
        out_specs=pl.BlockSpec((1, Sq, D), act_map),
        compiler_params=pltpu.CompilerParams(
            dimension_semantics=("parallel", "arbitrary")),
    )(dec_inputs, enc_outputs,
      params["wq"], params["bq"], params["wkv"], params["bkv"],
      params["wo"], params["bo"], params["ln1_g"], params["ln1_b"],
      params["w1"], params["b1"], params["w2"], params["b2"],
      params["ln2_g"], params["ln2_b"])


# ----------------------------------------------------------------------------
# Deterministic parameter construction (weights stacked over layers)
# ----------------------------------------------------------------------------
def init_params(key, n_layers, d_model, d_ff):
    ks = jax.random.split(key, 5)
    s = 0.05
    f32, bf16 = jnp.float32, jnp.bfloat16
    L, D = n_layers, d_model
    return {
        # matmul weights in bf16 (MXU-native); biases / LN params in f32
        "wq":   (s * jax.random.normal(ks[0], (L, D, D), f32)).astype(bf16),
        "bq":   jnp.zeros((L, 1, D), f32),
        "wkv":  (s * jax.random.normal(ks[1], (L, D, 2 * D), f32)).astype(bf16),
        "bkv":  jnp.zeros((L, 1, 2 * D), f32),
        "wo":   (s * jax.random.normal(ks[2], (L, D, D), f32)).astype(bf16),
        "bo":   jnp.zeros((L, 1, D), f32),
        "ln1_g": jnp.ones((L, 1, D), f32),
        "ln1_b": jnp.zeros((L, 1, D), f32),
        "w1":   (s * jax.random.normal(ks[3], (L, D, d_ff), f32)).astype(bf16),
        "b1":   jnp.zeros((L, 1, d_ff), f32),
        "w2":   (s * jax.random.normal(ks[4], (L, d_ff, D), f32)).astype(bf16),
        "b2":   jnp.zeros((L, 1, D), f32),
        "ln2_g": jnp.ones((L, 1, D), f32),
        "ln2_b": jnp.zeros((L, 1, D), f32),
    }


# ----------------------------------------------------------------------------
if __name__ == "__main__":
    B, S_dec, S_enc = 2, 8, 8
    d_model, n_heads, n_layers = 32, 4, 2

    key = jax.random.PRNGKey(0)
    k_dec, k_enc, k_par = jax.random.split(key, 3)

    # dec_inputs: treated as already-embedded hidden states (see TODO above).
    dec_inputs = jax.random.normal(k_dec, (B, S_dec, d_model), jnp.float32)
    enc_outputs = jax.random.normal(k_enc, (B, S_enc, d_model), jnp.float32)

    params = init_params(k_par, n_layers, d_model, D_FF)

    out = decoder_forward(dec_inputs, enc_outputs, params, n_heads)
    out = jax.block_until_ready(out)

    assert out.shape == (B, S_dec, d_model)
    assert jnp.all(jnp.isfinite(out))
    print("KERNEL_OK")
</pallas_src>

<mosaic_0001>
module attributes {stable_mosaic.version = 11 : i64} {
  func.func @decoder_kernel(%arg0: i32, %arg1: i32, %arg2: memref<1x8x32xf32, #tpu.memory_space<vmem>>, %arg3: memref<1x8x32xf32, #tpu.memory_space<vmem>>, %arg4: memref<1x32x32xbf16, #tpu.memory_space<vmem>>, %arg5: memref<1x1x32xf32, #tpu.memory_space<vmem>>, %arg6: memref<1x32x64xbf16, #tpu.memory_space<vmem>>, %arg7: memref<1x1x64xf32, #tpu.memory_space<vmem>>, %arg8: memref<1x32x32xbf16, #tpu.memory_space<vmem>>, %arg9: memref<1x1x32xf32, #tpu.memory_space<vmem>>, %arg10: memref<1x1x32xf32, #tpu.memory_space<vmem>>, %arg11: memref<1x1x32xf32, #tpu.memory_space<vmem>>, %arg12: memref<1x32x2048xbf16, #tpu.memory_space<vmem>>, %arg13: memref<1x1x2048xf32, #tpu.memory_space<vmem>>, %arg14: memref<1x2048x32xbf16, #tpu.memory_space<vmem>>, %arg15: memref<1x1x32xf32, #tpu.memory_space<vmem>>, %arg16: memref<1x1x32xf32, #tpu.memory_space<vmem>>, %arg17: memref<1x1x32xf32, #tpu.memory_space<vmem>>, %arg18: memref<1x8x32xf32, #tpu.memory_space<vmem>>) attributes {dimension_semantics = [#tpu.dimension_semantics<parallel>, #tpu.dimension_semantics<arbitrary>], iteration_bounds = array<i64: 2, 2>, scalar_prefetch = 0 : i64, scratch_operands = 0 : i64, tpu.core_type = #tpu.core_type<tc>, window_params = [{transform_indices = @transform_0, window_bounds = array<i64: 1, 8, 32>}, {transform_indices = @transform_1, window_bounds = array<i64: 1, 8, 32>}, {transform_indices = @transform_2, window_bounds = array<i64: 1, 32, 32>}, {transform_indices = @transform_3, window_bounds = array<i64: 1, 1, 32>}, {transform_indices = @transform_4, window_bounds = array<i64: 1, 32, 64>}, {transform_indices = @transform_5, window_bounds = array<i64: 1, 1, 64>}, {transform_indices = @transform_6, window_bounds = array<i64: 1, 32, 32>}, {transform_indices = @transform_7, window_bounds = array<i64: 1, 1, 32>}, {transform_indices = @transform_8, window_bounds = array<i64: 1, 1, 32>}, {transform_indices = @transform_9, window_bounds = array<i64: 1, 1, 32>}, {transform_indices = @transform_10, window_bounds = array<i64: 1, 32, 2048>}, {transform_indices = @transform_11, window_bounds = array<i64: 1, 1, 2048>}, {transform_indices = @transform_12, window_bounds = array<i64: 1, 2048, 32>}, {transform_indices = @transform_13, window_bounds = array<i64: 1, 1, 32>}, {transform_indices = @transform_14, window_bounds = array<i64: 1, 1, 32>}, {transform_indices = @transform_15, window_bounds = array<i64: 1, 1, 32>}, {transform_indices = @transform_16, window_bounds = array<i64: 1, 8, 32>}]} {
    %c0_i32 = arith.constant 0 : i32
    %0 = arith.cmpi eq, %arg1, %c0_i32 : i32
    %1 = arith.extui %0 : i1 to i32
    %c0_i32_0 = arith.constant 0 : i32
    %2 = arith.cmpi ne, %1, %c0_i32_0 : i32
    scf.if %2 {
      %c0_71 = arith.constant 0 : index
      %c0_72 = arith.constant 0 : index
      %c0_73 = arith.constant 0 : index
      %138 = vector.load %arg2[%c0_71, %c0_72, %c0_73] : memref<1x8x32xf32, #tpu.memory_space<vmem>>, vector<1x8x32xf32>
      %139 = vector.shape_cast %138 : vector<1x8x32xf32> to vector<8x32xf32>
      %c0_74 = arith.constant 0 : index
      %c0_75 = arith.constant 0 : index
      %c0_76 = arith.constant 0 : index
      %140 = vector.load %arg18[%c0_74, %c0_75, %c0_76] : memref<1x8x32xf32, #tpu.memory_space<vmem>>, vector<1x8x32xf32>
      %141 = vector.shape_cast %140 : vector<1x8x32xf32> to vector<8x32xf32>
      %142 = vector.shape_cast %139 : vector<8x32xf32> to vector<1x8x32xf32>
      tpu.vector_store %arg18[%c0_74, %c0_75, %c0_76], %142 {strides = array<i32>} : memref<1x8x32xf32, #tpu.memory_space<vmem>>, vector<1x8x32xf32>,
    } else {
    }
    %c0 = arith.constant 0 : index
    %c0_1 = arith.constant 0 : index
    %c0_2 = arith.constant 0 : index
    %3 = vector.load %arg18[%c0, %c0_1, %c0_2] : memref<1x8x32xf32, #tpu.memory_space<vmem>>, vector<1x8x32xf32>
    %4 = vector.shape_cast %3 : vector<1x8x32xf32> to vector<8x32xf32>
    %c0_3 = arith.constant 0 : index
    %c0_4 = arith.constant 0 : index
    %c0_5 = arith.constant 0 : index
    %5 = vector.load %arg3[%c0_3, %c0_4, %c0_5] : memref<1x8x32xf32, #tpu.memory_space<vmem>>, vector<1x8x32xf32>
    %6 = vector.shape_cast %5 : vector<1x8x32xf32> to vector<8x32xf32>
    %7 = arith.truncf %4 : vector<8x32xf32> to vector<8x32xbf16>
    %8 = arith.truncf %6 : vector<8x32xf32> to vector<8x32xbf16>
    %c0_6 = arith.constant 0 : index
    %c0_7 = arith.constant 0 : index
    %c0_8 = arith.constant 0 : index
    %9 = vector.load %arg4[%c0_6, %c0_7, %c0_8] : memref<1x32x32xbf16, #tpu.memory_space<vmem>>, vector<1x32x32xbf16>
    %10 = vector.shape_cast %9 : vector<1x32x32xbf16> to vector<32x32xbf16>
    %cst = arith.constant dense<0.000000e+00> : vector<8x32xf32>
    %11 = tpu.matmul %7, %10, %cst {dimension_numbers = #tpu.dot_dimension_numbers<[1], [0], [0], [1], [0, 0, 1, 1], [], []>} : vector<8x32xbf16>, vector<32x32xbf16>, vector<8x32xf32> -> vector<8x32xf32>
    %c0_9 = arith.constant 0 : index
    %c0_10 = arith.constant 0 : index
    %c0_11 = arith.constant 0 : index
    %12 = vector.load %arg5[%c0_9, %c0_10, %c0_11] : memref<1x1x32xf32, #tpu.memory_space<vmem>>, vector<1x1x32xf32>
    %13 = vector.shape_cast %12 : vector<1x1x32xf32> to vector<1x32xf32>
    %14 = vector.broadcast %13 : vector<1x32xf32> to vector<8x32xf32>
    %15 = arith.addf %11, %14 : vector<8x32xf32>
    %c0_12 = arith.constant 0 : index
    %c0_13 = arith.constant 0 : index
    %c0_14 = arith.constant 0 : index
    %16 = vector.load %arg6[%c0_12, %c0_13, %c0_14] : memref<1x32x64xbf16, #tpu.memory_space<vmem>>, vector<1x32x64xbf16>
    %17 = vector.shape_cast %16 : vector<1x32x64xbf16> to vector<32x64xbf16>
    %cst_15 = arith.constant dense<0.000000e+00> : vector<8x64xf32>
    %18 = tpu.matmul %8, %17, %cst_15 {dimension_numbers = #tpu.dot_dimension_numbers<[1], [0], [0], [1], [0, 0, 1, 1], [], []>} : vector<8x32xbf16>, vector<32x64xbf16>, vector<8x64xf32> -> vector<8x64xf32>
    %c0_16 = arith.constant 0 : index
    %c0_17 = arith.constant 0 : index
    %c0_18 = arith.constant 0 : index
    %19 = vector.load %arg7[%c0_16, %c0_17, %c0_18] : memref<1x1x64xf32, #tpu.memory_space<vmem>>, vector<1x1x64xf32>
    %20 = vector.shape_cast %19 : vector<1x1x64xf32> to vector<1x64xf32>
    %21 = vector.broadcast %20 : vector<1x64xf32> to vector<8x64xf32>
    %22 = arith.addf %18, %21 : vector<8x64xf32>
    %23 = vector.extract_strided_slice %22 {offsets = [0, 0], sizes = [8, 32], strides = [1, 1]} : vector<8x64xf32> to vector<8x32xf32>
    %24 = vector.extract_strided_slice %22 {offsets = [0, 32], sizes = [8, 32], strides = [1, 1]} : vector<8x64xf32> to vector<8x32xf32>
    %25 = vector.shape_cast %15 : vector<8x32xf32> to vector<8x4x8xf32>
    %26 = tpu.transpose %25, [1, 0, 2] : vector<8x4x8xf32> -> vector<4x8x8xf32>
    %27 = arith.truncf %26 : vector<4x8x8xf32> to vector<4x8x8xbf16>
    %28 = vector.shape_cast %23 : vector<8x32xf32> to vector<8x4x8xf32>
    %29 = tpu.transpose %28, [1, 0, 2] : vector<8x4x8xf32> -> vector<4x8x8xf32>
    %30 = arith.truncf %29 : vector<4x8x8xf32> to vector<4x8x8xbf16>
    %31 = vector.shape_cast %24 : vector<8x32xf32> to vector<8x4x8xf32>
    %32 = tpu.transpose %31, [1, 0, 2] : vector<8x4x8xf32> -> vector<4x8x8xf32>
    %33 = arith.truncf %32 : vector<4x8x8xf32> to vector<4x8x8xbf16>
    "tpu.trace_start"() <{level = 10 : i32, message = "hqd,hkd->hqk"}> : () -> ()
    %cst_19 = arith.constant dense<0.000000e+00> : vector<4x8x8xf32>
    %34 = tpu.matmul %27, %30, %cst_19 {dimension_numbers = #tpu.dot_dimension_numbers<[2], [2], [1], [1], [0, 0, 0, 1, 1, 1], [0], [0]>} : vector<4x8x8xbf16>, vector<4x8x8xbf16>, vector<4x8x8xf32> -> vector<4x8x8xf32>
    "tpu.trace_stop"() : () -> ()
    %cst_20 = arith.constant 0.353553385 : f32
    %35 = vector.broadcast %cst_20 : f32 to vector<4x8x8xf32>
    %36 = arith.mulf %34, %35 : vector<4x8x8xf32>
    %cst_21 = arith.constant dense<0xFF800000> : vector<4x8xf32>
    %37 = vector.multi_reduction <maximumf>, %36, %cst_21 [2] : vector<4x8x8xf32> to vector<4x8xf32>
    %38 = vector.shape_cast %37 : vector<4x8xf32> to vector<4x8x1xf32>
    %39 = vector.broadcast %38 : vector<4x8x1xf32> to vector<4x8x8xf32>
    %40 = arith.subf %36, %39 : vector<4x8x8xf32>
    %41 = math.exp %40 : vector<4x8x8xf32>
    %cst_22 = arith.constant dense<0.000000e+00> : vector<4x8xf32>
    %42 = vector.multi_reduction <add>, %41, %cst_22 [2] : vector<4x8x8xf32> to vector<4x8xf32>
    %43 = vector.shape_cast %42 : vector<4x8xf32> to vector<4x8x1xf32>
    %44 = tpu.reciprocal %43 {approx = true} : vector<4x8x1xf32> -> vector<4x8x1xf32>
    %45 = vector.broadcast %44 : vector<4x8x1xf32> to vector<4x8x8xf32>
    %46 = arith.mulf %41, %45 : vector<4x8x8xf32>
    %47 = arith.truncf %46 : vector<4x8x8xf32> to vector<4x8x8xbf16>
    "tpu.trace_start"() <{level = 10 : i32, message = "hqk,hkd->hqd"}> : () -> ()
    %cst_23 = arith.constant dense<0.000000e+00> : vector<4x8x8xf32>
    %48 = tpu.matmul %47, %33, %cst_23 {dimension_numbers = #tpu.dot_dimension_numbers<[2], [1], [1], [2], [0, 0, 0, 1, 1, 2], [0], [0]>} : vector<4x8x8xbf16>, vector<4x8x8xbf16>, vector<4x8x8xf32> -> vector<4x8x8xf32>
    "tpu.trace_stop"() : () -> ()
    %49 = tpu.transpose %48, [1, 0, 2] : vector<4x8x8xf32> -> vector<8x4x8xf32>
    %50 = vector.shape_cast %49 : vector<8x4x8xf32> to vector<8x32xf32>
    %51 = arith.truncf %50 : vector<8x32xf32> to vector<8x32xbf16>
    %c0_24 = arith.constant 0 : index
    %c0_25 = arith.constant 0 : index
    %c0_26 = arith.constant 0 : index
    %52 = vector.load %arg8[%c0_24, %c0_25, %c0_26] : memref<1x32x32xbf16, #tpu.memory_space<vmem>>, vector<1x32x32xbf16>
    %53 = vector.shape_cast %52 : vector<1x32x32xbf16> to vector<32x32xbf16>
    %cst_27 = arith.constant dense<0.000000e+00> : vector<8x32xf32>
    %54 = tpu.matmul %51, %53, %cst_27 {dimension_numbers = #tpu.dot_dimension_numbers<[1], [0], [0], [1], [0, 0, 1, 1], [], []>} : vector<8x32xbf16>, vector<32x32xbf16>, vector<8x32xf32> -> vector<8x32xf32>
    %c0_28 = arith.constant 0 : index
    %c0_29 = arith.constant 0 : index
    %c0_30 = arith.constant 0 : index
    %55 = vector.load %arg9[%c0_28, %c0_29, %c0_30] : memref<1x1x32xf32, #tpu.memory_space<vmem>>, vector<1x1x32xf32>
    %56 = vector.shape_cast %55 : vector<1x1x32xf32> to vector<1x32xf32>
    %57 = vector.broadcast %56 : vector<1x32xf32> to vector<8x32xf32>
    %58 = arith.addf %54, %57 : vector<8x32xf32>
    %59 = arith.addf %58, %4 : vector<8x32xf32>
    %c0_31 = arith.constant 0 : index
    %c0_32 = arith.constant 0 : index
    %c0_33 = arith.constant 0 : index
    %60 = vector.load %arg10[%c0_31, %c0_32, %c0_33] : memref<1x1x32xf32, #tpu.memory_space<vmem>>, vector<1x1x32xf32>
    %61 = vector.shape_cast %60 : vector<1x1x32xf32> to vector<1x32xf32>
    %c0_34 = arith.constant 0 : index
    %c0_35 = arith.constant 0 : index
    %c0_36 = arith.constant 0 : index
    %62 = vector.load %arg11[%c0_34, %c0_35, %c0_36] : memref<1x1x32xf32, #tpu.memory_space<vmem>>, vector<1x1x32xf32>
    %63 = vector.shape_cast %62 : vector<1x1x32xf32> to vector<1x32xf32>
    %cst_37 = arith.constant dense<0.000000e+00> : vector<8xf32>
    %64 = vector.multi_reduction <add>, %59, %cst_37 [1] : vector<8x32xf32> to vector<8xf32>
    %65 = vector.shape_cast %64 : vector<8xf32> to vector<8x1xf32>
    %cst_38 = arith.constant 3.200000e+01 : f32
    %66 = vector.broadcast %cst_38 : f32 to vector<8x1xf32>
    %67 = arith.divf %65, %66 : vector<8x1xf32>
    %68 = vector.broadcast %67 : vector<8x1xf32> to vector<8x32xf32>
    %69 = arith.subf %59, %68 : vector<8x32xf32>
    %70 = vector.broadcast %67 : vector<8x1xf32> to vector<8x32xf32>
    %71 = arith.subf %59, %70 : vector<8x32xf32>
    %72 = arith.mulf %69, %71 : vector<8x32xf32>
    %cst_39 = arith.constant dense<0.000000e+00> : vector<8xf32>
    %73 = vector.multi_reduction <add>, %72, %cst_39 [1] : vector<8x32xf32> to vector<8xf32>
    %74 = vector.shape_cast %73 : vector<8xf32> to vector<8x1xf32>
    %cst_40 = arith.constant 3.200000e+01 : f32
    %75 = vector.broadcast %cst_40 : f32 to vector<8x1xf32>
    %76 = arith.divf %74, %75 : vector<8x1xf32>
    %77 = vector.broadcast %67 : vector<8x1xf32> to vector<8x32xf32>
    %78 = arith.subf %59, %77 : vector<8x32xf32>
    %cst_41 = arith.constant 9.99999974E-6 : f32
    %79 = vector.broadcast %cst_41 : f32 to vector<8x1xf32>
    %80 = arith.addf %76, %79 : vector<8x1xf32>
    %81 = math.rsqrt %80 : vector<8x1xf32>
    %82 = vector.broadcast %81 : vector<8x1xf32> to vector<8x32xf32>
    %83 = arith.mulf %78, %82 : vector<8x32xf32>
    %84 = vector.broadcast %61 : vector<1x32xf32> to vector<8x32xf32>
    %85 = arith.mulf %83, %84 : vector<8x32xf32>
    %86 = vector.broadcast %63 : vector<1x32xf32> to vector<8x32xf32>
    %87 = arith.addf %85, %86 : vector<8x32xf32>
    %88 = arith.truncf %87 : vector<8x32xf32> to vector<8x32xbf16>
    %c0_42 = arith.constant 0 : index
    %c0_43 = arith.constant 0 : index
    %c0_44 = arith.constant 0 : index
    %89 = vector.load %arg12[%c0_42, %c0_43, %c0_44] : memref<1x32x2048xbf16, #tpu.memory_space<vmem>>, vector<1x32x2048xbf16>
    %90 = vector.shape_cast %89 : vector<1x32x2048xbf16> to vector<32x2048xbf16>
    %cst_45 = arith.constant dense<0.000000e+00> : vector<8x2048xf32>
    %91 = tpu.matmul %88, %90, %cst_45 {dimension_numbers = #tpu.dot_dimension_numbers<[1], [0], [0], [1], [0, 0, 1, 1], [], []>} : vector<8x32xbf16>, vector<32x2048xbf16>, vector<8x2048xf32> -> vector<8x2048xf32>
    %c0_46 = arith.constant 0 : index
    %c0_47 = arith.constant 0 : index
    %c0_48 = arith.constant 0 : index
    %92 = vector.load %arg13[%c0_46, %c0_47, %c0_48] : memref<1x1x2048xf32, #tpu.memory_space<vmem>>, vector<1x1x2048xf32>
    %93 = vector.shape_cast %92 : vector<1x1x2048xf32> to vector<1x2048xf32>
    %94 = vector.broadcast %93 : vector<1x2048xf32> to vector<8x2048xf32>
    %95 = arith.addf %91, %94 : vector<8x2048xf32>
    %cst_49 = arith.constant 0.000000e+00 : f32
    %96 = vector.broadcast %cst_49 : f32 to vector<8x2048xf32>
    %97 = arith.maximumf %95, %96 : vector<8x2048xf32>
    %98 = arith.truncf %97 : vector<8x2048xf32> to vector<8x2048xbf16>
    %c0_50 = arith.constant 0 : index
    %c0_51 = arith.constant 0 : index
    %c0_52 = arith.constant 0 : index
    %99 = vector.load %arg14[%c0_50, %c0_51, %c0_52] : memref<1x2048x32xbf16, #tpu.memory_space<vmem>>, vector<1x2048x32xbf16>
    %100 = vector.shape_cast %99 : vector<1x2048x32xbf16> to vector<2048x32xbf16>
    %cst_53 = arith.constant dense<0.000000e+00> : vector<8x32xf32>
    %101 = tpu.matmul %98, %100, %cst_53 {dimension_numbers = #tpu.dot_dimension_numbers<[1], [0], [0], [1], [0, 0, 1, 1], [], []>} : vector<8x2048xbf16>, vector<2048x32xbf16>, vector<8x32xf32> -> vector<8x32xf32>
    %c0_54 = arith.constant 0 : index
    %c0_55 = arith.constant 0 : index
    %c0_56 = arith.constant 0 : index
    %102 = vector.load %arg15[%c0_54, %c0_55, %c0_56] : memref<1x1x32xf32, #tpu.memory_space<vmem>>, vector<1x1x32xf32>
    %103 = vector.shape_cast %102 : vector<1x1x32xf32> to vector<1x32xf32>
    %104 = vector.broadcast %103 : vector<1x32xf32> to vector<8x32xf32>
    %105 = arith.addf %101, %104 : vector<8x32xf32>
    %106 = arith.addf %105, %87 : vector<8x32xf32>
    %c0_57 = arith.constant 0 : index
    %c0_58 = arith.constant 0 : index
    %c0_59 = arith.constant 0 : index
    %107 = vector.load %arg16[%c0_57, %c0_58, %c0_59] : memref<1x1x32xf32, #tpu.memory_space<vmem>>, vector<1x1x32xf32>
    %108 = vector.shape_cast %107 : vector<1x1x32xf32> to vector<1x32xf32>
    %c0_60 = arith.constant 0 : index
    %c0_61 = arith.constant 0 : index
    %c0_62 = arith.constant 0 : index
    %109 = vector.load %arg17[%c0_60, %c0_61, %c0_62] : memref<1x1x32xf32, #tpu.memory_space<vmem>>, vector<1x1x32xf32>
    %110 = vector.shape_cast %109 : vector<1x1x32xf32> to vector<1x32xf32>
    %cst_63 = arith.constant dense<0.000000e+00> : vector<8xf32>
    %111 = vector.multi_reduction <add>, %106, %cst_63 [1] : vector<8x32xf32> to vector<8xf32>
    %112 = vector.shape_cast %111 : vector<8xf32> to vector<8x1xf32>
    %cst_64 = arith.constant 3.200000e+01 : f32
    %113 = vector.broadcast %cst_64 : f32 to vector<8x1xf32>
    %114 = arith.divf %112, %113 : vector<8x1xf32>
    %115 = vector.broadcast %114 : vector<8x1xf32> to vector<8x32xf32>
    %116 = arith.subf %106, %115 : vector<8x32xf32>
    %117 = vector.broadcast %114 : vector<8x1xf32> to vector<8x32xf32>
    %118 = arith.subf %106, %117 : vector<8x32xf32>
    %119 = arith.mulf %116, %118 : vector<8x32xf32>
    %cst_65 = arith.constant dense<0.000000e+00> : vector<8xf32>
    %120 = vector.multi_reduction <add>, %119, %cst_65 [1] : vector<8x32xf32> to vector<8xf32>
    %121 = vector.shape_cast %120 : vector<8xf32> to vector<8x1xf32>
    %cst_66 = arith.constant 3.200000e+01 : f32
    %122 = vector.broadcast %cst_66 : f32 to vector<8x1xf32>
    %123 = arith.divf %121, %122 : vector<8x1xf32>
    %124 = vector.broadcast %114 : vector<8x1xf32> to vector<8x32xf32>
    %125 = arith.subf %106, %124 : vector<8x32xf32>
    %cst_67 = arith.constant 9.99999974E-6 : f32
    %126 = vector.broadcast %cst_67 : f32 to vector<8x1xf32>
    %127 = arith.addf %123, %126 : vector<8x1xf32>
    %128 = math.rsqrt %127 : vector<8x1xf32>
    %129 = vector.broadcast %128 : vector<8x1xf32> to vector<8x32xf32>
    %130 = arith.mulf %125, %129 : vector<8x32xf32>
    %131 = vector.broadcast %108 : vector<1x32xf32> to vector<8x32xf32>
    %132 = arith.mulf %130, %131 : vector<8x32xf32>
    %133 = vector.broadcast %110 : vector<1x32xf32> to vector<8x32xf32>
    %134 = arith.addf %132, %133 : vector<8x32xf32>
    %c0_68 = arith.constant 0 : index
    %c0_69 = arith.constant 0 : index
    %c0_70 = arith.constant 0 : index
    %135 = vector.load %arg18[%c0_68, %c0_69, %c0_70] : memref<1x8x32xf32, #tpu.memory_space<vmem>>, vector<1x8x32xf32>
    %136 = vector.shape_cast %135 : vector<1x8x32xf32> to vector<8x32xf32>
    %137 = vector.shape_cast %134 : vector<8x32xf32> to vector<1x8x32xf32>
    tpu.vector_store %arg18[%c0_68, %c0_69, %c0_70], %137 {strides = array<i32>} : memref<1x8x32xf32, #tpu.memory_space<vmem>>, vector<1x8x32xf32>,
    return
  }
  func.func @transform_0(%arg0: i32, %arg1: i32) -> (i32, i32, i32) {
    %c0_i32 = arith.constant 0 : i32
    %c0_i32_0 = arith.constant 0 : i32
    %c0_i32_1 = arith.constant 0 : i32
    return %arg0, %c0_i32, %c0_i32_0 : i32, i32, i32
  }
  func.func @transform_1(%arg0: i32, %arg1: i32) -> (i32, i32, i32) {
    %c0_i32 = arith.constant 0 : i32
    %c0_i32_0 = arith.constant 0 : i32
    %c0_i32_1 = arith.constant 0 : i32
    return %arg0, %c0_i32, %c0_i32_0 : i32, i32, i32
  }
  func.func @transform_2(%arg0: i32, %arg1: i32) -> (i32, i32, i32) {
    %c0_i32 = arith.constant 0 : i32
    %c0_i32_0 = arith.constant 0 : i32
    %c0_i32_1 = arith.constant 0 : i32
    return %arg1, %c0_i32, %c0_i32_0 : i32, i32, i32
  }
  func.func @transform_3(%arg0: i32, %arg1: i32) -> (i32, i32, i32) {
    %c0_i32 = arith.constant 0 : i32
    %c0_i32_0 = arith.constant 0 : i32
    %c0_i32_1 = arith.constant 0 : i32
    return %arg1, %c0_i32, %c0_i32_0 : i32, i32, i32
  }
  func.func @transform_4(%arg0: i32, %arg1: i32) -> (i32, i32, i32) {
    %c0_i32 = arith.constant 0 : i32
    %c0_i32_0 = arith.constant 0 : i32
    %c0_i32_1 = arith.constant 0 : i32
    return %arg1, %c0_i32, %c0_i32_0 : i32, i32, i32
  }
  func.func @transform_5(%arg0: i32, %arg1: i32) -> (i32, i32, i32) {
    %c0_i32 = arith.constant 0 : i32
    %c0_i32_0 = arith.constant 0 : i32
    %c0_i32_1 = arith.constant 0 : i32
    return %arg1, %c0_i32, %c0_i32_0 : i32, i32, i32
  }
  func.func @transform_6(%arg0: i32, %arg1: i32) -> (i32, i32, i32) {
    %c0_i32 = arith.constant 0 : i32
    %c0_i32_0 = arith.constant 0 : i32
    %c0_i32_1 = arith.constant 0 : i32
    return %arg1, %c0_i32, %c0_i32_0 : i32, i32, i32
  }
  func.func @transform_7(%arg0: i32, %arg1: i32) -> (i32, i32, i32) {
    %c0_i32 = arith.constant 0 : i32
    %c0_i32_0 = arith.constant 0 : i32
    %c0_i32_1 = arith.constant 0 : i32
    return %arg1, %c0_i32, %c0_i32_0 : i32, i32, i32
  }
  func.func @transform_8(%arg0: i32, %arg1: i32) -> (i32, i32, i32) {
    %c0_i32 = arith.constant 0 : i32
    %c0_i32_0 = arith.constant 0 : i32
    %c0_i32_1 = arith.constant 0 : i32
    return %arg1, %c0_i32, %c0_i32_0 : i32, i32, i32
  }
  func.func @transform_9(%arg0: i32, %arg1: i32) -> (i32, i32, i32) {
    %c0_i32 = arith.constant 0 : i32
    %c0_i32_0 = arith.constant 0 : i32
    %c0_i32_1 = arith.constant 0 : i32
    return %arg1, %c0_i32, %c0_i32_0 : i32, i32, i32
  }
  func.func @transform_10(%arg0: i32, %arg1: i32) -> (i32, i32, i32) {
    %c0_i32 = arith.constant 0 : i32
    %c0_i32_0 = arith.constant 0 : i32
    %c0_i32_1 = arith.constant 0 : i32
    return %arg1, %c0_i32, %c0_i32_0 : i32, i32, i32
  }
  func.func @transform_11(%arg0: i32, %arg1: i32) -> (i32, i32, i32) {
    %c0_i32 = arith.constant 0 : i32
    %c0_i32_0 = arith.constant 0 : i32
    %c0_i32_1 = arith.constant 0 : i32
    return %arg1, %c0_i32, %c0_i32_0 : i32, i32, i32
  }
  func.func @transform_12(%arg0: i32, %arg1: i32) -> (i32, i32, i32) {
    %c0_i32 = arith.constant 0 : i32
    %c0_i32_0 = arith.constant 0 : i32
    %c0_i32_1 = arith.constant 0 : i32
    return %arg1, %c0_i32, %c0_i32_0 : i32, i32, i32
  }
  func.func @transform_13(%arg0: i32, %arg1: i32) -> (i32, i32, i32) {
    %c0_i32 = arith.constant 0 : i32
    %c0_i32_0 = arith.constant 0 : i32
    %c0_i32_1 = arith.constant 0 : i32
    return %arg1, %c0_i32, %c0_i32_0 : i32, i32, i32
  }
  func.func @transform_14(%arg0: i32, %arg1: i32) -> (i32, i32, i32) {
    %c0_i32 = arith.constant 0 : i32
    %c0_i32_0 = arith.constant 0 : i32
    %c0_i32_1 = arith.constant 0 : i32
    return %arg1, %c0_i32, %c0_i32_0 : i32, i32, i32
  }
  func.func @transform_15(%arg0: i32, %arg1: i32) -> (i32, i32, i32) {
    %c0_i32 = arith.constant 0 : i32
    %c0_i32_0 = arith.constant 0 : i32
    %c0_i32_1 = arith.constant 0 : i32
    return %arg1, %c0_i32, %c0_i32_0 : i32, i32, i32
  }
  func.func @transform_16(%arg0: i32, %arg1: i32) -> (i32, i32, i32) {
    %c0_i32 = arith.constant 0 : i32
    %c0_i32_0 = arith.constant 0 : i32
    %c0_i32_1 = arith.constant 0 : i32
    return %arg0, %c0_i32, %c0_i32_0 : i32, i32, i32
  }
}

</mosaic_0001>

<llo_original>
// kernel: tpu_custom_call.1
$region0: #{tpu_custom_call.1}
  #allocation0 [shape = 'u32[]', space=smem, size = 0x4, offset = 0x4, fixed_abs, tag = 'smem constant byte address 0x4 - core index']
  #allocation1 [shape = 'u32[72,128]{1,0:T(1,128)}', space=vmem, size = 0x9000, scoped, tag = 'internal scratch']
  %s0 = inlined_call_operand.vmem [shape: f32[2,8,32], index: 0, kind: input, shape index: {}]
  %s1 = inlined_call_operand.vmem [shape: f32[2,8,32], index: 1, kind: input, shape index: {}]
  %s2 = inlined_call_operand.vmem [shape: bf16[2,32,32], index: 2, kind: input, shape index: {}]
  %s3 = inlined_call_operand.vmem [shape: f32[2,1,32], index: 3, kind: input, shape index: {}]
  %s4 = inlined_call_operand.vmem [shape: bf16[2,32,64], index: 4, kind: input, shape index: {}]
  %s5 = inlined_call_operand.vmem [shape: f32[2,1,64], index: 5, kind: input, shape index: {}]
  %s6 = inlined_call_operand.vmem [shape: bf16[2,32,32], index: 6, kind: input, shape index: {}]
  %s7 = inlined_call_operand.vmem [shape: f32[2,1,32], index: 7, kind: input, shape index: {}]
  %s8 = inlined_call_operand.vmem [shape: f32[2,1,32], index: 8, kind: input, shape index: {}]
  %s9 = inlined_call_operand.vmem [shape: f32[2,1,32], index: 9, kind: input, shape index: {}]
  %s10 = inlined_call_operand.vmem [shape: bf16[2,32,2048], index: 10, kind: input, shape index: {}]
  %s11 = inlined_call_operand.vmem [shape: f32[2,1,2048], index: 11, kind: input, shape index: {}]
  %s12 = inlined_call_operand.vmem [shape: bf16[2,2048,32], index: 12, kind: input, shape index: {}]
  %s13 = inlined_call_operand.vmem [shape: f32[2,1,32], index: 13, kind: input, shape index: {}]
  %s14 = inlined_call_operand.vmem [shape: f32[2,1,32], index: 14, kind: input, shape index: {}]
  %s15 = inlined_call_operand.vmem [shape: f32[2,1,32], index: 15, kind: input, shape index: {}]
  %s16 = inlined_call_operand.hbm [shape: f32[2,8,32], index: 16, kind: output, shape index: {}]
  %s17 = sld [smem:[#allocation0]]
  $region101: #{tpu_custom_call.1} parent=0
    _
  %s19 = ssub.s32 1, %s17
  %s20 = scalar_select 0, %s19, %s17
  $region1: #{tpu_custom_call.1} parent=0
    #allocation2 [shape = 'u8[8192]{0}', space=vmem, size = 0x2000, scoped, tag = 'output window, operand 0']
    #allocation3 [shape = 's32[2]{0}', space=sflag, size = 0x8, scoped, tag = 'scoped memory for tpu_custom_call.1']
    %21 = vsyncpa [#allocation3], 0
    %s22 = scalar_lea.sflag [#allocation3], 1
    %23 = vsyncpa %s22, 0
    loop: start=0, step=1, limit=6
    $region2: #{tpu_custom_call.1} parent=1 // loop_pre_header
      _
    $region3: #{tpu_custom_call.1} parent=1 // loop_header
      %s25 = sphi 0, %s29
      %p26 = scmp.ge.s32.totalorder %s25, 6
      %s32 = sphi 0, %s44
      %s33 = sphi 0, %s40
      %s34 = sphi 0, %s32
      %s35 = sphi 0, %s33
      %s36 = sphi 0, %s34
      %s37 = sphi 0, %s35
      %s47 = sphi 0, %s49
      %s50 = sphi 0, %s47
      %s51 = sphi 0, %s50
      %s67 = sphi 0, %s51
      %s73 = sphi 0, %s75
      %s76 = sphi 0, %s73
      %s77 = sphi 0, %s76
      %s93 = sphi 0, %s77
      %s99 = sphi 0, %s101
      %s102 = sphi 0, %s99
      %s103 = sphi 0, %s102
      %s119 = sphi 0, %s103
      %s125 = sphi 0, %s127
      %s128 = sphi 0, %s125
      %s129 = sphi 0, %s128
      %s145 = sphi 0, %s129
      %s151 = sphi 0, %s153
      %s154 = sphi 0, %s151
      %s155 = sphi 0, %s154
      %s171 = sphi 0, %s155
      %s177 = sphi 0, %s179
      %s180 = sphi 0, %s177
      %s181 = sphi 0, %s180
      %s197 = sphi 0, %s181
      %s203 = sphi 0, %s205
      %s206 = sphi 0, %s203
      %s207 = sphi 0, %s206
      %s223 = sphi 0, %s207
      %s229 = sphi 0, %s231
      %s232 = sphi 0, %s229
      %s233 = sphi 0, %s232
      %s249 = sphi 0, %s233
      %s255 = sphi 0, %s257
      %s258 = sphi 0, %s255
      %s259 = sphi 0, %s258
      %s275 = sphi 0, %s259
      %s281 = sphi 0, %s283
      %s284 = sphi 0, %s281
      %s285 = sphi 0, %s284
      %s301 = sphi 0, %s285
      %s307 = sphi 0, %s309
      %s310 = sphi 0, %s307
      %s311 = sphi 0, %s310
      %s327 = sphi 0, %s311
      %s333 = sphi 0, %s335
      %s336 = sphi 0, %s333
      %s337 = sphi 0, %s336
      %s353 = sphi 0, %s337
      %s359 = sphi 0, %s361
      %s362 = sphi 0, %s359
      %s363 = sphi 0, %s362
      %s379 = sphi 0, %s363
      %s385 = sphi 0, %s387
      %s388 = sphi 0, %s385
      %s389 = sphi 0, %s388
      %s405 = sphi 0, %s389
      %s411 = sphi 0, %s413
      %s414 = sphi 0, %s411
      %s415 = sphi 0, %s414
      %s431 = sphi 0, %s415
      %s437 = sphi 0, %s439
      %s440 = sphi 0, %s437
      %s441 = sphi 0, %s440
      %s457 = sphi 0, %s441
      %s463 = sphi 0, %s465
      %s466 = sphi 0, %s463
      %s467 = sphi 0, %s466
      %s483 = sphi 0, %s467
    $region4: #{tpu_custom_call.1} parent=1 // loop_header_branch
      %28 = sbr.rel (%p26) target = $region8
    $region5: #{tpu_custom_call.1} parent=1 // loop_body
      %s30 = ssub.s32 %s25, 1
      %s31 = ssub.s32 %s25, 2
      %s38 = sadd.s32 1, %s33
      %p39 = scmp.ge.s32.totalorder %s38, 2
      %s40 = scalar_select %p39, 0, %s38
      %s41 = sadd.s32 1, %s32
      %s42 = scalar_select %p39, %s41, %s32
      %p43 = scmp.ge.s32.totalorder %s42, 2
      %s44 = scalar_select %p43, 0, %s42
      %s45 = ssub.s32 %s32, %s44
      %p46 = scmp.eq.s32.totalorder %s45, 0
      %s48 = sadd.s32 %s47, 1
      %s49 = scalar_select %p46, %s47, %s48
      %p52 = pneg %p46
      %p53 = scmp.eq.s32.totalorder %s25, 3
      %p54 = por %p52, %p53
      %p55 = scmp.ne.s32.totalorder %s47, %s50
      %p56 = scmp.eq.s32.totalorder %s25, 0
      %p57 = por %p55, %p56
      %p58 = scmp.ne.s32.totalorder %s47, %s50
      %p59 = scmp.eq.s32.totalorder %s30, 3
      %p60 = por %p58, %p59
      %p61 = scmp.ne.s32.totalorder %s50, %s51
      %p62 = scmp.eq.s32.totalorder %s30, 0
      %p63 = por %p61, %p62
      %p64 = scmp.ne.s32.totalorder %s50, %s51
      %p65 = scmp.eq.s32.totalorder %s31, 3
      %p66 = por %p64, %p65
      %p68 = scmp.ne.s32.totalorder %s51, %s67
      %p69 = scmp.eq.s32.totalorder %s31, 0
      %p70 = por %p68, %p69
      %s71 = ssub.s32 %s32, %s44
      %p72 = scmp.eq.s32.totalorder %s71, 0
      %s74 = sadd.s32 %s73, 1
      %s75 = scalar_select %p72, %s73, %s74
      %p78 = pneg %p72
      %p79 = scmp.eq.s32.totalorder %s25, 3
      %p80 = por %p78, %p79
      %p81 = scmp.ne.s32.totalorder %s73, %s76
      %p82 = scmp.eq.s32.totalorder %s25, 0
      %p83 = por %p81, %p82
      %p84 = scmp.ne.s32.totalorder %s73, %s76
      %p85 = scmp.eq.s32.totalorder %s30, 3
      %p86 = por %p84, %p85
      %p87 = scmp.ne.s32.totalorder %s76, %s77
      %p88 = scmp.eq.s32.totalorder %s30, 0
      %p89 = por %p87, %p88
      %p90 = scmp.ne.s32.totalorder %s76, %s77
      %p91 = scmp.eq.s32.totalorder %s31, 3
      %p92 = por %p90, %p91
      %p94 = scmp.ne.s32.totalorder %s77, %s93
      %p95 = scmp.eq.s32.totalorder %s31, 0
      %p96 = por %p94, %p95
      %s97 = ssub.s32 %s33, %s40
      %p98 = scmp.eq.s32.totalorder %s97, 0
      %s100 = sadd.s32 %s99, 1
      %s101 = scalar_select %p98, %s99, %s100
      %p104 = pneg %p98
      %p105 = scmp.eq.s32.totalorder %s25, 3
      %p106 = por %p104, %p105
      %p107 = scmp.ne.s32.totalorder %s99, %s102
      %p108 = scmp.eq.s32.totalorder %s25, 0
      %p109 = por %p107, %p108
      %p110 = scmp.ne.s32.totalorder %s99, %s102
      %p111 = scmp.eq.s32.totalorder %s30, 3
      %p112 = por %p110, %p111
      %p113 = scmp.ne.s32.totalorder %s102, %s103
      %p114 = scmp.eq.s32.totalorder %s30, 0
      %p115 = por %p113, %p114
      %p116 = scmp.ne.s32.totalorder %s102, %s103
      %p117 = scmp.eq.s32.totalorder %s31, 3
      %p118 = por %p116, %p117
      %p120 = scmp.ne.s32.totalorder %s103, %s119
      %p121 = scmp.eq.s32.totalorder %s31, 0
      %p122 = por %p120, %p121
      %s123 = ssub.s32 %s33, %s40
      %p124 = scmp.eq.s32.totalorder %s123, 0
      %s126 = sadd.s32 %s125, 1
      %s127 = scalar_select %p124, %s125, %s126
      %p130 = pneg %p124
      %p131 = scmp.eq.s32.totalorder %s25, 3
      %p132 = por %p130, %p131
      %p133 = scmp.ne.s32.totalorder %s125, %s128
      %p134 = scmp.eq.s32.totalorder %s25, 0
      %p135 = por %p133, %p134
      %p136 = scmp.ne.s32.totalorder %s125, %s128
      %p137 = scmp.eq.s32.totalorder %s30, 3
      %p138 = por %p136, %p137
      %p139 = scmp.ne.s32.totalorder %s128, %s129
      %p140 = scmp.eq.s32.totalorder %s30, 0
      %p141 = por %p139, %p140
      %p142 = scmp.ne.s32.totalorder %s128, %s129
      %p143 = scmp.eq.s32.totalorder %s31, 3
      %p144 = por %p142, %p143
      %p146 = scmp.ne.s32.totalorder %s129, %s145
      %p147 = scmp.eq.s32.totalorder %s31, 0
      %p148 = por %p146, %p147
      %s149 = ssub.s32 %s33, %s40
      %p150 = scmp.eq.s32.totalorder %s149, 0
      %s152 = sadd.s32 %s151, 1
      %s153 = scalar_select %p150, %s151, %s152
      %p156 = pneg %p150
      %p157 = scmp.eq.s32.totalorder %s25, 3
      %p158 = por %p156, %p157
      %p159 = scmp.ne.s32.totalorder %s151, %s154
      %p160 = scmp.eq.s32.totalorder %s25, 0
      %p161 = por %p159, %p160
      %p162 = scmp.ne.s32.totalorder %s151, %s154
      %p163 = scmp.eq.s32.totalorder %s30, 3
      %p164 = por %p162, %p163
      %p165 = scmp.ne.s32.totalorder %s154, %s155
      %p166 = scmp.eq.s32.totalorder %s30, 0
      %p167 = por %p165, %p166
      %p168 = scmp.ne.s32.totalorder %s154, %s155
      %p169 = scmp.eq.s32.totalorder %s31, 3
      %p170 = por %p168, %p169
      %p172 = scmp.ne.s32.totalorder %s155, %s171
      %p173 = scmp.eq.s32.totalorder %s31, 0
      %p174 = por %p172, %p173
      %s175 = ssub.s32 %s33, %s40
      %p176 = scmp.eq.s32.totalorder %s175, 0
      %s178 = sadd.s32 %s177, 1
      %s179 = scalar_select %p176, %s177, %s178
      %p182 = pneg %p176
      %p183 = scmp.eq.s32.totalorder %s25, 3
      %p184 = por %p182, %p183
      %p185 = scmp.ne.s32.totalorder %s177, %s180
      %p186 = scmp.eq.s32.totalorder %s25, 0
      %p187 = por %p185, %p186
      %p188 = scmp.ne.s32.totalorder %s177, %s180
      %p189 = scmp.eq.s32.totalorder %s30, 3
      %p190 = por %p188, %p189
      %p191 = scmp.ne.s32.totalorder %s180, %s181
      %p192 = scmp.eq.s32.totalorder %s30, 0
      %p193 = por %p191, %p192
      %p194 = scmp.ne.s32.totalorder %s180, %s181
      %p195 = scmp.eq.s32.totalorder %s31, 3
      %p196 = por %p194, %p195
      %p198 = scmp.ne.s32.totalorder %s181, %s197
      %p199 = scmp.eq.s32.totalorder %s31, 0
      %p200 = por %p198, %p199
      %s201 = ssub.s32 %s33, %s40
      %p202 = scmp.eq.s32.totalorder %s201, 0
      %s204 = sadd.s32 %s203, 1
      %s205 = scalar_select %p202, %s203, %s204
      %p208 = pneg %p202
      %p209 = scmp.eq.s32.totalorder %s25, 3
      %p210 = por %p208, %p209
      %p211 = scmp.ne.s32.totalorder %s203, %s206
      %p212 = scmp.eq.s32.totalorder %s25, 0
      %p213 = por %p211, %p212
      %p214 = scmp.ne.s32.totalorder %s203, %s206
      %p215 = scmp.eq.s32.totalorder %s30, 3
      %p216 = por %p214, %p215
      %p217 = scmp.ne.s32.totalorder %s206, %s207
      %p218 = scmp.eq.s32.totalorder %s30, 0
      %p219 = por %p217, %p218
      %p220 = scmp.ne.s32.totalorder %s206, %s207
      %p221 = scmp.eq.s32.totalorder %s31, 3
      %p222 = por %p220, %p221
      %p224 = scmp.ne.s32.totalorder %s207, %s223
      %p225 = scmp.eq.s32.totalorder %s31, 0
      %p226 = por %p224, %p225
      %s227 = ssub.s32 %s33, %s40
      %p228 = scmp.eq.s32.totalorder %s227, 0
      %s230 = sadd.s32 %s229, 1
      %s231 = scalar_select %p228, %s229, %s230
      %p234 = pneg %p228
      %p235 = scmp.eq.s32.totalorder %s25, 3
      %p236 = por %p234, %p235
      %p237 = scmp.ne.s32.totalorder %s229, %s232
      %p238 = scmp.eq.s32.totalorder %s25, 0
      %p239 = por %p237, %p238
      %p240 = scmp.ne.s32.totalorder %s229, %s232
      %p241 = scmp.eq.s32.totalorder %s30, 3
      %p242 = por %p240, %p241
      %p243 = scmp.ne.s32.totalorder %s232, %s233
      %p244 = scmp.eq.s32.totalorder %s30, 0
      %p245 = por %p243, %p244
      %p246 = scmp.ne.s32.totalorder %s232, %s233
      %p247 = scmp.eq.s32.totalorder %s31, 3
      %p248 = por %p246, %p247
      %p250 = scmp.ne.s32.totalorder %s233, %s249
      %p251 = scmp.eq.s32.totalorder %s31, 0
      %p252 = por %p250, %p251
      %s253 = ssub.s32 %s33, %s40
      %p254 = scmp.eq.s32.totalorder %s253, 0
      %s256 = sadd.s32 %s255, 1
      %s257 = scalar_select %p254, %s255, %s256
      %p260 = pneg %p254
      %p261 = scmp.eq.s32.totalorder %s25, 3
      %p262 = por %p260, %p261
      %p263 = scmp.ne.s32.totalorder %s255, %s258
      %p264 = scmp.eq.s32.totalorder %s25, 0
      %p265 = por %p263, %p264
      %p266 = scmp.ne.s32.totalorder %s255, %s258
      %p267 = scmp.eq.s32.totalorder %s30, 3
      %p268 = por %p266, %p267
      %p269 = scmp.ne.s32.totalorder %s258, %s259
      %p270 = scmp.eq.s32.totalorder %s30, 0
      %p271 = por %p269, %p270
      %p272 = scmp.ne.s32.totalorder %s258, %s259
      %p273 = scmp.eq.s32.totalorder %s31, 3
      %p274 = por %p272, %p273
      %p276 = scmp.ne.s32.totalorder %s259, %s275
      %p277 = scmp.eq.s32.totalorder %s31, 0
      %p278 = por %p276, %p277
      %s279 = ssub.s32 %s33, %s40
      %p280 = scmp.eq.s32.totalorder %s279, 0
      %s282 = sadd.s32 %s281, 1
      %s283 = scalar_select %p280, %s281, %s282
      %p286 = pneg %p280
      %p287 = scmp.eq.s32.totalorder %s25, 3
      %p288 = por %p286, %p287
      %p289 = scmp.ne.s32.totalorder %s281, %s284
      %p290 = scmp.eq.s32.totalorder %s25, 0
      %p291 = por %p289, %p290
      %p292 = scmp.ne.s32.totalorder %s281, %s284
      %p293 = scmp.eq.s32.totalorder %s30, 3
      %p294 = por %p292, %p293
      %p295 = scmp.ne.s32.totalorder %s284, %s285
      %p296 = scmp.eq.s32.totalorder %s30, 0
      %p297 = por %p295, %p296
      %p298 = scmp.ne.s32.totalorder %s284, %s285
      %p299 = scmp.eq.s32.totalorder %s31, 3
      %p300 = por %p298, %p299
      %p302 = scmp.ne.s32.totalorder %s285, %s301
      %p303 = scmp.eq.s32.totalorder %s31, 0
      %p304 = por %p302, %p303
      %s305 = ssub.s32 %s33, %s40
      %p306 = scmp.eq.s32.totalorder %s305, 0
      %s308 = sadd.s32 %s307, 1
      %s309 = scalar_select %p306, %s307, %s308
      %p312 = pneg %p306
      %p313 = scmp.eq.s32.totalorder %s25, 3
      %p314 = por %p312, %p313
      %p315 = scmp.ne.s32.totalorder %s307, %s310
      %p316 = scmp.eq.s32.totalorder %s25, 0
      %p317 = por %p315, %p316
      %p318 = scmp.ne.s32.totalorder %s307, %s310
      %p319 = scmp.eq.s32.totalorder %s30, 3
      %p320 = por %p318, %p319
      %p321 = scmp.ne.s32.totalorder %s310, %s311
      %p322 = scmp.eq.s32.totalorder %s30, 0
      %p323 = por %p321, %p322
      %p324 = scmp.ne.s32.totalorder %s310, %s311
      %p325 = scmp.eq.s32.totalorder %s31, 3
      %p326 = por %p324, %p325
      %p328 = scmp.ne.s32.totalorder %s311, %s327
      %p329 = scmp.eq.s32.totalorder %s31, 0
      %p330 = por %p328, %p329
      %s331 = ssub.s32 %s33, %s40
      %p332 = scmp.eq.s32.totalorder %s331, 0
      %s334 = sadd.s32 %s333, 1
      %s335 = scalar_select %p332, %s333, %s334
      %p338 = pneg %p332
      %p339 = scmp.eq.s32.totalorder %s25, 3
      %p340 = por %p338, %p339
      %p341 = scmp.ne.s32.totalorder %s333, %s336
      %p342 = scmp.eq.s32.totalorder %s25, 0
      %p343 = por %p341, %p342
      %p344 = scmp.ne.s32.totalorder %s333, %s336
      %p345 = scmp.eq.s32.totalorder %s30, 3
      %p346 = por %p344, %p345
      %p347 = scmp.ne.s32.totalorder %s336, %s337
      %p348 = scmp.eq.s32.totalorder %s30, 0
      %p349 = por %p347, %p348
      %p350 = scmp.ne.s32.totalorder %s336, %s337
      %p351 = scmp.eq.s32.totalorder %s31, 3
      %p352 = por %p350, %p351
      %p354 = scmp.ne.s32.totalorder %s337, %s353
      %p355 = scmp.eq.s32.totalorder %s31, 0
      %p356 = por %p354, %p355
      %s357 = ssub.s32 %s33, %s40
      %p358 = scmp.eq.s32.totalorder %s357, 0
      %s360 = sadd.s32 %s359, 1
      %s361 = scalar_select %p358, %s359, %s360
      %p364 = pneg %p358
      %p365 = scmp.eq.s32.totalorder %s25, 3
      %p366 = por %p364, %p365
      %p367 = scmp.ne.s32.totalorder %s359, %s362
      %p368 = scmp.eq.s32.totalorder %s25, 0
      %p369 = por %p367, %p368
      %p370 = scmp.ne.s32.totalorder %s359, %s362
      %p371 = scmp.eq.s32.totalorder %s30, 3
      %p372 = por %p370, %p371
      %p373 = scmp.ne.s32.totalorder %s362, %s363
      %p374 = scmp.eq.s32.totalorder %s30, 0
      %p375 = por %p373, %p374
      %p376 = scmp.ne.s32.totalorder %s362, %s363
      %p377 = scmp.eq.s32.totalorder %s31, 3
      %p378 = por %p376, %p377
      %p380 = scmp.ne.s32.totalorder %s363, %s379
      %p381 = scmp.eq.s32.totalorder %s31, 0
      %p382 = por %p380, %p381
      %s383 = ssub.s32 %s33, %s40
      %p384 = scmp.eq.s32.totalorder %s383, 0
      %s386 = sadd.s32 %s385, 1
      %s387 = scalar_select %p384, %s385, %s386
      %p390 = pneg %p384
      %p391 = scmp.eq.s32.totalorder %s25, 3
      %p392 = por %p390, %p391
      %p393 = scmp.ne.s32.totalorder %s385, %s388
      %p394 = scmp.eq.s32.totalorder %s25, 0
      %p395 = por %p393, %p394
      %p396 = scmp.ne.s32.totalorder %s385, %s388
      %p397 = scmp.eq.s32.totalorder %s30, 3
      %p398 = por %p396, %p397
      %p399 = scmp.ne.s32.totalorder %s388, %s389
      %p400 = scmp.eq.s32.totalorder %s30, 0
      %p401 = por %p399, %p400
      %p402 = scmp.ne.s32.totalorder %s388, %s389
      %p403 = scmp.eq.s32.totalorder %s31, 3
      %p404 = por %p402, %p403
      %p406 = scmp.ne.s32.totalorder %s389, %s405
      %p407 = scmp.eq.s32.totalorder %s31, 0
      %p408 = por %p406, %p407
      %s409 = ssub.s32 %s33, %s40
      %p410 = scmp.eq.s32.totalorder %s409, 0
      %s412 = sadd.s32 %s411, 1
      %s413 = scalar_select %p410, %s411, %s412
      %p416 = pneg %p410
      %p417 = scmp.eq.s32.totalorder %s25, 3
      %p418 = por %p416, %p417
      %p419 = scmp.ne.s32.totalorder %s411, %s414
      %p420 = scmp.eq.s32.totalorder %s25, 0
      %p421 = por %p419, %p420
      %p422 = scmp.ne.s32.totalorder %s411, %s414
      %p423 = scmp.eq.s32.totalorder %s30, 3
      %p424 = por %p422, %p423
      %p425 = scmp.ne.s32.totalorder %s414, %s415
      %p426 = scmp.eq.s32.totalorder %s30, 0
      %p427 = por %p425, %p426
      %p428 = scmp.ne.s32.totalorder %s414, %s415
      %p429 = scmp.eq.s32.totalorder %s31, 3
      %p430 = por %p428, %p429
      %p432 = scmp.ne.s32.totalorder %s415, %s431
      %p433 = scmp.eq.s32.totalorder %s31, 0
      %p434 = por %p432, %p433
      %s435 = ssub.s32 %s33, %s40
      %p436 = scmp.eq.s32.totalorder %s435, 0
      %s438 = sadd.s32 %s437, 1
      %s439 = scalar_select %p436, %s437, %s438
      %p442 = pneg %p436
      %p443 = scmp.eq.s32.totalorder %s25, 3
      %p444 = por %p442, %p443
      %p445 = scmp.ne.s32.totalorder %s437, %s440
      %p446 = scmp.eq.s32.totalorder %s25, 0
      %p447 = por %p445, %p446
      %p448 = scmp.ne.s32.totalorder %s437, %s440
      %p449 = scmp.eq.s32.totalorder %s30, 3
      %p450 = por %p448, %p449
      %p451 = scmp.ne.s32.totalorder %s440, %s441
      %p452 = scmp.eq.s32.totalorder %s30, 0
      %p453 = por %p451, %p452
      %p454 = scmp.ne.s32.totalorder %s440, %s441
      %p455 = scmp.eq.s32.totalorder %s31, 3
      %p456 = por %p454, %p455
      %p458 = scmp.ne.s32.totalorder %s441, %s457
      %p459 = scmp.eq.s32.totalorder %s31, 0
      %p460 = por %p458, %p459
      %s461 = ssub.s32 %s32, %s44
      %p462 = scmp.eq.s32.totalorder %s461, 0
      %s464 = sadd.s32 %s463, 1
      %s465 = scalar_select %p462, %s463, %s464
      %p468 = pneg %p462
      %p469 = scmp.eq.s32.totalorder %s25, 3
      %p470 = por %p468, %p469
      %p471 = scmp.ne.s32.totalorder %s463, %s466
      %p472 = scmp.eq.s32.totalorder %s25, 0
      %p473 = por %p471, %p472
      %p474 = scmp.ne.s32.totalorder %s463, %s466
      %p475 = scmp.eq.s32.totalorder %s30, 3
      %p476 = por %p474, %p475
      %p477 = scmp.ne.s32.totalorder %s466, %s467
      %p478 = scmp.eq.s32.totalorder %s30, 0
      %p479 = por %p477, %p478
      %p480 = scmp.ne.s32.totalorder %s466, %s467
      %p481 = scmp.eq.s32.totalorder %s31, 3
      %p482 = por %p480, %p481
      %p484 = scmp.ne.s32.totalorder %s467, %s483
      %p485 = scmp.eq.s32.totalorder %s31, 0
      %p486 = por %p484, %p485
      %p487 = scmp.le.s32.totalorder 1, %s25
      %p488 = scmp.lt.s32.totalorder %s25, 5
      %p489 = pnand %p487, %p488
      %p490 = pneg %p489
      // Predicated region
      $region9: #{tpu_custom_call.1} parent=5 // pred_check
        _
      $region10: #{tpu_custom_call.1} parent=5 // pred_check_branch
        %492 = sbr.rel (%p489) target = $region12
      $region11: #{tpu_custom_call.1} parent=5 // pred_region
        %s493 = ssub.s32 %s25, 1
      $region12: #{tpu_custom_call.1} parent=5 // pred_fallthru
        _
      %p494 = scmp.lt.s32.totalorder %s25, 4
      // Predicated region
      $region13: #{tpu_custom_call.1} parent=5 // pred_check
        %p495 = pneg %p494
      $region14: #{tpu_custom_call.1} parent=5 // pred_check_branch
        %497 = sbr.rel (%p495) target = $region16
      $region15: #{tpu_custom_call.1} parent=5 // pred_region
        // Predicated region
        $region17: #{tpu_custom_call.1} parent=15 // pred_check
          %p498 = pneg %p57
        $region18: #{tpu_custom_call.1} parent=15 // pred_check_branch
          %500 = sbr.rel (%p498) target = $region20
        $region19: #{tpu_custom_call.1} parent=15 // pred_region
          %p501 = scmp.lt.s32.totalorder %s32, 1
          %s502 = scalar_select %p501, %s32, 1
          %s503 = smul.addr %s502, 8
          %s504 = scalar_lea.vmem %s0, %s503
        $region20: #{tpu_custom_call.1} parent=15 // pred_fallthru
          _
        // Predicated region
        $region21: #{tpu_custom_call.1} parent=15 // pred_check
          %p505 = pneg %p83
        $region22: #{tpu_custom_call.1} parent=15 // pred_check_branch
          %507 = sbr.rel (%p505) target = $region24
        $region23: #{tpu_custom_call.1} parent=15 // pred_region
          %p508 = scmp.lt.s32.totalorder %s32, 1
          %s509 = scalar_select %p508, %s32, 1
          %s510 = smul.addr %s509, 8
          %s511 = scalar_lea.vmem %s1, %s510
        $region24: #{tpu_custom_call.1} parent=15 // pred_fallthru
          _
        // Predicated region
        $region25: #{tpu_custom_call.1} parent=15 // pred_check
          %p512 = pneg %p109
        $region26: #{tpu_custom_call.1} parent=15 // pred_check_branch
          %514 = sbr.rel (%p512) target = $region28
        $region27: #{tpu_custom_call.1} parent=15 // pred_region
          %p515 = scmp.lt.s32.totalorder %s33, 1
          %s516 = scalar_select %p515, %s33, 1
          %s517 = smul.addr %s516, 4
          %s518 = smul.addr %s517, 4
          %s519 = scalar_lea.vmem %s2, %s518
        $region28: #{tpu_custom_call.1} parent=15 // pred_fallthru
          _
        // Predicated region
        $region29: #{tpu_custom_call.1} parent=15 // pred_check
          %p520 = pneg %p135
        $region30: #{tpu_custom_call.1} parent=15 // pred_check_branch
          %522 = sbr.rel (%p520) target = $region32
        $region31: #{tpu_custom_call.1} parent=15 // pred_region
          %p523 = scmp.lt.s32.totalorder %s33, 1
          %s524 = scalar_select %p523, %s33, 1
          %s525 = scalar_lea.vmem %s3, %s524
        $region32: #{tpu_custom_call.1} parent=15 // pred_fallthru
          _
        // Predicated region
        $region33: #{tpu_custom_call.1} parent=15 // pred_check
          %p526 = pneg %p161
        $region34: #{tpu_custom_call.1} parent=15 // pred_check_branch
          %528 = sbr.rel (%p526) target = $region36
        $region35: #{tpu_custom_call.1} parent=15 // pred_region
          %p529 = scmp.lt.s32.totalorder %s33, 1
          %s530 = scalar_select %p529, %s33, 1
          %s531 = smul.addr %s530, 4
          %s532 = smul.addr %s531, 4
          %s533 = scalar_lea.vmem %s4, %s532
        $region36: #{tpu_custom_call.1} parent=15 // pred_fallthru
          _
        // Predicated region
        $region37: #{tpu_custom_call.1} parent=15 // pred_check
          %p534 = pneg %p187
        $region38: #{tpu_custom_call.1} parent=15 // pred_check_branch
          %536 = sbr.rel (%p534) target = $region40
        $region39: #{tpu_custom_call.1} parent=15 // pred_region
          %p537 = scmp.lt.s32.totalorder %s33, 1
          %s538 = scalar_select %p537, %s33, 1
          %s539 = scalar_lea.vmem %s5, %s538
        $region40: #{tpu_custom_call.1} parent=15 // pred_fallthru
          _
        // Predicated region
        $region41: #{tpu_custom_call.1} parent=15 // pred_check
          %p540 = pneg %p213
        $region42: #{tpu_custom_call.1} parent=15 // pred_check_branch
          %542 = sbr.rel (%p540) target = $region44
        $region43: #{tpu_custom_call.1} parent=15 // pred_region
          %p543 = scmp.lt.s32.totalorder %s33, 1
          %s544 = scalar_select %p543, %s33, 1
          %s545 = smul.addr %s544, 4
          %s546 = smul.addr %s545, 4
          %s547 = scalar_lea.vmem %s6, %s546
        $region44: #{tpu_custom_call.1} parent=15 // pred_fallthru
          _
        // Predicated region
        $region45: #{tpu_custom_call.1} parent=15 // pred_check
          %p548 = pneg %p239
        $region46: #{tpu_custom_call.1} parent=15 // pred_check_branch
          %550 = sbr.rel (%p548) target = $region48
        $region47: #{tpu_custom_call.1} parent=15 // pred_region
          %p551 = scmp.lt.s32.totalorder %s33, 1
          %s552 = scalar_select %p551, %s33, 1
          %s553 = scalar_lea.vmem %s7, %s552
        $region48: #{tpu_custom_call.1} parent=15 // pred_fallthru
          _
        // Predicated region
        $region49: #{tpu_custom_call.1} parent=15 // pred_check
          %p554 = pneg %p265
        $region50: #{tpu_custom_call.1} parent=15 // pred_check_branch
          %556 = sbr.rel (%p554) target = $region52
        $region51: #{tpu_custom_call.1} parent=15 // pred_region
          %p557 = scmp.lt.s32.totalorder %s33, 1
          %s558 = scalar_select %p557, %s33, 1
          %s559 = scalar_lea.vmem %s8, %s558
        $region52: #{tpu_custom_call.1} parent=15 // pred_fallthru
          _
        // Predicated region
        $region53: #{tpu_custom_call.1} parent=15 // pred_check
          %p560 = pneg %p291
        $region54: #{tpu_custom_call.1} parent=15 // pred_check_branch
          %562 = sbr.rel (%p560) target = $region56
        $region55: #{tpu_custom_call.1} parent=15 // pred_region
          %p563 = scmp.lt.s32.totalorder %s33, 1
          %s564 = scalar_select %p563, %s33, 1
          %s565 = scalar_lea.vmem %s9, %s564
        $region56: #{tpu_custom_call.1} parent=15 // pred_fallthru
          _
        // Predicated region
        $region57: #{tpu_custom_call.1} parent=15 // pred_check
          %p566 = pneg %p317
        $region58: #{tpu_custom_call.1} parent=15 // pred_check_branch
          %568 = sbr.rel (%p566) target = $region60
        $region59: #{tpu_custom_call.1} parent=15 // pred_region
          %p569 = scmp.lt.s32.totalorder %s33, 1
          %s570 = scalar_select %p569, %s33, 1
          %s571 = smul.addr %s570, 64
          %s572 = smul.addr %s571, 4
          %s573 = scalar_lea.vmem %s10, %s572
        $region60: #{tpu_custom_call.1} parent=15 // pred_fallthru
          _
        // Predicated region
        $region61: #{tpu_custom_call.1} parent=15 // pred_check
          %p574 = pneg %p343
        $region62: #{tpu_custom_call.1} parent=15 // pred_check_branch
          %576 = sbr.rel (%p574) target = $region64
        $region63: #{tpu_custom_call.1} parent=15 // pred_region
          %p577 = scmp.lt.s32.totalorder %s33, 1
          %s578 = scalar_select %p577, %s33, 1
          %s579 = smul.addr %s578, 16
          %s580 = scalar_lea.vmem %s11, %s579
        $region64: #{tpu_custom_call.1} parent=15 // pred_fallthru
          _
        // Predicated region
        $region65: #{tpu_custom_call.1} parent=15 // pred_check
          %p581 = pneg %p369
        $region66: #{tpu_custom_call.1} parent=15 // pred_check_branch
          %583 = sbr.rel (%p581) target = $region68
        $region67: #{tpu_custom_call.1} parent=15 // pred_region
          %p584 = scmp.lt.s32.totalorder %s33, 1
          %s585 = scalar_select %p584, %s33, 1
          %s586 = smul.addr %s585, 256
          %s587 = smul.addr %s586, 4
          %s588 = scalar_lea.vmem %s12, %s587
        $region68: #{tpu_custom_call.1} parent=15 // pred_fallthru
          _
        // Predicated region
        $region69: #{tpu_custom_call.1} parent=15 // pred_check
          %p589 = pneg %p395
        $region70: #{tpu_custom_call.1} parent=15 // pred_check_branch
          %591 = sbr.rel (%p589) target = $region72
        $region71: #{tpu_custom_call.1} parent=15 // pred_region
          %p592 = scmp.lt.s32.totalorder %s33, 1
          %s593 = scalar_select %p592, %s33, 1
          %s594 = scalar_lea.vmem %s13, %s593
        $region72: #{tpu_custom_call.1} parent=15 // pred_fallthru
          _
        // Predicated region
        $region73: #{tpu_custom_call.1} parent=15 // pred_check
          %p595 = pneg %p421
        $region74: #{tpu_custom_call.1} parent=15 // pred_check_branch
          %597 = sbr.rel (%p595) target = $region76
        $region75: #{tpu_custom_call.1} parent=15 // pred_region
          %p598 = scmp.lt.s32.totalorder %s33, 1
          %s599 = scalar_select %p598, %s33, 1
          %s600 = scalar_lea.vmem %s14, %s599
        $region76: #{tpu_custom_call.1} parent=15 // pred_fallthru
          _
        // Predicated region
        $region77: #{tpu_custom_call.1} parent=15 // pred_check
          %p601 = pneg %p447
        $region78: #{tpu_custom_call.1} parent=15 // pred_check_branch
          %603 = sbr.rel (%p601) target = $region80
        $region79: #{tpu_custom_call.1} parent=15 // pred_region
          %p604 = scmp.lt.s32.totalorder %s33, 1
          %s605 = scalar_select %p604, %s33, 1
          %s606 = scalar_lea.vmem %s15, %s605
        $region80: #{tpu_custom_call.1} parent=15 // pred_fallthru
          _
      $region16: #{tpu_custom_call.1} parent=5 // pred_fallthru
        _
      %p607 = scmp.le.s32.totalorder 1, %s25
      %p608 = scmp.lt.s32.totalorder %s25, 5
      %p609 = pnand %p607, %p608
      %p610 = pneg %p609
      // Predicated region
      $region81: #{tpu_custom_call.1} parent=5 // pred_check
        _
      $region82: #{tpu_custom_call.1} parent=5 // pred_check_branch
        %612 = sbr.rel (%p609) target = $region84
      $region83: #{tpu_custom_call.1} parent=5 // pred_region
        %s613 = ssub.s32 %s25, 1
        %p614 = scmp.lt.s32.totalorder %s34, 1
        %s615 = scalar_select %p614, %s34, 1
        %s616 = smul.addr %s615, 8
        %s617 = scalar_lea.vmem %s0, %s616
        %p618 = pneg %p63
        %p619 = pneg %p60
        %p620 = scmp.lt.s32.totalorder %s34, 1
        %s621 = scalar_select %p620, %s34, 1
        %s622 = smul.addr %s621, 8
        %s623 = scalar_lea.vmem %s1, %s622
        %p624 = pneg %p89
        %p625 = pneg %p86
        %p626 = scmp.lt.s32.totalorder %s35, 1
        %s627 = scalar_select %p626, %s35, 1
        %s628 = smul.addr %s627, 4
        %s629 = smul.addr %s628, 4
        %s630 = scalar_lea.vmem %s2, %s629
        %p631 = pneg %p115
        %p632 = pneg %p112
        %p633 = scmp.lt.s32.totalorder %s35, 1
        %s634 = scalar_select %p633, %s35, 1
        %s635 = scalar_lea.vmem %s3, %s634
        %p636 = pneg %p141
        %p637 = pneg %p138
        %p638 = scmp.lt.s32.totalorder %s35, 1
        %s639 = scalar_select %p638, %s35, 1
        %s640 = smul.addr %s639, 4
        %s641 = smul.addr %s640, 4
        %s642 = scalar_lea.vmem %s4, %s641
        %p643 = pneg %p167
        %p644 = pneg %p164
        %p645 = scmp.lt.s32.totalorder %s35, 1
        %s646 = scalar_select %p645, %s35, 1
        %s647 = scalar_lea.vmem %s5, %s646
        %p648 = pneg %p193
        %p649 = pneg %p190
        %p650 = scmp.lt.s32.totalorder %s35, 1
        %s651 = scalar_select %p650, %s35, 1
        %s652 = smul.addr %s651, 4
        %s653 = smul.addr %s652, 4
        %s654 = scalar_lea.vmem %s6, %s653
        %p655 = pneg %p219
        %p656 = pneg %p216
        %p657 = scmp.lt.s32.totalorder %s35, 1
        %s658 = scalar_select %p657, %s35, 1
        %s659 = scalar_lea.vmem %s7, %s658
        %p660 = pneg %p245
        %p661 = pneg %p242
        %p662 = scmp.lt.s32.totalorder %s35, 1
        %s663 = scalar_select %p662, %s35, 1
        %s664 = scalar_lea.vmem %s8, %s663
        %p665 = pneg %p271
        %p666 = pneg %p268
        %p667 = scmp.lt.s32.totalorder %s35, 1
        %s668 = scalar_select %p667, %s35, 1
        %s669 = scalar_lea.vmem %s9, %s668
        %p670 = pneg %p297
        %p671 = pneg %p294
        %p672 = scmp.lt.s32.totalorder %s35, 1
        %s673 = scalar_select %p672, %s35, 1
        %s674 = smul.addr %s673, 64
        %s675 = smul.addr %s674, 4
        %s676 = scalar_lea.vmem %s10, %s675
        %p677 = pneg %p323
        %p678 = pneg %p320
        %p679 = scmp.lt.s32.totalorder %s35, 1
        %s680 = scalar_select %p679, %s35, 1
        %s681 = smul.addr %s680, 16
        %s682 = scalar_lea.vmem %s11, %s681
        %p683 = pneg %p349
        %p684 = pneg %p346
        %p685 = scmp.lt.s32.totalorder %s35, 1
        %s686 = scalar_select %p685, %s35, 1
        %s687 = smul.addr %s686, 256
        %s688 = smul.addr %s687, 4
        %s689 = scalar_lea.vmem %s12, %s688
        %p690 = pneg %p375
        %p691 = pneg %p372
        %p692 = scmp.lt.s32.totalorder %s35, 1
        %s693 = scalar_select %p692, %s35, 1
        %s694 = scalar_lea.vmem %s13, %s693
        %p695 = pneg %p401
        %p696 = pneg %p398
        %p697 = scmp.lt.s32.totalorder %s35, 1
        %s698 = scalar_select %p697, %s35, 1
        %s699 = scalar_lea.vmem %s14, %s698
        %p700 = pneg %p427
        %p701 = pneg %p424
        %p702 = scmp.lt.s32.totalorder %s35, 1
        %s703 = scalar_select %p702, %s35, 1
        %s704 = scalar_lea.vmem %s15, %s703
        %p705 = pneg %p453
        %p706 = pneg %p450
        %p707 = pneg %p479
        %p708 = pneg %p476
        %s709 = sand.u32 %s466, 1
        %s710 = scalar_lea.sflag [#allocation3], %s709
        %s711 = sand.u32 %s466, 1
        %s712 = smul.addr %s711, 8
        %s713 = scalar_lea.vmem [#allocation2], %s712
        %p714 = scmp.lt.s32.totalorder %s34, 1
        %s715 = scalar_select %p714, %s34, 1
        %s716 = smul.addr %s715, 8
        %s717 = scalar_lea.vmem %s0, %s716
        %p718 = scmp.lt.s32.totalorder %s34, 1
        %s719 = scalar_select %p718, %s34, 1
        %s720 = smul.addr %s719, 8
        %s721 = scalar_lea.vmem %s1, %s720
        %p722 = scmp.lt.s32.totalorder %s35, 1
        %s723 = scalar_select %p722, %s35, 1
        %s724 = smul.addr %s723, 4
        %s725 = smul.addr %s724, 4
        %s726 = scalar_lea.vmem %s2, %s725
        %p727 = scmp.lt.s32.totalorder %s35, 1
        %s728 = scalar_select %p727, %s35, 1
        %s729 = scalar_lea.vmem %s3, %s728
        %p730 = scmp.lt.s32.totalorder %s35, 1
        %s731 = scalar_select %p730, %s35, 1
        %s732 = smul.addr %s731, 4
        %s733 = smul.addr %s732, 4
        %s734 = scalar_lea.vmem %s4, %s733
        %p735 = scmp.lt.s32.totalorder %s35, 1
        %s736 = scalar_select %p735, %s35, 1
        %s737 = scalar_lea.vmem %s5, %s736
        %p738 = scmp.lt.s32.totalorder %s35, 1
        %s739 = scalar_select %p738, %s35, 1
        %s740 = smul.addr %s739, 4
        %s741 = smul.addr %s740, 4
        %s742 = scalar_lea.vmem %s6, %s741
        %p743 = scmp.lt.s32.totalorder %s35, 1
        %s744 = scalar_select %p743, %s35, 1
        %s745 = scalar_lea.vmem %s7, %s744
        %p746 = scmp.lt.s32.totalorder %s35, 1
        %s747 = scalar_select %p746, %s35, 1
        %s748 = scalar_lea.vmem %s8, %s747
        %p749 = scmp.lt.s32.totalorder %s35, 1
        %s750 = scalar_select %p749, %s35, 1
        %s751 = scalar_lea.vmem %s9, %s750
        %p752 = scmp.lt.s32.totalorder %s35, 1
        %s753 = scalar_select %p752, %s35, 1
        %s754 = smul.addr %s753, 64
        %s755 = smul.addr %s754, 4
        %s756 = scalar_lea.vmem %s10, %s755
        %p757 = scmp.lt.s32.totalorder %s35, 1
        %s758 = scalar_select %p757, %s35, 1
        %s759 = smul.addr %s758, 16
        %s760 = scalar_lea.vmem %s11, %s759
        %p761 = scmp.lt.s32.totalorder %s35, 1
        %s762 = scalar_select %p761, %s35, 1
        %s763 = smul.addr %s762, 256
        %s764 = smul.addr %s763, 4
        %s765 = scalar_lea.vmem %s12, %s764
        %p766 = scmp.lt.s32.totalorder %s35, 1
        %s767 = scalar_select %p766, %s35, 1
        %s768 = scalar_lea.vmem %s13, %s767
        %p769 = scmp.lt.s32.totalorder %s35, 1
        %s770 = scalar_select %p769, %s35, 1
        %s771 = scalar_lea.vmem %s14, %s770
        %p772 = scmp.lt.s32.totalorder %s35, 1
        %s773 = scalar_select %p772, %s35, 1
        %s774 = scalar_lea.vmem %s15, %s773
        %p776 = scmp.eq.s32.totalorder %s35, 0
        // Predicated region
        $region85: #{tpu_custom_call.1} parent=83 // pred_check
          %p777 = pneg %p776
        $region86: #{tpu_custom_call.1} parent=83 // pred_check_branch
          %779 = sbr.rel (%p777) target = $region88
        $region87: #{tpu_custom_call.1} parent=83 // pred_region
          %v780 = vld [vmem:[%s717] sm:$0xff]
          %vm781 = vcmask 261120
          %782 = vst.msk [vmem:[%s713] sm:$0xff] %vm781, %v780
        $region88: #{tpu_custom_call.1} parent=83 // pred_fallthru
          _
        %v783 = vld [vmem:[%s713] sm:$0xff]
        %v784 = vld [vmem:[%s721] sm:$0xff]
        %v785 = vpack.c.bf16 %v783, %v783
        %v786 = vpack.c.bf16 %v784, %v784
        %v787 = vld [vmem:[%s726] sm:$0xf]
        %v788 = vld [vmem:[%s726 + $0x4] sm:$0xf]
        %v789 = vld [vmem:[%s726 + $0x8] sm:$0xf]
        %v790 = vld [vmem:[%s726 + $0xc] sm:$0xf]
        %v791 = vld [vmem:[%s729] sm:$0x1]
        %v793 = vperm.slane %v791, 0
        %v799 = vunpack.c.l.b16 %v787
        %v800 = vunpack.c.l.b16 %v788
        %v801 = vunpack.c.l.b16 %v789
        %v802 = vunpack.c.l.b16 %v790
        %v803 = vpack.c.b16 %v800, %v799
        %v804 = vpack.c.b16 %v802, %v801
        %vm807 = vcmask 261120
        %v809 = vsel %vm807, %v785, 0
        %811 = vmatpush.bf16.msra.mxu0 0
        %812 = vmatpush.bf16.msra.mxu0 0
        %813 = vmatpush.bf16.msra.mxu0 0
        %814 = vmatpush.bf16.msra.mxu0 0
        %815 = vmatpush.bf16.msra.mxu0 0
        %816 = vmatpush.bf16.msra.mxu0 0
        %817 = vmatpush.bf16.msra.mxu0 %v804
        %818 = vmatpush.bf16.msra.mxu0 %v803
        %819 = vmatmul.bf16.gmra.mxu0 %v809
        %v820 = vpop.f32.mrf.mxu0
        %v821 = vadd.f32 %v793, %v820
        %v822 = vpop.f32.mrf.mxu0
        %823 = vdwg.mxu0
        %v824 = vld [vmem:[%s734] sm:$0xf]
        %v825 = vld [vmem:[%s734 + $0x4] sm:$0xf]
        %v826 = vld [vmem:[%s734 + $0x8] sm:$0xf]
        %v827 = vld [vmem:[%s734 + $0xc] sm:$0xf]
        %v828 = vld [vmem:[%s737] sm:$0x1]
        %v830 = vperm.slane %v828, 0
        %v836 = vunpack.c.l.b16 %v824
        %v837 = vunpack.c.l.b16 %v825
        %v838 = vunpack.c.l.b16 %v826
        %v839 = vunpack.c.l.b16 %v827
        %v840 = vpack.c.b16 %v837, %v836
        %v841 = vpack.c.b16 %v839, %v838
        %v845 = vsel %vm807, %v786, 0
        %847 = vmatpush.bf16.msra.mxu0 0
        %848 = vmatpush.bf16.msra.mxu0 0
        %849 = vmatpush.bf16.msra.mxu0 0
        %850 = vmatpush.bf16.msra.mxu0 0
        %851 = vmatpush.bf16.msra.mxu0 0
        %852 = vmatpush.bf16.msra.mxu0 0
        %853 = vmatpush.bf16.msra.mxu0 %v841
        %854 = vmatpush.bf16.msra.mxu0 %v840
        %855 = vmatmul.bf16.gmra.mxu0 %v845
        %v856 = vpop.f32.mrf.mxu0
        %v857 = vadd.f32 %v830, %v856
        %v858 = vpop.f32.mrf.mxu0
        %859 = vdwg.mxu0
        %861 = vrot.lane.b32.xlu0 %v821, 120
        %v862 = vpop.permute.xlu0 %861
        %864 = vrot.lane.b32.xlu0 %v821, 112
        %v865 = vpop.permute.xlu0 %864
        %867 = vrot.lane.b32.xlu0 %v821, 104
        %v868 = vpop.permute.xlu0 %867
        %v870 = vrot.slane %v865, 4
        %vm871 = vcmask 1047556
        %v872 = vsel %vm871, %v870, %v821
        %v873 = vrot.slane %v821, 4
        %v874 = vsel %vm871, %v865, %v873
        %v876 = vunpack.c.l.s4 1983009808
        %v877 = vunpack.c.0.s8 %v876
        %v878 = vperm.slane %v872, %v877
        %v880 = vunpack.c.l.s4 1983009808
        %v881 = vunpack.c.0.s8 %v880
        %v882 = vperm.slane %v874, %v881
        %v883 = vrot.slane %v868, 4
        %v884 = vsel %vm871, %v883, %v862
        %v885 = vrot.slane %v862, 4
        %v886 = vsel %vm871, %v868, %v885
        %v888 = vunpack.c.l.s4 1983009808
        %v889 = vunpack.c.0.s8 %v888
        %v890 = vperm.slane %v884, %v889
        %v892 = vunpack.c.l.s4 1983009808
        %v893 = vunpack.c.0.s8 %v892
        %v894 = vperm.slane %v886, %v893
        %v895 = vrot.slane %v890, 4
        %v896 = vsel %vm871, %v895, %v878
        %v897 = vrot.slane %v878, 4
        %v898 = vsel %vm871, %v890, %v897
        %v900 = vunpack.c.l.s4 1934713408
        %v901 = vunpack.c.0.s8 %v900
        %v902 = vperm.slane %v896, %v901
        %v904 = vunpack.c.l.s4 1934713408
        %v905 = vunpack.c.0.s8 %v904
        %v906 = vperm.slane %v898, %v905
        %v907 = vrot.slane %v894, 4
        %v908 = vsel %vm871, %v907, %v882
        %v909 = vrot.slane %v882, 4
        %v910 = vsel %vm871, %v894, %v909
        %v912 = vunpack.c.l.s4 1934713408
        %v913 = vunpack.c.0.s8 %v912
        %v914 = vperm.slane %v908, %v913
        %v916 = vunpack.c.l.s4 1934713408
        %v917 = vunpack.c.0.s8 %v916
        %v918 = vperm.slane %v910, %v917
        %v919 = vrot.slane %v902, 4
        %v920 = vsel %vm871, 0.0, %v919
        %v921 = vrot.slane %v906, 4
        %v922 = vsel %vm871, 0.0, %v921
        %v923 = vrot.slane %v914, 4
        %v924 = vsel %vm871, 0.0, %v923
        %v925 = vrot.slane %v918, 4
        %v926 = vsel %vm871, 0.0, %v925
        %v927 = vsel %vm871, %v921, %v902
        %v929 = vunpack.c.l.s4 1983009808
        %v930 = vunpack.c.0.s8 %v929
        %v931 = vperm.slane %v927, %v930
        %v932 = vrot.slane %v922, 4
        %v933 = vsel %vm871, %v932, %v920
        %v935 = vunpack.c.l.s4 1983009808
        %v936 = vunpack.c.0.s8 %v935
        %v937 = vperm.slane %v933, %v936
        %v938 = vsel %vm871, %v925, %v914
        %v940 = vunpack.c.l.s4 1983009808
        %v941 = vunpack.c.0.s8 %v940
        %v942 = vperm.slane %v938, %v941
        %v943 = vrot.slane %v926, 4
        %v944 = vsel %vm871, %v943, %v924
        %v946 = vunpack.c.l.s4 1983009808
        %v947 = vunpack.c.0.s8 %v946
        %v948 = vperm.slane %v944, %v947
        %v949 = vrot.slane %v937, 4
        %v950 = vsel %vm871, %v949, %v931
        %v951 = vrot.slane %v931, 4
        %v952 = vsel %vm871, %v937, %v951
        %v954 = vunpack.c.l.s4 1934713408
        %v955 = vunpack.c.0.s8 %v954
        %v956 = vperm.slane %v950, %v955
        %v958 = vunpack.c.l.s4 1934713408
        %v959 = vunpack.c.0.s8 %v958
        %v960 = vperm.slane %v952, %v959
        %v961 = vrot.slane %v948, 4
        %v962 = vsel %vm871, %v961, %v942
        %v963 = vrot.slane %v942, 4
        %v964 = vsel %vm871, %v948, %v963
        %v966 = vunpack.c.l.s4 1934713408
        %v967 = vunpack.c.0.s8 %v966
        %v968 = vperm.slane %v962, %v967
        %v970 = vunpack.c.l.s4 1934713408
        %v971 = vunpack.c.0.s8 %v970
        %v972 = vperm.slane %v964, %v971
        %v973 = vrot.slane %v968, 4
        %v974 = vsel %vm871, %v973, %v956
        %v975 = vrot.slane %v956, 4
        %v976 = vsel %vm871, %v968, %v975
        %v977 = vrot.slane %v972, 4
        %v978 = vsel %vm871, %v977, %v960
        %v979 = vrot.slane %v960, 4
        %v980 = vsel %vm871, %v972, %v979
        %v981 = vpack.c.bf16 %v974, %v974
        %v982 = vpack.c.bf16 %v976, %v976
        %v983 = vpack.c.bf16 %v978, %v978
        %v984 = vpack.c.bf16 %v980, %v980
        %986 = vrot.lane.b32.xlu0 %v857, 120
        %v987 = vpop.permute.xlu0 %986
        %989 = vrot.lane.b32.xlu0 %v857, 112
        %v990 = vpop.permute.xlu0 %989
        %992 = vrot.lane.b32.xlu0 %v857, 104
        %v993 = vpop.permute.xlu0 %992
        %v995 = vrot.slane %v990, 4
        %v996 = vsel %vm871, %v995, %v857
        %v997 = vrot.slane %v857, 4
        %v998 = vsel %vm871, %v990, %v997
        %v1000 = vunpack.c.l.s4 1983009808
        %v1001 = vunpack.c.0.s8 %v1000
        %v1002 = vperm.slane %v996, %v1001
        %v1004 = vunpack.c.l.s4 1983009808
        %v1005 = vunpack.c.0.s8 %v1004
        %v1006 = vperm.slane %v998, %v1005
        %v1007 = vrot.slane %v993, 4
        %v1008 = vsel %vm871, %v1007, %v987
        %v1009 = vrot.slane %v987, 4
        %v1010 = vsel %vm871, %v993, %v1009
        %v1012 = vunpack.c.l.s4 1983009808
        %v1013 = vunpack.c.0.s8 %v1012
        %v1014 = vperm.slane %v1008, %v1013
        %v1016 = vunpack.c.l.s4 1983009808
        %v1017 = vunpack.c.0.s8 %v1016
        %v1018 = vperm.slane %v1010, %v1017
        %v1019 = vrot.slane %v1014, 4
        %v1020 = vsel %vm871, %v1019, %v1002
        %v1021 = vrot.slane %v1002, 4
        %v1022 = vsel %vm871, %v1014, %v1021
        %v1024 = vunpack.c.l.s4 1934713408
        %v1025 = vunpack.c.0.s8 %v1024
        %v1026 = vperm.slane %v1020, %v1025
        %v1028 = vunpack.c.l.s4 1934713408
        %v1029 = vunpack.c.0.s8 %v1028
        %v1030 = vperm.slane %v1022, %v1029
        %v1031 = vrot.slane %v1018, 4
        %v1032 = vsel %vm871, %v1031, %v1006
        %v1033 = vrot.slane %v1006, 4
        %v1034 = vsel %vm871, %v1018, %v1033
        %v1036 = vunpack.c.l.s4 1934713408
        %v1037 = vunpack.c.0.s8 %v1036
        %v1038 = vperm.slane %v1032, %v1037
        %v1040 = vunpack.c.l.s4 1934713408
        %v1041 = vunpack.c.0.s8 %v1040
        %v1042 = vperm.slane %v1034, %v1041
        %v1043 = vrot.slane %v1026, 4
        %v1044 = vsel %vm871, 0.0, %v1043
        %v1045 = vrot.slane %v1030, 4
        %v1046 = vsel %vm871, 0.0, %v1045
        %v1047 = vrot.slane %v1038, 4
        %v1048 = vsel %vm871, 0.0, %v1047
        %v1049 = vrot.slane %v1042, 4
        %v1050 = vsel %vm871, 0.0, %v1049
        %v1051 = vsel %vm871, %v1045, %v1026
        %v1053 = vunpack.c.l.s4 1983009808
        %v1054 = vunpack.c.0.s8 %v1053
        %v1055 = vperm.slane %v1051, %v1054
        %v1056 = vrot.slane %v1046, 4
        %v1057 = vsel %vm871, %v1056, %v1044
        %v1059 = vunpack.c.l.s4 1983009808
        %v1060 = vunpack.c.0.s8 %v1059
        %v1061 = vperm.slane %v1057, %v1060
        %v1062 = vsel %vm871, %v1049, %v1038
        %v1064 = vunpack.c.l.s4 1983009808
        %v1065 = vunpack.c.0.s8 %v1064
        %v1066 = vperm.slane %v1062, %v1065
        %v1067 = vrot.slane %v1050, 4
        %v1068 = vsel %vm871, %v1067, %v1048
        %v1070 = vunpack.c.l.s4 1983009808
        %v1071 = vunpack.c.0.s8 %v1070
        %v1072 = vperm.slane %v1068, %v1071
        %v1073 = vrot.slane %v1061, 4
        %v1074 = vsel %vm871, %v1073, %v1055
        %v1075 = vrot.slane %v1055, 4
        %v1076 = vsel %vm871, %v1061, %v1075
        %v1078 = vunpack.c.l.s4 1934713408
        %v1079 = vunpack.c.0.s8 %v1078
        %v1080 = vperm.slane %v1074, %v1079
        %v1082 = vunpack.c.l.s4 1934713408
        %v1083 = vunpack.c.0.s8 %v1082
        %v1084 = vperm.slane %v1076, %v1083
        %v1085 = vrot.slane %v1072, 4
        %v1086 = vsel %vm871, %v1085, %v1066
        %v1087 = vrot.slane %v1066, 4
        %v1088 = vsel %vm871, %v1072, %v1087
        %v1090 = vunpack.c.l.s4 1934713408
        %v1091 = vunpack.c.0.s8 %v1090
        %v1092 = vperm.slane %v1086, %v1091
        %v1094 = vunpack.c.l.s4 1934713408
        %v1095 = vunpack.c.0.s8 %v1094
        %v1096 = vperm.slane %v1088, %v1095
        %v1097 = vrot.slane %v1092, 4
        %v1098 = vsel %vm871, %v1097, %v1080
        %v1099 = vrot.slane %v1080, 4
        %v1100 = vsel %vm871, %v1092, %v1099
        %v1101 = vrot.slane %v1096, 4
        %v1102 = vsel %vm871, %v1101, %v1084
        %v1103 = vrot.slane %v1084, 4
        %v1104 = vsel %vm871, %v1096, %v1103
        %v1105 = vpack.c.bf16 %v1098, %v1098
        %v1106 = vpack.c.bf16 %v1100, %v1100
        %v1107 = vpack.c.bf16 %v1102, %v1102
        %v1108 = vpack.c.bf16 %v1104, %v1104
        %1109 = vrot.lane.b32.xlu0 %v857, 96
        %v1110 = vpop.permute.xlu0 %1109
        %1111 = vrot.lane.b32.xlu0 %v987, 96
        %v1112 = vpop.permute.xlu0 %1111
        %1113 = vrot.lane.b32.xlu0 %v990, 96
        %v1114 = vpop.permute.xlu0 %1113
        %1115 = vrot.lane.b32.xlu0 %v993, 96
        %v1116 = vpop.permute.xlu0 %1115
        %v1121 = vrot.slane %v1114, 4
        %v1122 = vsel %vm871, %v1121, %v1110
        %v1123 = vrot.slane %v1110, 4
        %v1124 = vsel %vm871, %v1114, %v1123
        %v1126 = vunpack.c.l.s4 1983009808
        %v1127 = vunpack.c.0.s8 %v1126
        %v1128 = vperm.slane %v1122, %v1127
        %v1130 = vunpack.c.l.s4 1983009808
        %v1131 = vunpack.c.0.s8 %v1130
        %v1132 = vperm.slane %v1124, %v1131
        %v1133 = vrot.slane %v1116, 4
        %v1134 = vsel %vm871, %v1133, %v1112
        %v1135 = vrot.slane %v1112, 4
        %v1136 = vsel %vm871, %v1116, %v1135
        %v1138 = vunpack.c.l.s4 1983009808
        %v1139 = vunpack.c.0.s8 %v1138
        %v1140 = vperm.slane %v1134, %v1139
        %v1142 = vunpack.c.l.s4 1983009808
        %v1143 = vunpack.c.0.s8 %v1142
        %v1144 = vperm.slane %v1136, %v1143
        %v1145 = vrot.slane %v1140, 4
        %v1146 = vsel %vm871, %v1145, %v1128
        %v1147 = vrot.slane %v1128, 4
        %v1148 = vsel %vm871, %v1140, %v1147
        %v1150 = vunpack.c.l.s4 1934713408
        %v1151 = vunpack.c.0.s8 %v1150
        %v1152 = vperm.slane %v1146, %v1151
        %v1154 = vunpack.c.l.s4 1934713408
        %v1155 = vunpack.c.0.s8 %v1154
        %v1156 = vperm.slane %v1148, %v1155
        %v1157 = vrot.slane %v1144, 4
        %v1158 = vsel %vm871, %v1157, %v1132
        %v1159 = vrot.slane %v1132, 4
        %v1160 = vsel %vm871, %v1144, %v1159
        %v1162 = vunpack.c.l.s4 1934713408
        %v1163 = vunpack.c.0.s8 %v1162
        %v1164 = vperm.slane %v1158, %v1163
        %v1166 = vunpack.c.l.s4 1934713408
        %v1167 = vunpack.c.0.s8 %v1166
        %v1168 = vperm.slane %v1160, %v1167
        %v1169 = vrot.slane %v1152, 4
        %v1170 = vsel %vm871, 0.0, %v1169
        %v1171 = vrot.slane %v1156, 4
        %v1172 = vsel %vm871, 0.0, %v1171
        %v1173 = vrot.slane %v1164, 4
        %v1174 = vsel %vm871, 0.0, %v1173
        %v1175 = vrot.slane %v1168, 4
        %v1176 = vsel %vm871, 0.0, %v1175
        %v1177 = vsel %vm871, %v1171, %v1152
        %v1179 = vunpack.c.l.s4 1983009808
        %v1180 = vunpack.c.0.s8 %v1179
        %v1181 = vperm.slane %v1177, %v1180
        %v1182 = vrot.slane %v1172, 4
        %v1183 = vsel %vm871, %v1182, %v1170
        %v1185 = vunpack.c.l.s4 1983009808
        %v1186 = vunpack.c.0.s8 %v1185
        %v1187 = vperm.slane %v1183, %v1186
        %v1188 = vsel %vm871, %v1175, %v1164
        %v1190 = vunpack.c.l.s4 1983009808
        %v1191 = vunpack.c.0.s8 %v1190
        %v1192 = vperm.slane %v1188, %v1191
        %v1193 = vrot.slane %v1176, 4
        %v1194 = vsel %vm871, %v1193, %v1174
        %v1196 = vunpack.c.l.s4 1983009808
        %v1197 = vunpack.c.0.s8 %v1196
        %v1198 = vperm.slane %v1194, %v1197
        %v1199 = vrot.slane %v1187, 4
        %v1200 = vsel %vm871, %v1199, %v1181
        %v1201 = vrot.slane %v1181, 4
        %v1202 = vsel %vm871, %v1187, %v1201
        %v1204 = vunpack.c.l.s4 1934713408
        %v1205 = vunpack.c.0.s8 %v1204
        %v1206 = vperm.slane %v1200, %v1205
        %v1208 = vunpack.c.l.s4 1934713408
        %v1209 = vunpack.c.0.s8 %v1208
        %v1210 = vperm.slane %v1202, %v1209
        %v1211 = vrot.slane %v1198, 4
        %v1212 = vsel %vm871, %v1211, %v1192
        %v1213 = vrot.slane %v1192, 4
        %v1214 = vsel %vm871, %v1198, %v1213
        %v1216 = vunpack.c.l.s4 1934713408
        %v1217 = vunpack.c.0.s8 %v1216
        %v1218 = vperm.slane %v1212, %v1217
        %v1220 = vunpack.c.l.s4 1934713408
        %v1221 = vunpack.c.0.s8 %v1220
        %v1222 = vperm.slane %v1214, %v1221
        %v1223 = vrot.slane %v1218, 4
        %v1224 = vsel %vm871, %v1223, %v1206
        %v1225 = vrot.slane %v1206, 4
        %v1226 = vsel %vm871, %v1218, %v1225
        %v1227 = vrot.slane %v1222, 4
        %v1228 = vsel %vm871, %v1227, %v1210
        %v1229 = vrot.slane %v1210, 4
        %v1230 = vsel %vm871, %v1222, %v1229
        %v1231 = vpack.c.bf16 %v1224, %v1224
        %v1232 = vpack.c.bf16 %v1226, %v1226
        %v1233 = vpack.c.bf16 %v1228, %v1228
        %v1234 = vpack.c.bf16 %v1230, %v1230
        %vm1235 = vcmask 64512
        %v1237 = vsel %vm1235, %v981, 0
        %v1240 = vsel %vm1235, %v1105, 0
        %1242 = vmatpush.bf16.xpose.msra.mxu0 0
        %1243 = vmatpush.bf16.xpose.msra.mxu0 0
        %1244 = vmatpush.bf16.xpose.msra.mxu0 0
        %1245 = vmatpush.bf16.xpose.msra.mxu0 0
        %1246 = vmatpush.bf16.xpose.msra.mxu0 0
        %1247 = vmatpush.bf16.xpose.msra.mxu0 0
        %1248 = vmatpush.bf16.xpose.msra.mxu0 0
        %1249 = vmatpush.bf16.xpose.msra.mxu0 %v1240
        %1250 = vmatmul.bf16.gmra.mxu0 %v1237
        %v1251 = vpop.f32.mrf.mxu0
        %v1252 = vadd.f32 0.0, %v1251
        %v1253 = vpop.f32.mrf.mxu0
        %1254 = vdwg.mxu0
        %v1256 = vsel %vm1235, %v982, 0
        %v1259 = vsel %vm1235, %v1106, 0
        %1261 = vmatpush.bf16.xpose.msra.mxu0 0
        %1262 = vmatpush.bf16.xpose.msra.mxu0 0
        %1263 = vmatpush.bf16.xpose.msra.mxu0 0
        %1264 = vmatpush.bf16.xpose.msra.mxu0 0
        %1265 = vmatpush.bf16.xpose.msra.mxu0 0
        %1266 = vmatpush.bf16.xpose.msra.mxu0 0
        %1267 = vmatpush.bf16.xpose.msra.mxu0 0
        %1268 = vmatpush.bf16.xpose.msra.mxu0 %v1259
        %1269 = vmatmul.bf16.gmra.mxu0 %v1256
        %v1270 = vpop.f32.mrf.mxu0
        %v1271 = vadd.f32 0.0, %v1270
        %v1272 = vpop.f32.mrf.mxu0
        %1273 = vdwg.mxu0
        %v1275 = vsel %vm1235, %v983, 0
        %v1278 = vsel %vm1235, %v1107, 0
        %1280 = vmatpush.bf16.xpose.msra.mxu0 0
        %1281 = vmatpush.bf16.xpose.msra.mxu0 0
        %1282 = vmatpush.bf16.xpose.msra.mxu0 0
        %1283 = vmatpush.bf16.xpose.msra.mxu0 0
        %1284 = vmatpush.bf16.xpose.msra.mxu0 0
        %1285 = vmatpush.bf16.xpose.msra.mxu0 0
        %1286 = vmatpush.bf16.xpose.msra.mxu0 0
        %1287 = vmatpush.bf16.xpose.msra.mxu0 %v1278
        %1288 = vmatmul.bf16.gmra.mxu0 %v1275
        %v1289 = vpop.f32.mrf.mxu0
        %v1290 = vadd.f32 0.0, %v1289
        %v1291 = vpop.f32.mrf.mxu0
        %1292 = vdwg.mxu0
        %v1294 = vsel %vm1235, %v984, 0
        %v1297 = vsel %vm1235, %v1108, 0
        %1299 = vmatpush.bf16.xpose.msra.mxu0 0
        %1300 = vmatpush.bf16.xpose.msra.mxu0 0
        %1301 = vmatpush.bf16.xpose.msra.mxu0 0
        %1302 = vmatpush.bf16.xpose.msra.mxu0 0
        %1303 = vmatpush.bf16.xpose.msra.mxu0 0
        %1304 = vmatpush.bf16.xpose.msra.mxu0 0
        %1305 = vmatpush.bf16.xpose.msra.mxu0 0
        %1306 = vmatpush.bf16.xpose.msra.mxu0 %v1297
        %1307 = vmatmul.bf16.gmra.mxu0 %v1294
        %v1308 = vpop.f32.mrf.mxu0
        %v1309 = vadd.f32 0.0, %v1308
        %v1310 = vpop.f32.mrf.mxu0
        %1311 = vdwg.mxu0
        %v1312 = vmul.f32 %v1252, 0.35355338
        %v1313 = vmul.f32 %v1271, 0.35355338
        %v1314 = vmul.f32 %v1290, 0.35355338
        %v1315 = vmul.f32 %v1309, 0.35355338
        %v1316 = vsel %vm1235, %v1312, -inf
        %1317 = vmax.xlane.f32.xlu0 %v1316
        %v1318 = vpop.xlane.xlu0 %1317
        %v1319 = vsel %vm1235, %v1313, -inf
        %1320 = vmax.xlane.f32.xlu0 %v1319
        %v1321 = vpop.xlane.xlu0 %1320
        %v1322 = vsel %vm1235, %v1314, -inf
        %1323 = vmax.xlane.f32.xlu0 %v1322
        %v1324 = vpop.xlane.xlu0 %1323
        %v1325 = vsel %vm1235, %v1315, -inf
        %1326 = vmax.xlane.f32.xlu0 %v1325
        %v1327 = vpop.xlane.xlu0 %1326
        %v1328 = vsub.f32 %v1312, %v1318
        %v1329 = vsub.f32 %v1313, %v1321
        %v1330 = vsub.f32 %v1314, %v1324
        %v1331 = vsub.f32 %v1315, %v1327
        %v1332 = vmul.f32 %v1328, 1.442695
        %v1333 = vpow.pop %v1332
        %v1334 = vmul.f32 %v1329, 1.442695
        %v1335 = vpow.pop %v1334
        %v1336 = vmul.f32 %v1330, 1.442695
        %v1337 = vpow.pop %v1336
        %v1338 = vmul.f32 %v1331, 1.442695
        %v1339 = vpow.pop %v1338
        %v1340 = vsel %vm1235, %v1333, 0.0
        %1341 = vadd.xlane.f32.xlu0 %v1340
        %v1342 = vpop.xlane.xlu0 %1341
        %v1343 = vsel %vm1235, %v1335, 0.0
        %1344 = vadd.xlane.f32.xlu0 %v1343
        %v1345 = vpop.xlane.xlu0 %1344
        %v1346 = vsel %vm1235, %v1337, 0.0
        %1347 = vadd.xlane.f32.xlu0 %v1346
        %v1348 = vpop.xlane.xlu0 %1347
        %v1349 = vsel %vm1235, %v1339, 0.0
        %1350 = vadd.xlane.f32.xlu0 %v1349
        %v1351 = vpop.xlane.xlu0 %1350
        %v1352 = vrcp.pop %v1342
        %v1353 = vrcp.pop %v1345
        %v1354 = vrcp.pop %v1348
        %v1355 = vrcp.pop %v1351
        %v1356 = vmul.f32 %v1333, %v1352
        %v1357 = vmul.f32 %v1335, %v1353
        %v1358 = vmul.f32 %v1337, %v1354
        %v1359 = vmul.f32 %v1339, %v1355
        %v1360 = vpack.c.bf16 %v1356, %v1356
        %v1361 = vpack.c.bf16 %v1357, %v1357
        %v1362 = vpack.c.bf16 %v1358, %v1358
        %v1363 = vpack.c.bf16 %v1359, %v1359
        %v1365 = vsel %vm1235, %v1360, 0
        %vm1367 = vcmask 1043456
        %v1369 = vsel %vm1367, %v1231, 0
        %1371 = vmatpush.bf16.msra.mxu0 0
        %1372 = vmatpush.bf16.msra.mxu0 0
        %1373 = vmatpush.bf16.msra.mxu0 0
        %1374 = vmatpush.bf16.msra.mxu0 0
        %1375 = vmatpush.bf16.msra.mxu0 0
        %1376 = vmatpush.bf16.msra.mxu0 0
        %1377 = vmatpush.bf16.msra.mxu0 0
        %1378 = vmatpush.bf16.msra.mxu0 %v1369
        %1379 = vmatmul.bf16.gmra.mxu0 %v1365
        %v1380 = vpop.f32.mrf.mxu0
        %v1381 = vadd.f32 0.0, %v1380
        %v1382 = vpop.f32.mrf.mxu0
        %1383 = vdwg.mxu0
        %v1385 = vsel %vm1235, %v1361, 0
        %v1388 = vsel %vm1367, %v1232, 0
        %1390 = vmatpush.bf16.msra.mxu0 0
        %1391 = vmatpush.bf16.msra.mxu0 0
        %1392 = vmatpush.bf16.msra.mxu0 0
        %1393 = vmatpush.bf16.msra.mxu0 0
        %1394 = vmatpush.bf16.msra.mxu0 0
        %1395 = vmatpush.bf16.msra.mxu0 0
        %1396 = vmatpush.bf16.msra.mxu0 0
        %1397 = vmatpush.bf16.msra.mxu0 %v1388
        %1398 = vmatmul.bf16.gmra.mxu0 %v1385
        %v1399 = vpop.f32.mrf.mxu0
        %v1400 = vadd.f32 0.0, %v1399
        %v1401 = vpop.f32.mrf.mxu0
        %1402 = vdwg.mxu0
        %v1404 = vsel %vm1235, %v1362, 0
        %v1407 = vsel %vm1367, %v1233, 0
        %1409 = vmatpush.bf16.msra.mxu0 0
        %1410 = vmatpush.bf16.msra.mxu0 0
        %1411 = vmatpush.bf16.msra.mxu0 0
        %1412 = vmatpush.bf16.msra.mxu0 0
        %1413 = vmatpush.bf16.msra.mxu0 0
        %1414 = vmatpush.bf16.msra.mxu0 0
        %1415 = vmatpush.bf16.msra.mxu0 0
        %1416 = vmatpush.bf16.msra.mxu0 %v1407
        %1417 = vmatmul.bf16.gmra.mxu0 %v1404
        %v1418 = vpop.f32.mrf.mxu0
        %v1419 = vadd.f32 0.0, %v1418
        %v1420 = vpop.f32.mrf.mxu0
        %1421 = vdwg.mxu0
        %v1423 = vsel %vm1235, %v1363, 0
        %v1426 = vsel %vm1367, %v1234, 0
        %1428 = vmatpush.bf16.msra.mxu0 0
        %1429 = vmatpush.bf16.msra.mxu0 0
        %1430 = vmatpush.bf16.msra.mxu0 0
        %1431 = vmatpush.bf16.msra.mxu0 0
        %1432 = vmatpush.bf16.msra.mxu0 0
        %1433 = vmatpush.bf16.msra.mxu0 0
        %1434 = vmatpush.bf16.msra.mxu0 0
        %1435 = vmatpush.bf16.msra.mxu0 %v1426
        %1436 = vmatmul.bf16.gmra.mxu0 %v1423
        %v1437 = vpop.f32.mrf.mxu0
        %v1438 = vadd.f32 0.0, %v1437
        %v1439 = vpop.f32.mrf.mxu0
        %1440 = vdwg.mxu0
        %v1441 = vrot.slane %v1419, 4
        %v1442 = vsel %vm871, %v1441, %v1381
        %v1443 = vrot.slane %v1381, 4
        %v1444 = vsel %vm871, %v1419, %v1443
        %v1446 = vunpack.c.l.s4 1983009808
        %v1447 = vunpack.c.0.s8 %v1446
        %v1448 = vperm.slane %v1442, %v1447
        %v1450 = vunpack.c.l.s4 1983009808
        %v1451 = vunpack.c.0.s8 %v1450
        %v1452 = vperm.slane %v1444, %v1451
        %v1453 = vrot.slane %v1438, 4
        %v1454 = vsel %vm871, %v1453, %v1400
        %v1455 = vrot.slane %v1400, 4
        %v1456 = vsel %vm871, %v1438, %v1455
        %v1458 = vunpack.c.l.s4 1983009808
        %v1459 = vunpack.c.0.s8 %v1458
        %v1460 = vperm.slane %v1454, %v1459
        %v1462 = vunpack.c.l.s4 1983009808
        %v1463 = vunpack.c.0.s8 %v1462
        %v1464 = vperm.slane %v1456, %v1463
        %v1465 = vrot.slane %v1460, 4
        %v1466 = vsel %vm871, %v1465, %v1448
        %v1467 = vrot.slane %v1448, 4
        %v1468 = vsel %vm871, %v1460, %v1467
        %v1470 = vunpack.c.l.s4 1934713408
        %v1471 = vunpack.c.0.s8 %v1470
        %v1472 = vperm.slane %v1466, %v1471
        %v1474 = vunpack.c.l.s4 1934713408
        %v1475 = vunpack.c.0.s8 %v1474
        %v1476 = vperm.slane %v1468, %v1475
        %v1477 = vrot.slane %v1464, 4
        %v1478 = vsel %vm871, %v1477, %v1452
        %v1479 = vrot.slane %v1452, 4
        %v1480 = vsel %vm871, %v1464, %v1479
        %v1482 = vunpack.c.l.s4 1934713408
        %v1483 = vunpack.c.0.s8 %v1482
        %v1484 = vperm.slane %v1478, %v1483
        %v1486 = vunpack.c.l.s4 1934713408
        %v1487 = vunpack.c.0.s8 %v1486
        %v1488 = vperm.slane %v1480, %v1487
        %v1489 = vrot.slane %v1472, 4
        %v1490 = vsel %vm871, 0.0, %v1489
        %v1491 = vrot.slane %v1476, 4
        %v1492 = vsel %vm871, 0.0, %v1491
        %v1493 = vrot.slane %v1484, 4
        %v1494 = vsel %vm871, 0.0, %v1493
        %v1495 = vrot.slane %v1488, 4
        %v1496 = vsel %vm871, 0.0, %v1495
        %v1497 = vsel %vm871, %v1491, %v1472
        %v1499 = vunpack.c.l.s4 1983009808
        %v1500 = vunpack.c.0.s8 %v1499
        %v1501 = vperm.slane %v1497, %v1500
        %v1502 = vrot.slane %v1492, 4
        %v1503 = vsel %vm871, %v1502, %v1490
        %v1505 = vunpack.c.l.s4 1983009808
        %v1506 = vunpack.c.0.s8 %v1505
        %v1507 = vperm.slane %v1503, %v1506
        %v1508 = vsel %vm871, %v1495, %v1484
        %v1510 = vunpack.c.l.s4 1983009808
        %v1511 = vunpack.c.0.s8 %v1510
        %v1512 = vperm.slane %v1508, %v1511
        %v1513 = vrot.slane %v1496, 4
        %v1514 = vsel %vm871, %v1513, %v1494
        %v1516 = vunpack.c.l.s4 1983009808
        %v1517 = vunpack.c.0.s8 %v1516
        %v1518 = vperm.slane %v1514, %v1517
        %v1519 = vrot.slane %v1507, 4
        %v1520 = vsel %vm871, %v1519, %v1501
        %v1521 = vrot.slane %v1501, 4
        %v1522 = vsel %vm871, %v1507, %v1521
        %v1524 = vunpack.c.l.s4 1934713408
        %v1525 = vunpack.c.0.s8 %v1524
        %v1526 = vperm.slane %v1520, %v1525
        %v1528 = vunpack.c.l.s4 1934713408
        %v1529 = vunpack.c.0.s8 %v1528
        %v1530 = vperm.slane %v1522, %v1529
        %v1531 = vrot.slane %v1518, 4
        %v1532 = vsel %vm871, %v1531, %v1512
        %v1533 = vrot.slane %v1512, 4
        %v1534 = vsel %vm871, %v1518, %v1533
        %v1536 = vunpack.c.l.s4 1934713408
        %v1537 = vunpack.c.0.s8 %v1536
        %v1538 = vperm.slane %v1532, %v1537
        %v1540 = vunpack.c.l.s4 1934713408
        %v1541 = vunpack.c.0.s8 %v1540
        %v1542 = vperm.slane %v1534, %v1541
        %v1543 = vrot.slane %v1538, 4
        %v1544 = vsel %vm871, %v1543, %v1526
        %v1545 = vrot.slane %v1526, 4
        %v1546 = vsel %vm871, %v1538, %v1545
        %v1547 = vrot.slane %v1542, 4
        %v1548 = vsel %vm871, %v1547, %v1530
        %v1549 = vrot.slane %v1530, 4
        %v1550 = vsel %vm871, %v1542, %v1549
        %1552 = vrot.lane.b32.xlu0 %v1546, 8
        %v1553 = vpop.permute.xlu0 %1552
        %1556 = vrot.lane.b32.xlu0 %v1548, 16
        %v1557 = vpop.permute.xlu0 %1556
        %1560 = vrot.lane.b32.xlu0 %v1550, 24
        %v1561 = vpop.permute.xlu0 %1560
        %v1563 = vsel %vm1235, %v1544, %v1553
        %vm1564 = vcmask 130048
        %v1565 = vsel %vm1564, %v1563, %v1557
        %vm1566 = vcmask 195584
        %v1567 = vsel %vm1566, %v1565, %v1561
        %v1568 = vpack.c.bf16 %v1567, %v1567
        %v1569 = vld [vmem:[%s742] sm:$0xf]
        %v1570 = vld [vmem:[%s742 + $0x4] sm:$0xf]
        %v1571 = vld [vmem:[%s742 + $0x8] sm:$0xf]
        %v1572 = vld [vmem:[%s742 + $0xc] sm:$0xf]
        %v1573 = vld [vmem:[%s745] sm:$0x1]
        %v1575 = vperm.slane %v1573, 0
        %v1581 = vunpack.c.l.b16 %v1569
        %v1582 = vunpack.c.l.b16 %v1570
        %v1583 = vunpack.c.l.b16 %v1571
        %v1584 = vunpack.c.l.b16 %v1572
        %v1585 = vpack.c.b16 %v1582, %v1581
        %v1586 = vpack.c.b16 %v1584, %v1583
        %v1590 = vsel %vm807, %v1568, 0
        %1592 = vmatpush.bf16.msra.mxu0 0
        %1593 = vmatpush.bf16.msra.mxu0 0
        %1594 = vmatpush.bf16.msra.mxu0 0
        %1595 = vmatpush.bf16.msra.mxu0 0
        %1596 = vmatpush.bf16.msra.mxu0 0
        %1597 = vmatpush.bf16.msra.mxu0 0
        %1598 = vmatpush.bf16.msra.mxu0 %v1586
        %1599 = vmatpush.bf16.msra.mxu0 %v1585
        %1600 = vmatmul.bf16.gmra.mxu0 %v1590
        %v1601 = vpop.f32.mrf.mxu0
        %v1602 = vadd.f32 %v1575, %v1601
        %v1603 = vpop.f32.mrf.mxu0
        %1604 = vdwg.mxu0
        %v1605 = vadd.f32 %v1602, %v783
        %v1606 = vld [vmem:[%s748] sm:$0x1]
        %v1607 = vld [vmem:[%s751] sm:$0x1]
        %v1608 = vsel %vm807, %v1605, 0.0
        %1609 = vadd.xlane.f32.xlu0 %v1608
        %v1610 = vpop.xlane.xlu0 %1609
        %v1611 = vrcp.pop 32.0
        %v1612 = vmul.f32 32.0, %v1611
        %v1613 = vsub.f32 1.0, %v1612
        %v1614 = vmul.f32 %v1611, %v1613
        %v1615 = vadd.f32 %v1611, %v1614
        %vm1616 = vweird.f32 %v1611
        %v1617 = vsel %vm1616, %v1611, %v1615
        %v1618 = vmul.f32 %v1610, %v1617
        %v1619 = vsub.f32 %v1605, %v1618
        %v1620 = vmul.f32 %v1619, %v1619
        %v1621 = vsel %vm807, %v1620, 0.0
        %1622 = vadd.xlane.f32.xlu0 %v1621
        %v1623 = vpop.xlane.xlu0 %1622
        %v1624 = vmul.f32 %v1623, %v1617
        %v1625 = vadd.f32 %v1624, 1e-05
        %v1626 = vrsqrt.pop %v1625
        %v1627 = vmul.f32 %v1626, %v1625
        %v1628 = vmul.f32 %v1627, %v1626
        %v1629 = vmul.f32 0.5, %v1628
        %v1630 = vsub.f32 1.5, %v1629
        %v1631 = vmul.f32 %v1626, %v1630
        %vm1632 = vweird.f32 %v1625
        %vm1633 = vweird.f32 %v1626
        %vm1634 = vmor %vm1632, %vm1633
        %v1635 = vsel %vm1634, %v1626, %v1631
        %v1636 = vmul.f32 %v1619, %v1635
        %v1638 = vperm.slane %v1606, 0
        %v1640 = vmul.f32 %v1636, %v1638
        %v1642 = vperm.slane %v1607, 0
        %v1644 = vadd.f32 %v1640, %v1642
        %v1645 = vpack.c.bf16 %v1644, %v1644
        %v1646 = vld [vmem:[%s756] sm:$0xff]
        %v1647 = vld [vmem:[%s756 + $0x8] sm:$0xff]
        %v1648 = vld [vmem:[%s756 + $0x10] sm:$0xff]
        %v1649 = vld [vmem:[%s756 + $0x18] sm:$0xff]
        %v1650 = vld [vmem:[%s756 + $0x20] sm:$0xff]
        %v1651 = vld [vmem:[%s756 + $0x28] sm:$0xff]
        %v1652 = vld [vmem:[%s756 + $0x30] sm:$0xff]
        %v1653 = vld [vmem:[%s756 + $0x38] sm:$0xff]
        %v1654 = vld [vmem:[%s756 + $0x40] sm:$0xff]
        %v1655 = vld [vmem:[%s756 + $0x48] sm:$0xff]
        %v1656 = vld [vmem:[%s756 + $0x50] sm:$0xff]
        %v1657 = vld [vmem:[%s756 + $0x58] sm:$0xff]
        %v1658 = vld [vmem:[%s756 + $0x60] sm:$0xff]
        %v1659 = vld [vmem:[%s756 + $0x68] sm:$0xff]
        %v1660 = vld [vmem:[%s756 + $0x70] sm:$0xff]
        %v1661 = vld [vmem:[%s756 + $0x78] sm:$0xff]
        %v1662 = vld [vmem:[%s756 + $0x80] sm:$0xff]
        %v1663 = vld [vmem:[%s756 + $0x88] sm:$0xff]
        %v1664 = vld [vmem:[%s756 + $0x90] sm:$0xff]
        %v1665 = vld [vmem:[%s756 + $0x98] sm:$0xff]
        %v1666 = vld [vmem:[%s756 + $0xa0] sm:$0xff]
        %v1667 = vld [vmem:[%s756 + $0xa8] sm:$0xff]
        %v1668 = vld [vmem:[%s756 + $0xb0] sm:$0xff]
        %v1669 = vld [vmem:[%s756 + $0xb8] sm:$0xff]
        %v1670 = vld [vmem:[%s756 + $0xc0] sm:$0xff]
        %v1671 = vld [vmem:[%s756 + $0xc8] sm:$0xff]
        %v1672 = vld [vmem:[%s756 + $0xd0] sm:$0xff]
        %v1673 = vld [vmem:[%s756 + $0xd8] sm:$0xff]
        %v1674 = vld [vmem:[%s756 + $0xe0] sm:$0xff]
        %v1675 = vld [vmem:[%s756 + $0xe8] sm:$0xff]
        %v1676 = vld [vmem:[%s756 + $0xf0] sm:$0xff]
        %v1677 = vld [vmem:[%s756 + $0xf8] sm:$0xff]
        %v1678 = vld [vmem:[%s760] sm:$0xff]
        %v1679 = vld [vmem:[%s760 + $0x8] sm:$0xff]
        %v1682 = vperm.slane %v1678, 0
        %v1683 = vperm.slane %v1678, 1
        %v1684 = vperm.slane %v1678, 2
        %v1685 = vperm.slane %v1678, 3
        %v1686 = vperm.slane %v1678, 4
        %v1687 = vperm.slane %v1678, 5
        %v1688 = vperm.slane %v1678, 6
        %v1689 = vperm.slane %v1678, 7
        %v1690 = vperm.slane %v1679, 0
        %v1691 = vperm.slane %v1679, 1
        %v1692 = vperm.slane %v1679, 2
        %v1693 = vperm.slane %v1679, 3
        %v1694 = vperm.slane %v1679, 4
        %v1695 = vperm.slane %v1679, 5
        %v1696 = vperm.slane %v1679, 6
        %v1697 = vperm.slane %v1679, 7
        %v1746 = vunpack.c.l.b16 %v1646
        %v1747 = vunpack.c.h.b16 %v1646
        %v1748 = vunpack.c.l.b16 %v1647
        %v1749 = vunpack.c.h.b16 %v1647
        %v1750 = vunpack.c.l.b16 %v1648
        %v1751 = vunpack.c.h.b16 %v1648
        %v1752 = vunpack.c.l.b16 %v1649
        %v1753 = vunpack.c.h.b16 %v1649
        %v1754 = vunpack.c.l.b16 %v1650
        %v1755 = vunpack.c.h.b16 %v1650
        %v1756 = vunpack.c.l.b16 %v1651
        %v1757 = vunpack.c.h.b16 %v1651
        %v1758 = vunpack.c.l.b16 %v1652
        %v1759 = vunpack.c.h.b16 %v1652
        %v1760 = vunpack.c.l.b16 %v1653
        %v1761 = vunpack.c.h.b16 %v1653
        %v1762 = vunpack.c.l.b16 %v1654
        %v1763 = vunpack.c.h.b16 %v1654
        %v1764 = vunpack.c.l.b16 %v1655
        %v1765 = vunpack.c.h.b16 %v1655
        %v1766 = vunpack.c.l.b16 %v1656
        %v1767 = vunpack.c.h.b16 %v1656
        %v1768 = vunpack.c.l.b16 %v1657
        %v1769 = vunpack.c.h.b16 %v1657
        %v1770 = vunpack.c.l.b16 %v1658
        %v1771 = vunpack.c.h.b16 %v1658
        %v1772 = vunpack.c.l.b16 %v1659
        %v1773 = vunpack.c.h.b16 %v1659
        %v1774 = vunpack.c.l.b16 %v1660
        %v1775 = vunpack.c.h.b16 %v1660
        %v1776 = vunpack.c.l.b16 %v1661
        %v1777 = vunpack.c.h.b16 %v1661
        %v1778 = vunpack.c.l.b16 %v1662
        %v1779 = vunpack.c.h.b16 %v1662
        %v1780 = vunpack.c.l.b16 %v1663
        %v1781 = vunpack.c.h.b16 %v1663
        %v1782 = vunpack.c.l.b16 %v1664
        %v1783 = vunpack.c.h.b16 %v1664
        %v1784 = vunpack.c.l.b16 %v1665
        %v1785 = vunpack.c.h.b16 %v1665
        %v1786 = vunpack.c.l.b16 %v1666
        %v1787 = vunpack.c.h.b16 %v1666
        %v1788 = vunpack.c.l.b16 %v1667
        %v1789 = vunpack.c.h.b16 %v1667
        %v1790 = vunpack.c.l.b16 %v1668
        %v1791 = vunpack.c.h.b16 %v1668
        %v1792 = vunpack.c.l.b16 %v1669
        %v1793 = vunpack.c.h.b16 %v1669
        %v1794 = vunpack.c.l.b16 %v1670
        %v1795 = vunpack.c.h.b16 %v1670
        %v1796 = vunpack.c.l.b16 %v1671
        %v1797 = vunpack.c.h.b16 %v1671
        %v1798 = vunpack.c.l.b16 %v1672
        %v1799 = vunpack.c.h.b16 %v1672
        %v1800 = vunpack.c.l.b16 %v1673
        %v1801 = vunpack.c.h.b16 %v1673
        %v1802 = vunpack.c.l.b16 %v1674
        %v1803 = vunpack.c.h.b16 %v1674
        %v1804 = vunpack.c.l.b16 %v1675
        %v1805 = vunpack.c.h.b16 %v1675
        %v1806 = vunpack.c.l.b16 %v1676
        %v1807 = vunpack.c.h.b16 %v1676
        %v1808 = vunpack.c.l.b16 %v1677
        %v1809 = vunpack.c.h.b16 %v1677
        %v1810 = vpack.c.b16 %v1762, %v1746
        %v1811 = vpack.c.b16 %v1763, %v1747
        %v1812 = vpack.c.b16 %v1764, %v1748
        %v1813 = vpack.c.b16 %v1765, %v1749
        %v1814 = vpack.c.b16 %v1766, %v1750
        %v1815 = vpack.c.b16 %v1767, %v1751
        %v1816 = vpack.c.b16 %v1768, %v1752
        %v1817 = vpack.c.b16 %v1769, %v1753
        %v1818 = vpack.c.b16 %v1770, %v1754
        %v1819 = vpack.c.b16 %v1771, %v1755
        %v1820 = vpack.c.b16 %v1772, %v1756
        %v1821 = vpack.c.b16 %v1773, %v1757
        %v1822 = vpack.c.b16 %v1774, %v1758
        %v1823 = vpack.c.b16 %v1775, %v1759
        %v1824 = vpack.c.b16 %v1776, %v1760
        %v1825 = vpack.c.b16 %v1777, %v1761
        %v1826 = vpack.c.b16 %v1794, %v1778
        %v1827 = vpack.c.b16 %v1795, %v1779
        %v1828 = vpack.c.b16 %v1796, %v1780
        %v1829 = vpack.c.b16 %v1797, %v1781
        %v1830 = vpack.c.b16 %v1798, %v1782
        %v1831 = vpack.c.b16 %v1799, %v1783
        %v1832 = vpack.c.b16 %v1800, %v1784
        %v1833 = vpack.c.b16 %v1801, %v1785
        %v1834 = vpack.c.b16 %v1802, %v1786
        %v1835 = vpack.c.b16 %v1803, %v1787
        %v1836 = vpack.c.b16 %v1804, %v1788
        %v1837 = vpack.c.b16 %v1805, %v1789
        %v1838 = vpack.c.b16 %v1806, %v1790
        %v1839 = vpack.c.b16 %v1807, %v1791
        %v1840 = vpack.c.b16 %v1808, %v1792
        %v1841 = vpack.c.b16 %v1809, %v1793
        %v1875 = vsel %vm807, %v1645, 0
        %1877 = vmatpush.bf16.msra.mxu0 0
        %1878 = vmatpush.bf16.msra.mxu0 0
        %1879 = vmatpush.bf16.msra.mxu0 0
        %1880 = vmatpush.bf16.msra.mxu0 0
        %1881 = vmatpush.bf16.msra.mxu0 0
        %1882 = vmatpush.bf16.msra.mxu0 0
        %1883 = vmatpush.bf16.msra.mxu0 %v1826
        %1884 = vmatpush.bf16.msra.mxu0 %v1810
        %1885 = vmatmul.bf16.gmra.mxu0 %v1875
        %v1886 = vpop.f32.mrf.mxu0
        %v1887 = vadd.f32 %v1682, %v1886
        %v1888 = vpop.f32.mrf.mxu0
        %1889 = vdwg.mxu0
        %1890 = vmatpush.bf16.msra.mxu0 0
        %1891 = vmatpush.bf16.msra.mxu0 0
        %1892 = vmatpush.bf16.msra.mxu0 0
        %1893 = vmatpush.bf16.msra.mxu0 0
        %1894 = vmatpush.bf16.msra.mxu0 0
        %1895 = vmatpush.bf16.msra.mxu0 0
        %1896 = vmatpush.bf16.msra.mxu0 %v1827
        %1897 = vmatpush.bf16.msra.mxu0 %v1811
        %1898 = vmatmul.bf16.gmra.mxu0 %v1875
        %v1899 = vpop.f32.mrf.mxu0
        %v1900 = vadd.f32 %v1683, %v1899
        %v1901 = vpop.f32.mrf.mxu0
        %1902 = vdwg.mxu0
        %1903 = vmatpush.bf16.msra.mxu0 0
        %1904 = vmatpush.bf16.msra.mxu0 0
        %1905 = vmatpush.bf16.msra.mxu0 0
        %1906 = vmatpush.bf16.msra.mxu0 0
        %1907 = vmatpush.bf16.msra.mxu0 0
        %1908 = vmatpush.bf16.msra.mxu0 0
        %1909 = vmatpush.bf16.msra.mxu0 %v1828
        %1910 = vmatpush.bf16.msra.mxu0 %v1812
        %1911 = vmatmul.bf16.gmra.mxu0 %v1875
        %v1912 = vpop.f32.mrf.mxu0
        %v1913 = vadd.f32 %v1684, %v1912
        %v1914 = vpop.f32.mrf.mxu0
        %1915 = vdwg.mxu0
        %1916 = vmatpush.bf16.msra.mxu0 0
        %1917 = vmatpush.bf16.msra.mxu0 0
        %1918 = vmatpush.bf16.msra.mxu0 0
        %1919 = vmatpush.bf16.msra.mxu0 0
        %1920 = vmatpush.bf16.msra.mxu0 0
        %1921 = vmatpush.bf16.msra.mxu0 0
        %1922 = vmatpush.bf16.msra.mxu0 %v1829
        %1923 = vmatpush.bf16.msra.mxu0 %v1813
        %1924 = vmatmul.bf16.gmra.mxu0 %v1875
        %v1925 = vpop.f32.mrf.mxu0
        %v1926 = vadd.f32 %v1685, %v1925
        %v1927 = vpop.f32.mrf.mxu0
        %1928 = vdwg.mxu0
        %1929 = vmatpush.bf16.msra.mxu0 0
        %1930 = vmatpush.bf16.msra.mxu0 0
        %1931 = vmatpush.bf16.msra.mxu0 0
        %1932 = vmatpush.bf16.msra.mxu0 0
        %1933 = vmatpush.bf16.msra.mxu0 0
        %1934 = vmatpush.bf16.msra.mxu0 0
        %1935 = vmatpush.bf16.msra.mxu0 %v1830
        %1936 = vmatpush.bf16.msra.mxu0 %v1814
        %1937 = vmatmul.bf16.gmra.mxu0 %v1875
        %v1938 = vpop.f32.mrf.mxu0
        %v1939 = vadd.f32 %v1686, %v1938
        %v1940 = vpop.f32.mrf.mxu0
        %1941 = vdwg.mxu0
        %1942 = vmatpush.bf16.msra.mxu0 0
        %1943 = vmatpush.bf16.msra.mxu0 0
        %1944 = vmatpush.bf16.msra.mxu0 0
        %1945 = vmatpush.bf16.msra.mxu0 0
        %1946 = vmatpush.bf16.msra.mxu0 0
        %1947 = vmatpush.bf16.msra.mxu0 0
        %1948 = vmatpush.bf16.msra.mxu0 %v1831
        %1949 = vmatpush.bf16.msra.mxu0 %v1815
        %1950 = vmatmul.bf16.gmra.mxu0 %v1875
        %v1951 = vpop.f32.mrf.mxu0
        %v1952 = vadd.f32 %v1687, %v1951
        %v1953 = vpop.f32.mrf.mxu0
        %1954 = vdwg.mxu0
        %1955 = vmatpush.bf16.msra.mxu0 0
        %1956 = vmatpush.bf16.msra.mxu0 0
        %1957 = vmatpush.bf16.msra.mxu0 0
        %1958 = vmatpush.bf16.msra.mxu0 0
        %1959 = vmatpush.bf16.msra.mxu0 0
        %1960 = vmatpush.bf16.msra.mxu0 0
        %1961 = vmatpush.bf16.msra.mxu0 %v1832
        %1962 = vmatpush.bf16.msra.mxu0 %v1816
        %1963 = vmatmul.bf16.gmra.mxu0 %v1875
        %v1964 = vpop.f32.mrf.mxu0
        %v1965 = vadd.f32 %v1688, %v1964
        %v1966 = vpop.f32.mrf.mxu0
        %1967 = vdwg.mxu0
        %1968 = vmatpush.bf16.msra.mxu0 0
        %1969 = vmatpush.bf16.msra.mxu0 0
        %1970 = vmatpush.bf16.msra.mxu0 0
        %1971 = vmatpush.bf16.msra.mxu0 0
        %1972 = vmatpush.bf16.msra.mxu0 0
        %1973 = vmatpush.bf16.msra.mxu0 0
        %1974 = vmatpush.bf16.msra.mxu0 %v1833
        %1975 = vmatpush.bf16.msra.mxu0 %v1817
        %1976 = vmatmul.bf16.gmra.mxu0 %v1875
        %v1977 = vpop.f32.mrf.mxu0
        %v1978 = vadd.f32 %v1689, %v1977
        %v1979 = vpop.f32.mrf.mxu0
        %1980 = vdwg.mxu0
        %1981 = vmatpush.bf16.msra.mxu0 0
        %1982 = vmatpush.bf16.msra.mxu0 0
        %1983 = vmatpush.bf16.msra.mxu0 0
        %1984 = vmatpush.bf16.msra.mxu0 0
        %1985 = vmatpush.bf16.msra.mxu0 0
        %1986 = vmatpush.bf16.msra.mxu0 0
        %1987 = vmatpush.bf16.msra.mxu0 %v1834
        %1988 = vmatpush.bf16.msra.mxu0 %v1818
        %1989 = vmatmul.bf16.gmra.mxu0 %v1875
        %v1990 = vpop.f32.mrf.mxu0
        %v1991 = vadd.f32 %v1690, %v1990
        %v1992 = vpop.f32.mrf.mxu0
        %1993 = vdwg.mxu0
        %1994 = vmatpush.bf16.msra.mxu0 0
        %1995 = vmatpush.bf16.msra.mxu0 0
        %1996 = vmatpush.bf16.msra.mxu0 0
        %1997 = vmatpush.bf16.msra.mxu0 0
        %1998 = vmatpush.bf16.msra.mxu0 0
        %1999 = vmatpush.bf16.msra.mxu0 0
        %2000 = vmatpush.bf16.msra.mxu0 %v1835
        %2001 = vmatpush.bf16.msra.mxu0 %v1819
        %2002 = vmatmul.bf16.gmra.mxu0 %v1875
        %v2003 = vpop.f32.mrf.mxu0
        %v2004 = vadd.f32 %v1691, %v2003
        %v2005 = vpop.f32.mrf.mxu0
        %2006 = vdwg.mxu0
        %2007 = vmatpush.bf16.msra.mxu0 0
        %2008 = vmatpush.bf16.msra.mxu0 0
        %2009 = vmatpush.bf16.msra.mxu0 0
        %2010 = vmatpush.bf16.msra.mxu0 0
        %2011 = vmatpush.bf16.msra.mxu0 0
        %2012 = vmatpush.bf16.msra.mxu0 0
        %2013 = vmatpush.bf16.msra.mxu0 %v1836
        %2014 = vmatpush.bf16.msra.mxu0 %v1820
        %2015 = vmatmul.bf16.gmra.mxu0 %v1875
        %v2016 = vpop.f32.mrf.mxu0
        %v2017 = vadd.f32 %v1692, %v2016
        %v2018 = vpop.f32.mrf.mxu0
        %2019 = vdwg.mxu0
        %2020 = vmatpush.bf16.msra.mxu0 0
        %2021 = vmatpush.bf16.msra.mxu0 0
        %2022 = vmatpush.bf16.msra.mxu0 0
        %2023 = vmatpush.bf16.msra.mxu0 0
        %2024 = vmatpush.bf16.msra.mxu0 0
        %2025 = vmatpush.bf16.msra.mxu0 0
        %2026 = vmatpush.bf16.msra.mxu0 %v1837
        %2027 = vmatpush.bf16.msra.mxu0 %v1821
        %2028 = vmatmul.bf16.gmra.mxu0 %v1875
        %v2029 = vpop.f32.mrf.mxu0
        %v2030 = vadd.f32 %v1693, %v2029
        %v2031 = vpop.f32.mrf.mxu0
        %2032 = vdwg.mxu0
        %2033 = vmatpush.bf16.msra.mxu0 0
        %2034 = vmatpush.bf16.msra.mxu0 0
        %2035 = vmatpush.bf16.msra.mxu0 0
        %2036 = vmatpush.bf16.msra.mxu0 0
        %2037 = vmatpush.bf16.msra.mxu0 0
        %2038 = vmatpush.bf16.msra.mxu0 0
        %2039 = vmatpush.bf16.msra.mxu0 %v1838
        %2040 = vmatpush.bf16.msra.mxu0 %v1822
        %2041 = vmatmul.bf16.gmra.mxu0 %v1875
        %v2042 = vpop.f32.mrf.mxu0
        %v2043 = vadd.f32 %v1694, %v2042
        %v2044 = vpop.f32.mrf.mxu0
        %2045 = vdwg.mxu0
        %2046 = vmatpush.bf16.msra.mxu0 0
        %2047 = vmatpush.bf16.msra.mxu0 0
        %2048 = vmatpush.bf16.msra.mxu0 0
        %2049 = vmatpush.bf16.msra.mxu0 0
        %2050 = vmatpush.bf16.msra.mxu0 0
        %2051 = vmatpush.bf16.msra.mxu0 0
        %2052 = vmatpush.bf16.msra.mxu0 %v1839
        %2053 = vmatpush.bf16.msra.mxu0 %v1823
        %2054 = vmatmul.bf16.gmra.mxu0 %v1875
        %v2055 = vpop.f32.mrf.mxu0
        %v2056 = vadd.f32 %v1695, %v2055
        %v2057 = vpop.f32.mrf.mxu0
        %2058 = vdwg.mxu0
        %2059 = vmatpush.bf16.msra.mxu0 0
        %2060 = vmatpush.bf16.msra.mxu0 0
        %2061 = vmatpush.bf16.msra.mxu0 0
        %2062 = vmatpush.bf16.msra.mxu0 0
        %2063 = vmatpush.bf16.msra.mxu0 0
        %2064 = vmatpush.bf16.msra.mxu0 0
        %2065 = vmatpush.bf16.msra.mxu0 %v1840
        %2066 = vmatpush.bf16.msra.mxu0 %v1824
        %2067 = vmatmul.bf16.gmra.mxu0 %v1875
        %v2068 = vpop.f32.mrf.mxu0
        %v2069 = vadd.f32 %v1696, %v2068
        %v2070 = vpop.f32.mrf.mxu0
        %2071 = vdwg.mxu0
        %2072 = vmatpush.bf16.msra.mxu0 0
        %2073 = vmatpush.bf16.msra.mxu0 0
        %2074 = vmatpush.bf16.msra.mxu0 0
        %2075 = vmatpush.bf16.msra.mxu0 0
        %2076 = vmatpush.bf16.msra.mxu0 0
        %2077 = vmatpush.bf16.msra.mxu0 0
        %2078 = vmatpush.bf16.msra.mxu0 %v1841
        %2079 = vmatpush.bf16.msra.mxu0 %v1825
        %2080 = vmatmul.bf16.gmra.mxu0 %v1875
        %v2081 = vpop.f32.mrf.mxu0
        %v2082 = vadd.f32 %v1697, %v2081
        %v2083 = vpop.f32.mrf.mxu0
        %2084 = vdwg.mxu0
        %v2085 = vmax.f32 %v1887, 0.0
        %v2086 = vmax.f32 %v1900, 0.0
        %v2087 = vmax.f32 %v1913, 0.0
        %v2088 = vmax.f32 %v1926, 0.0
        %v2089 = vmax.f32 %v1939, 0.0
        %v2090 = vmax.f32 %v1952, 0.0
        %v2091 = vmax.f32 %v1965, 0.0
        %v2092 = vmax.f32 %v1978, 0.0
        %v2093 = vmax.f32 %v1991, 0.0
        %v2094 = vmax.f32 %v2004, 0.0
        %v2095 = vmax.f32 %v2017, 0.0
        %v2096 = vmax.f32 %v2030, 0.0
        %v2097 = vmax.f32 %v2043, 0.0
        %v2098 = vmax.f32 %v2056, 0.0
        %v2099 = vmax.f32 %v2069, 0.0
        %v2100 = vmax.f32 %v2082, 0.0
        %v2101 = vpack.c.bf16 %v2085, %v2085
        %v2102 = vpack.c.bf16 %v2086, %v2086
        %v2103 = vpack.c.bf16 %v2087, %v2087
        %v2104 = vpack.c.bf16 %v2088, %v2088
        %v2105 = vpack.c.bf16 %v2089, %v2089
        %v2106 = vpack.c.bf16 %v2090, %v2090
        %v2107 = vpack.c.bf16 %v2091, %v2091
        %v2108 = vpack.c.bf16 %v2092, %v2092
        %v2109 = vpack.c.bf16 %v2093, %v2093
        %v2110 = vpack.c.bf16 %v2094, %v2094
        %v2111 = vpack.c.bf16 %v2095, %v2095
        %v2112 = vpack.c.bf16 %v2096, %v2096
        %v2113 = vpack.c.bf16 %v2097, %v2097
        %v2114 = vpack.c.bf16 %v2098, %v2098
        %v2115 = vpack.c.bf16 %v2099, %v2099
        %v2116 = vpack.c.bf16 %v2100, %v2100
        %v2117 = vld [vmem:[%s765] sm:$0xf]
        %v2118 = vld [vmem:[%s765 + $0x4] sm:$0xf]
        %v2119 = vld [vmem:[%s765 + $0x8] sm:$0xf]
        %v2120 = vld [vmem:[%s765 + $0xc] sm:$0xf]
        %v2121 = vld [vmem:[%s765 + $0x10] sm:$0xf]
        %v2122 = vld [vmem:[%s765 + $0x14] sm:$0xf]
        %v2123 = vld [vmem:[%s765 + $0x18] sm:$0xf]
        %v2124 = vld [vmem:[%s765 + $0x1c] sm:$0xf]
        %v2125 = vld [vmem:[%s765 + $0x20] sm:$0xf]
        %v2126 = vld [vmem:[%s765 + $0x24] sm:$0xf]
        %v2127 = vld [vmem:[%s765 + $0x28] sm:$0xf]
        %v2128 = vld [vmem:[%s765 + $0x2c] sm:$0xf]
        %v2129 = vld [vmem:[%s765 + $0x30] sm:$0xf]
        %v2130 = vld [vmem:[%s765 + $0x34] sm:$0xf]
        %v2131 = vld [vmem:[%s765 + $0x38] sm:$0xf]
        %v2132 = vld [vmem:[%s765 + $0x3c] sm:$0xf]
        %v2133 = vld [vmem:[%s765 + $0x40] sm:$0xf]
        %v2134 = vld [vmem:[%s765 + $0x44] sm:$0xf]
        %v2135 = vld [vmem:[%s765 + $0x48] sm:$0xf]
        %v2136 = vld [vmem:[%s765 + $0x4c] sm:$0xf]
        %v2137 = vld [vmem:[%s765 + $0x50] sm:$0xf]
        %v2138 = vld [vmem:[%s765 + $0x54] sm:$0xf]
        %v2139 = vld [vmem:[%s765 + $0x58] sm:$0xf]
        %v2140 = vld [vmem:[%s765 + $0x5c] sm:$0xf]
        %v2141 = vld [vmem:[%s765 + $0x60] sm:$0xf]
        %v2142 = vld [vmem:[%s765 + $0x64] sm:$0xf]
        %v2143 = vld [vmem:[%s765 + $0x68] sm:$0xf]
        %v2144 = vld [vmem:[%s765 + $0x6c] sm:$0xf]
        %v2145 = vld [vmem:[%s765 + $0x70] sm:$0xf]
        %v2146 = vld [vmem:[%s765 + $0x74] sm:$0xf]
        %v2147 = vld [vmem:[%s765 + $0x78] sm:$0xf]
        %v2148 = vld [vmem:[%s765 + $0x7c] sm:$0xf]
        %v2149 = vld [vmem:[%s765 + $0x80] sm:$0xf]
        %v2150 = vld [vmem:[%s765 + $0x84] sm:$0xf]
        %v2151 = vld [vmem:[%s765 + $0x88] sm:$0xf]
        %v2152 = vld [vmem:[%s765 + $0x8c] sm:$0xf]
        %v2153 = vld [vmem:[%s765 + $0x90] sm:$0xf]
        %v2154 = vld [vmem:[%s765 + $0x94] sm:$0xf]
        %v2155 = vld [vmem:[%s765 + $0x98] sm:$0xf]
        %v2156 = vld [vmem:[%s765 + $0x9c] sm:$0xf]
        %v2157 = vld [vmem:[%s765 + $0xa0] sm:$0xf]
        %v2158 = vld [vmem:[%s765 + $0xa4] sm:$0xf]
        %v2159 = vld [vmem:[%s765 + $0xa8] sm:$0xf]
        %v2160 = vld [vmem:[%s765 + $0xac] sm:$0xf]
        %v2161 = vld [vmem:[%s765 + $0xb0] sm:$0xf]
        %v2162 = vld [vmem:[%s765 + $0xb4] sm:$0xf]
        %v2163 = vld [vmem:[%s765 + $0xb8] sm:$0xf]
        %v2164 = vld [vmem:[%s765 + $0xbc] sm:$0xf]
        %v2165 = vld [vmem:[%s765 + $0xc0] sm:$0xf]
        %v2166 = vld [vmem:[%s765 + $0xc4] sm:$0xf]
        %v2167 = vld [vmem:[%s765 + $0xc8] sm:$0xf]
        %v2168 = vld [vmem:[%s765 + $0xcc] sm:$0xf]
        %v2169 = vld [vmem:[%s765 + $0xd0] sm:$0xf]
        %v2170 = vld [vmem:[%s765 + $0xd4] sm:$0xf]
        %v2171 = vld [vmem:[%s765 + $0xd8] sm:$0xf]
        %v2172 = vld [vmem:[%s765 + $0xdc] sm:$0xf]
        %v2173 = vld [vmem:[%s765 + $0xe0] sm:$0xf]
        %v2174 = vld [vmem:[%s765 + $0xe4] sm:$0xf]
        %v2175 = vld [vmem:[%s765 + $0xe8] sm:$0xf]
        %v2176 = vld [vmem:[%s765 + $0xec] sm:$0xf]
        %v2177 = vld [vmem:[%s765 + $0xf0] sm:$0xf]
        %v2178 = vld [vmem:[%s765 + $0xf4] sm:$0xf]
        %v2179 = vld [vmem:[%s765 + $0xf8] sm:$0xf]
        %v2180 = vld [vmem:[%s765 + $0xfc] sm:$0xf]
        %v2181 = vld [vmem:[%s765 + $0x100] sm:$0xf]
        %v2182 = vld [vmem:[%s765 + $0x104] sm:$0xf]
        %v2183 = vld [vmem:[%s765 + $0x108] sm:$0xf]
        %v2184 = vld [vmem:[%s765 + $0x10c] sm:$0xf]
        %v2185 = vld [vmem:[%s765 + $0x110] sm:$0xf]
        %v2186 = vld [vmem:[%s765 + $0x114] sm:$0xf]
        %v2187 = vld [vmem:[%s765 + $0x118] sm:$0xf]
        %v2188 = vld [vmem:[%s765 + $0x11c] sm:$0xf]
        %v2189 = vld [vmem:[%s765 + $0x120] sm:$0xf]
        %v2190 = vld [vmem:[%s765 + $0x124] sm:$0xf]
        %v2191 = vld [vmem:[%s765 + $0x128] sm:$0xf]
        %v2192 = vld [vmem:[%s765 + $0x12c] sm:$0xf]
        %v2193 = vld [vmem:[%s765 + $0x130] sm:$0xf]
        %v2194 = vld [vmem:[%s765 + $0x134] sm:$0xf]
        %v2195 = vld [vmem:[%s765 + $0x138] sm:$0xf]
        %v2196 = vld [vmem:[%s765 + $0x13c] sm:$0xf]
        %v2197 = vld [vmem:[%s765 + $0x140] sm:$0xf]
        %v2198 = vld [vmem:[%s765 + $0x144] sm:$0xf]
        %v2199 = vld [vmem:[%s765 + $0x148] sm:$0xf]
        %v2200 = vld [vmem:[%s765 + $0x14c] sm:$0xf]
        %v2201 = vld [vmem:[%s765 + $0x150] sm:$0xf]
        %v2202 = vld [vmem:[%s765 + $0x154] sm:$0xf]
        %v2203 = vld [vmem:[%s765 + $0x158] sm:$0xf]
        %v2204 = vld [vmem:[%s765 + $0x15c] sm:$0xf]
        %v2205 = vld [vmem:[%s765 + $0x160] sm:$0xf]
        %v2206 = vld [vmem:[%s765 + $0x164] sm:$0xf]
        %v2207 = vld [vmem:[%s765 + $0x168] sm:$0xf]
        %v2208 = vld [vmem:[%s765 + $0x16c] sm:$0xf]
        %v2209 = vld [vmem:[%s765 + $0x170] sm:$0xf]
        %v2210 = vld [vmem:[%s765 + $0x174] sm:$0xf]
        %v2211 = vld [vmem:[%s765 + $0x178] sm:$0xf]
        %v2212 = vld [vmem:[%s765 + $0x17c] sm:$0xf]
        %v2213 = vld [vmem:[%s765 + $0x180] sm:$0xf]
        %v2214 = vld [vmem:[%s765 + $0x184] sm:$0xf]
        %v2215 = vld [vmem:[%s765 + $0x188] sm:$0xf]
        %v2216 = vld [vmem:[%s765 + $0x18c] sm:$0xf]
        %v2217 = vld [vmem:[%s765 + $0x190] sm:$0xf]
        %v2218 = vld [vmem:[%s765 + $0x194] sm:$0xf]
        %v2219 = vld [vmem:[%s765 + $0x198] sm:$0xf]
        %v2220 = vld [vmem:[%s765 + $0x19c] sm:$0xf]
        %v2221 = vld [vmem:[%s765 + $0x1a0] sm:$0xf]
        %v2222 = vld [vmem:[%s765 + $0x1a4] sm:$0xf]
        %v2223 = vld [vmem:[%s765 + $0x1a8] sm:$0xf]
        %v2224 = vld [vmem:[%s765 + $0x1ac] sm:$0xf]
        %v2225 = vld [vmem:[%s765 + $0x1b0] sm:$0xf]
        %v2226 = vld [vmem:[%s765 + $0x1b4] sm:$0xf]
        %v2227 = vld [vmem:[%s765 + $0x1b8] sm:$0xf]
        %v2228 = vld [vmem:[%s765 + $0x1bc] sm:$0xf]
        %v2229 = vld [vmem:[%s765 + $0x1c0] sm:$0xf]
        %v2230 = vld [vmem:[%s765 + $0x1c4] sm:$0xf]
        %v2231 = vld [vmem:[%s765 + $0x1c8] sm:$0xf]
        %v2232 = vld [vmem:[%s765 + $0x1cc] sm:$0xf]
        %v2233 = vld [vmem:[%s765 + $0x1d0] sm:$0xf]
        %v2234 = vld [vmem:[%s765 + $0x1d4] sm:$0xf]
        %v2235 = vld [vmem:[%s765 + $0x1d8] sm:$0xf]
        %v2236 = vld [vmem:[%s765 + $0x1dc] sm:$0xf]
        %v2237 = vld [vmem:[%s765 + $0x1e0] sm:$0xf]
        %v2238 = vld [vmem:[%s765 + $0x1e4] sm:$0xf]
        %v2239 = vld [vmem:[%s765 + $0x1e8] sm:$0xf]
        %v2240 = vld [vmem:[%s765 + $0x1ec] sm:$0xf]
        %v2241 = vld [vmem:[%s765 + $0x1f0] sm:$0xf]
        %v2242 = vld [vmem:[%s765 + $0x1f4] sm:$0xf]
        %v2243 = vld [vmem:[%s765 + $0x1f8] sm:$0xf]
        %v2244 = vld [vmem:[%s765 + $0x1fc] sm:$0xf]
        %v2245 = vld [vmem:[%s765 + $0x200] sm:$0xf]
        %v2246 = vld [vmem:[%s765 + $0x204] sm:$0xf]
        %v2247 = vld [vmem:[%s765 + $0x208] sm:$0xf]
        %v2248 = vld [vmem:[%s765 + $0x20c] sm:$0xf]
        %v2249 = vld [vmem:[%s765 + $0x210] sm:$0xf]
        %v2250 = vld [vmem:[%s765 + $0x214] sm:$0xf]
        %v2251 = vld [vmem:[%s765 + $0x218] sm:$0xf]
        %v2252 = vld [vmem:[%s765 + $0x21c] sm:$0xf]
        %v2253 = vld [vmem:[%s765 + $0x220] sm:$0xf]
        %v2254 = vld [vmem:[%s765 + $0x224] sm:$0xf]
        %v2255 = vld [vmem:[%s765 + $0x228] sm:$0xf]
        %v2256 = vld [vmem:[%s765 + $0x22c] sm:$0xf]
        %v2257 = vld [vmem:[%s765 + $0x230] sm:$0xf]
        %v2258 = vld [vmem:[%s765 + $0x234] sm:$0xf]
        %v2259 = vld [vmem:[%s765 + $0x238] sm:$0xf]
        %v2260 = vld [vmem:[%s765 + $0x23c] sm:$0xf]
        %v2261 = vld [vmem:[%s765 + $0x240] sm:$0xf]
        %v2262 = vld [vmem:[%s765 + $0x244] sm:$0xf]
        %v2263 = vld [vmem:[%s765 + $0x248] sm:$0xf]
        %v2264 = vld [vmem:[%s765 + $0x24c] sm:$0xf]
        %v2265 = vld [vmem:[%s765 + $0x250] sm:$0xf]
        %v2266 = vld [vmem:[%s765 + $0x254] sm:$0xf]
        %v2267 = vld [vmem:[%s765 + $0x258] sm:$0xf]
        %v2268 = vld [vmem:[%s765 + $0x25c] sm:$0xf]
        %v2269 = vld [vmem:[%s765 + $0x260] sm:$0xf]
        %v2270 = vld [vmem:[%s765 + $0x264] sm:$0xf]
        %v2271 = vld [vmem:[%s765 + $0x268] sm:$0xf]
        %v2272 = vld [vmem:[%s765 + $0x26c] sm:$0xf]
        %v2273 = vld [vmem:[%s765 + $0x270] sm:$0xf]
        %v2274 = vld [vmem:[%s765 + $0x274] sm:$0xf]
        %v2275 = vld [vmem:[%s765 + $0x278] sm:$0xf]
        %v2276 = vld [vmem:[%s765 + $0x27c] sm:$0xf]
        %v2277 = vld [vmem:[%s765 + $0x280] sm:$0xf]
        %v2278 = vld [vmem:[%s765 + $0x284] sm:$0xf]
        %v2279 = vld [vmem:[%s765 + $0x288] sm:$0xf]
        %v2280 = vld [vmem:[%s765 + $0x28c] sm:$0xf]
        %v2281 = vld [vmem:[%s765 + $0x290] sm:$0xf]
        %v2282 = vld [vmem:[%s765 + $0x294] sm:$0xf]
        %v2283 = vld [vmem:[%s765 + $0x298] sm:$0xf]
        %v2284 = vld [vmem:[%s765 + $0x29c] sm:$0xf]
        %v2285 = vld [vmem:[%s765 + $0x2a0] sm:$0xf]
        %v2286 = vld [vmem:[%s765 + $0x2a4] sm:$0xf]
        %v2287 = vld [vmem:[%s765 + $0x2a8] sm:$0xf]
        %v2288 = vld [vmem:[%s765 + $0x2ac] sm:$0xf]
        %v2289 = vld [vmem:[%s765 + $0x2b0] sm:$0xf]
        %v2290 = vld [vmem:[%s765 + $0x2b4] sm:$0xf]
        %v2291 = vld [vmem:[%s765 + $0x2b8] sm:$0xf]
        %v2292 = vld [vmem:[%s765 + $0x2bc] sm:$0xf]
        %v2293 = vld [vmem:[%s765 + $0x2c0] sm:$0xf]
        %v2294 = vld [vmem:[%s765 + $0x2c4] sm:$0xf]
        %v2295 = vld [vmem:[%s765 + $0x2c8] sm:$0xf]
        %v2296 = vld [vmem:[%s765 + $0x2cc] sm:$0xf]
        %v2297 = vld [vmem:[%s765 + $0x2d0] sm:$0xf]
        %v2298 = vld [vmem:[%s765 + $0x2d4] sm:$0xf]
        %v2299 = vld [vmem:[%s765 + $0x2d8] sm:$0xf]
        %v2300 = vld [vmem:[%s765 + $0x2dc] sm:$0xf]
        %v2301 = vld [vmem:[%s765 + $0x2e0] sm:$0xf]
        %v2302 = vld [vmem:[%s765 + $0x2e4] sm:$0xf]
        %v2303 = vld [vmem:[%s765 + $0x2e8] sm:$0xf]
        %v2304 = vld [vmem:[%s765 + $0x2ec] sm:$0xf]
        %v2305 = vld [vmem:[%s765 + $0x2f0] sm:$0xf]
        %v2306 = vld [vmem:[%s765 + $0x2f4] sm:$0xf]
        %v2307 = vld [vmem:[%s765 + $0x2f8] sm:$0xf]
        %v2308 = vld [vmem:[%s765 + $0x2fc] sm:$0xf]
        %v2309 = vld [vmem:[%s765 + $0x300] sm:$0xf]
        %v2310 = vld [vmem:[%s765 + $0x304] sm:$0xf]
        %v2311 = vld [vmem:[%s765 + $0x308] sm:$0xf]
        %v2312 = vld [vmem:[%s765 + $0x30c] sm:$0xf]
        %v2313 = vld [vmem:[%s765 + $0x310] sm:$0xf]
        %v2314 = vld [vmem:[%s765 + $0x314] sm:$0xf]
        %v2315 = vld [vmem:[%s765 + $0x318] sm:$0xf]
        %v2316 = vld [vmem:[%s765 + $0x31c] sm:$0xf]
        %v2317 = vld [vmem:[%s765 + $0x320] sm:$0xf]
        %v2318 = vld [vmem:[%s765 + $0x324] sm:$0xf]
        %v2319 = vld [vmem:[%s765 + $0x328] sm:$0xf]
        %v2320 = vld [vmem:[%s765 + $0x32c] sm:$0xf]
        %v2321 = vld [vmem:[%s765 + $0x330] sm:$0xf]
        %v2322 = vld [vmem:[%s765 + $0x334] sm:$0xf]
        %v2323 = vld [vmem:[%s765 + $0x338] sm:$0xf]
        %v2324 = vld [vmem:[%s765 + $0x33c] sm:$0xf]
        %v2325 = vld [vmem:[%s765 + $0x340] sm:$0xf]
        %v2326 = vld [vmem:[%s765 + $0x344] sm:$0xf]
        %v2327 = vld [vmem:[%s765 + $0x348] sm:$0xf]
        %v2328 = vld [vmem:[%s765 + $0x34c] sm:$0xf]
        %v2329 = vld [vmem:[%s765 + $0x350] sm:$0xf]
        %v2330 = vld [vmem:[%s765 + $0x354] sm:$0xf]
        %v2331 = vld [vmem:[%s765 + $0x358] sm:$0xf]
        %v2332 = vld [vmem:[%s765 + $0x35c] sm:$0xf]
        %v2333 = vld [vmem:[%s765 + $0x360] sm:$0xf]
        %v2334 = vld [vmem:[%s765 + $0x364] sm:$0xf]
        %v2335 = vld [vmem:[%s765 + $0x368] sm:$0xf]
        %v2336 = vld [vmem:[%s765 + $0x36c] sm:$0xf]
        %v2337 = vld [vmem:[%s765 + $0x370] sm:$0xf]
        %v2338 = vld [vmem:[%s765 + $0x374] sm:$0xf]
        %v2339 = vld [vmem:[%s765 + $0x378] sm:$0xf]
        %v2340 = vld [vmem:[%s765 + $0x37c] sm:$0xf]
        %v2341 = vld [vmem:[%s765 + $0x380] sm:$0xf]
        %v2342 = vld [vmem:[%s765 + $0x384] sm:$0xf]
        %v2343 = vld [vmem:[%s765 + $0x388] sm:$0xf]
        %v2344 = vld [vmem:[%s765 + $0x38c] sm:$0xf]
        %v2345 = vld [vmem:[%s765 + $0x390] sm:$0xf]
        %v2346 = vld [vmem:[%s765 + $0x394] sm:$0xf]
        %v2347 = vld [vmem:[%s765 + $0x398] sm:$0xf]
        %v2348 = vld [vmem:[%s765 + $0x39c] sm:$0xf]
        %v2349 = vld [vmem:[%s765 + $0x3a0] sm:$0xf]
        %v2350 = vld [vmem:[%s765 + $0x3a4] sm:$0xf]
        %v2351 = vld [vmem:[%s765 + $0x3a8] sm:$0xf]
        %v2352 = vld [vmem:[%s765 + $0x3ac] sm:$0xf]
        %v2353 = vld [vmem:[%s765 + $0x3b0] sm:$0xf]
        %v2354 = vld [vmem:[%s765 + $0x3b4] sm:$0xf]
        %v2355 = vld [vmem:[%s765 + $0x3b8] sm:$0xf]
        %v2356 = vld [vmem:[%s765 + $0x3bc] sm:$0xf]
        %v2357 = vld [vmem:[%s765 + $0x3c0] sm:$0xf]
        %v2358 = vld [vmem:[%s765 + $0x3c4] sm:$0xf]
        %v2359 = vld [vmem:[%s765 + $0x3c8] sm:$0xf]
        %v2360 = vld [vmem:[%s765 + $0x3cc] sm:$0xf]
        %v2361 = vld [vmem:[%s765 + $0x3d0] sm:$0xf]
        %v2362 = vld [vmem:[%s765 + $0x3d4] sm:$0xf]
        %v2363 = vld [vmem:[%s765 + $0x3d8] sm:$0xf]
        %v2364 = vld [vmem:[%s765 + $0x3dc] sm:$0xf]
        %v2365 = vld [vmem:[%s765 + $0x3e0] sm:$0xf]
        %v2366 = vld [vmem:[%s765 + $0x3e4] sm:$0xf]
        %v2367 = vld [vmem:[%s765 + $0x3e8] sm:$0xf]
        %v2368 = vld [vmem:[%s765 + $0x3ec] sm:$0xf]
        %v2369 = vld [vmem:[%s765 + $0x3f0] sm:$0xf]
        %v2370 = vld [vmem:[%s765 + $0x3f4] sm:$0xf]
        %v2371 = vld [vmem:[%s765 + $0x3f8] sm:$0xf]
        %v2372 = vld [vmem:[%s765 + $0x3fc] sm:$0xf]
        %v2373 = vld [vmem:[%s768] sm:$0x1]
        %v2375 = vperm.slane %v2373, 0
        %v2633 = vunpack.c.l.b16 %v2117
        %v2634 = vunpack.c.l.b16 %v2118
        %v2635 = vunpack.c.l.b16 %v2119
        %v2636 = vunpack.c.l.b16 %v2120
        %v2637 = vunpack.c.l.b16 %v2121
        %v2638 = vunpack.c.l.b16 %v2122
        %v2639 = vunpack.c.l.b16 %v2123
        %v2640 = vunpack.c.l.b16 %v2124
        %v2641 = vunpack.c.l.b16 %v2125
        %v2642 = vunpack.c.l.b16 %v2126
        %v2643 = vunpack.c.l.b16 %v2127
        %v2644 = vunpack.c.l.b16 %v2128
        %v2645 = vunpack.c.l.b16 %v2129
        %v2646 = vunpack.c.l.b16 %v2130
        %v2647 = vunpack.c.l.b16 %v2131
        %v2648 = vunpack.c.l.b16 %v2132
        %v2649 = vunpack.c.l.b16 %v2133
        %v2650 = vunpack.c.l.b16 %v2134
        %v2651 = vunpack.c.l.b16 %v2135
        %v2652 = vunpack.c.l.b16 %v2136
        %v2653 = vunpack.c.l.b16 %v2137
        %v2654 = vunpack.c.l.b16 %v2138
        %v2655 = vunpack.c.l.b16 %v2139
        %v2656 = vunpack.c.l.b16 %v2140
        %v2657 = vunpack.c.l.b16 %v2141
        %v2658 = vunpack.c.l.b16 %v2142
        %v2659 = vunpack.c.l.b16 %v2143
        %v2660 = vunpack.c.l.b16 %v2144
        %v2661 = vunpack.c.l.b16 %v2145
        %v2662 = vunpack.c.l.b16 %v2146
        %v2663 = vunpack.c.l.b16 %v2147
        %v2664 = vunpack.c.l.b16 %v2148
        %v2665 = vunpack.c.l.b16 %v2149
        %v2666 = vunpack.c.l.b16 %v2150
        %v2667 = vunpack.c.l.b16 %v2151
        %v2668 = vunpack.c.l.b16 %v2152
        %v2669 = vunpack.c.l.b16 %v2153
        %v2670 = vunpack.c.l.b16 %v2154
        %v2671 = vunpack.c.l.b16 %v2155
        %v2672 = vunpack.c.l.b16 %v2156
        %v2673 = vunpack.c.l.b16 %v2157
        %v2674 = vunpack.c.l.b16 %v2158
        %v2675 = vunpack.c.l.b16 %v2159
        %v2676 = vunpack.c.l.b16 %v2160
        %v2677 = vunpack.c.l.b16 %v2161
        %v2678 = vunpack.c.l.b16 %v2162
        %v2679 = vunpack.c.l.b16 %v2163
        %v2680 = vunpack.c.l.b16 %v2164
        %v2681 = vunpack.c.l.b16 %v2165
        %v2682 = vunpack.c.l.b16 %v2166
        %v2683 = vunpack.c.l.b16 %v2167
        %v2684 = vunpack.c.l.b16 %v2168
        %v2685 = vunpack.c.l.b16 %v2169
        %v2686 = vunpack.c.l.b16 %v2170
        %v2687 = vunpack.c.l.b16 %v2171
        %v2688 = vunpack.c.l.b16 %v2172
        %v2689 = vunpack.c.l.b16 %v2173
        %v2690 = vunpack.c.l.b16 %v2174
        %v2691 = vunpack.c.l.b16 %v2175
        %v2692 = vunpack.c.l.b16 %v2176
        %v2693 = vunpack.c.l.b16 %v2177
        %v2694 = vunpack.c.l.b16 %v2178
        %v2695 = vunpack.c.l.b16 %v2179
        %v2696 = vunpack.c.l.b16 %v2180
        %v2697 = vunpack.c.l.b16 %v2181
        %v2698 = vunpack.c.l.b16 %v2182
        %v2699 = vunpack.c.l.b16 %v2183
        %v2700 = vunpack.c.l.b16 %v2184
        %v2701 = vunpack.c.l.b16 %v2185
        %v2702 = vunpack.c.l.b16 %v2186
        %v2703 = vunpack.c.l.b16 %v2187
        %v2704 = vunpack.c.l.b16 %v2188
        %v2705 = vunpack.c.l.b16 %v2189
        %v2706 = vunpack.c.l.b16 %v2190
        %v2707 = vunpack.c.l.b16 %v2191
        %v2708 = vunpack.c.l.b16 %v2192
        %v2709 = vunpack.c.l.b16 %v2193
        %v2710 = vunpack.c.l.b16 %v2194
        %v2711 = vunpack.c.l.b16 %v2195
        %v2712 = vunpack.c.l.b16 %v2196
        %v2713 = vunpack.c.l.b16 %v2197
        %v2714 = vunpack.c.l.b16 %v2198
        %v2715 = vunpack.c.l.b16 %v2199
        %v2716 = vunpack.c.l.b16 %v2200
        %v2717 = vunpack.c.l.b16 %v2201
        %v2718 = vunpack.c.l.b16 %v2202
        %v2719 = vunpack.c.l.b16 %v2203
        %v2720 = vunpack.c.l.b16 %v2204
        %v2721 = vunpack.c.l.b16 %v2205
        %v2722 = vunpack.c.l.b16 %v2206
        %v2723 = vunpack.c.l.b16 %v2207
        %v2724 = vunpack.c.l.b16 %v2208
        %v2725 = vunpack.c.l.b16 %v2209
        %v2726 = vunpack.c.l.b16 %v2210
        %v2727 = vunpack.c.l.b16 %v2211
        %v2728 = vunpack.c.l.b16 %v2212
        %v2729 = vunpack.c.l.b16 %v2213
        %v2730 = vunpack.c.l.b16 %v2214
        %v2731 = vunpack.c.l.b16 %v2215
        %v2732 = vunpack.c.l.b16 %v2216
        %v2733 = vunpack.c.l.b16 %v2217
        %v2734 = vunpack.c.l.b16 %v2218
        %v2735 = vunpack.c.l.b16 %v2219
        %v2736 = vunpack.c.l.b16 %v2220
        %v2737 = vunpack.c.l.b16 %v2221
        %v2738 = vunpack.c.l.b16 %v2222
        %v2739 = vunpack.c.l.b16 %v2223
        %v2740 = vunpack.c.l.b16 %v2224
        %v2741 = vunpack.c.l.b16 %v2225
        %v2742 = vunpack.c.l.b16 %v2226
        %v2743 = vunpack.c.l.b16 %v2227
        %v2744 = vunpack.c.l.b16 %v2228
        %v2745 = vunpack.c.l.b16 %v2229
        %v2746 = vunpack.c.l.b16 %v2230
        %v2747 = vunpack.c.l.b16 %v2231
        %v2748 = vunpack.c.l.b16 %v2232
        %v2749 = vunpack.c.l.b16 %v2233
        %v2750 = vunpack.c.l.b16 %v2234
        %v2751 = vunpack.c.l.b16 %v2235
        %v2752 = vunpack.c.l.b16 %v2236
        %v2753 = vunpack.c.l.b16 %v2237
        %v2754 = vunpack.c.l.b16 %v2238
        %v2755 = vunpack.c.l.b16 %v2239
        %v2756 = vunpack.c.l.b16 %v2240
        %v2757 = vunpack.c.l.b16 %v2241
        %v2758 = vunpack.c.l.b16 %v2242
        %v2759 = vunpack.c.l.b16 %v2243
        %v2760 = vunpack.c.l.b16 %v2244
        %v2761 = vunpack.c.l.b16 %v2245
        %v2762 = vunpack.c.l.b16 %v2246
        %v2763 = vunpack.c.l.b16 %v2247
        %v2764 = vunpack.c.l.b16 %v2248
        %v2765 = vunpack.c.l.b16 %v2249
        %v2766 = vunpack.c.l.b16 %v2250
        %v2767 = vunpack.c.l.b16 %v2251
        %v2768 = vunpack.c.l.b16 %v2252
        %v2769 = vunpack.c.l.b16 %v2253
        %v2770 = vunpack.c.l.b16 %v2254
        %v2771 = vunpack.c.l.b16 %v2255
        %v2772 = vunpack.c.l.b16 %v2256
        %v2773 = vunpack.c.l.b16 %v2257
        %v2774 = vunpack.c.l.b16 %v2258
        %v2775 = vunpack.c.l.b16 %v2259
        %v2776 = vunpack.c.l.b16 %v2260
        %v2777 = vunpack.c.l.b16 %v2261
        %v2778 = vunpack.c.l.b16 %v2262
        %v2779 = vunpack.c.l.b16 %v2263
        %v2780 = vunpack.c.l.b16 %v2264
        %v2781 = vunpack.c.l.b16 %v2265
        %v2782 = vunpack.c.l.b16 %v2266
        %v2783 = vunpack.c.l.b16 %v2267
        %v2784 = vunpack.c.l.b16 %v2268
        %v2785 = vunpack.c.l.b16 %v2269
        %v2786 = vunpack.c.l.b16 %v2270
        %v2787 = vunpack.c.l.b16 %v2271
        %v2788 = vunpack.c.l.b16 %v2272
        %v2789 = vunpack.c.l.b16 %v2273
        %v2790 = vunpack.c.l.b16 %v2274
        %v2791 = vunpack.c.l.b16 %v2275
        %v2792 = vunpack.c.l.b16 %v2276
        %v2793 = vunpack.c.l.b16 %v2277
        %v2794 = vunpack.c.l.b16 %v2278
        %v2795 = vunpack.c.l.b16 %v2279
        %v2796 = vunpack.c.l.b16 %v2280
        %v2797 = vunpack.c.l.b16 %v2281
        %v2798 = vunpack.c.l.b16 %v2282
        %v2799 = vunpack.c.l.b16 %v2283
        %v2800 = vunpack.c.l.b16 %v2284
        %v2801 = vunpack.c.l.b16 %v2285
        %v2802 = vunpack.c.l.b16 %v2286
        %v2803 = vunpack.c.l.b16 %v2287
        %v2804 = vunpack.c.l.b16 %v2288
        %v2805 = vunpack.c.l.b16 %v2289
        %v2806 = vunpack.c.l.b16 %v2290
        %v2807 = vunpack.c.l.b16 %v2291
        %v2808 = vunpack.c.l.b16 %v2292
        %v2809 = vunpack.c.l.b16 %v2293
        %v2810 = vunpack.c.l.b16 %v2294
        %v2811 = vunpack.c.l.b16 %v2295
        %v2812 = vunpack.c.l.b16 %v2296
        %v2813 = vunpack.c.l.b16 %v2297
        %v2814 = vunpack.c.l.b16 %v2298
        %v2815 = vunpack.c.l.b16 %v2299
        %v2816 = vunpack.c.l.b16 %v2300
        %v2817 = vunpack.c.l.b16 %v2301
        %v2818 = vunpack.c.l.b16 %v2302
        %v2819 = vunpack.c.l.b16 %v2303
        %v2820 = vunpack.c.l.b16 %v2304
        %v2821 = vunpack.c.l.b16 %v2305
        %v2822 = vunpack.c.l.b16 %v2306
        %v2823 = vunpack.c.l.b16 %v2307
        %v2824 = vunpack.c.l.b16 %v2308
        %v2825 = vunpack.c.l.b16 %v2309
        %v2826 = vunpack.c.l.b16 %v2310
        %v2827 = vunpack.c.l.b16 %v2311
        %v2828 = vunpack.c.l.b16 %v2312
        %v2829 = vunpack.c.l.b16 %v2313
        %v2830 = vunpack.c.l.b16 %v2314
        %v2831 = vunpack.c.l.b16 %v2315
        %v2832 = vunpack.c.l.b16 %v2316
        %v2833 = vunpack.c.l.b16 %v2317
        %v2834 = vunpack.c.l.b16 %v2318
        %v2835 = vunpack.c.l.b16 %v2319
        %v2836 = vunpack.c.l.b16 %v2320
        %v2837 = vunpack.c.l.b16 %v2321
        %v2838 = vunpack.c.l.b16 %v2322
        %v2839 = vunpack.c.l.b16 %v2323
        %v2840 = vunpack.c.l.b16 %v2324
        %v2841 = vunpack.c.l.b16 %v2325
        %v2842 = vunpack.c.l.b16 %v2326
        %v2843 = vunpack.c.l.b16 %v2327
        %v2844 = vunpack.c.l.b16 %v2328
        %v2845 = vunpack.c.l.b16 %v2329
        %v2846 = vunpack.c.l.b16 %v2330
        %v2847 = vunpack.c.l.b16 %v2331
        %v2848 = vunpack.c.l.b16 %v2332
        %v2849 = vunpack.c.l.b16 %v2333
        %v2850 = vunpack.c.l.b16 %v2334
        %v2851 = vunpack.c.l.b16 %v2335
        %v2852 = vunpack.c.l.b16 %v2336
        %v2853 = vunpack.c.l.b16 %v2337
        %v2854 = vunpack.c.l.b16 %v2338
        %v2855 = vunpack.c.l.b16 %v2339
        %v2856 = vunpack.c.l.b16 %v2340
        %v2857 = vunpack.c.l.b16 %v2341
        %v2858 = vunpack.c.l.b16 %v2342
        %v2859 = vunpack.c.l.b16 %v2343
        %v2860 = vunpack.c.l.b16 %v2344
        %v2861 = vunpack.c.l.b16 %v2345
        %v2862 = vunpack.c.l.b16 %v2346
        %v2863 = vunpack.c.l.b16 %v2347
        %v2864 = vunpack.c.l.b16 %v2348
        %v2865 = vunpack.c.l.b16 %v2349
        %v2866 = vunpack.c.l.b16 %v2350
        %v2867 = vunpack.c.l.b16 %v2351
        %v2868 = vunpack.c.l.b16 %v2352
        %v2869 = vunpack.c.l.b16 %v2353
        %v2870 = vunpack.c.l.b16 %v2354
        %v2871 = vunpack.c.l.b16 %v2355
        %v2872 = vunpack.c.l.b16 %v2356
        %v2873 = vunpack.c.l.b16 %v2357
        %v2874 = vunpack.c.l.b16 %v2358
        %v2875 = vunpack.c.l.b16 %v2359
        %v2876 = vunpack.c.l.b16 %v2360
        %v2877 = vunpack.c.l.b16 %v2361
        %v2878 = vunpack.c.l.b16 %v2362
        %v2879 = vunpack.c.l.b16 %v2363
        %v2880 = vunpack.c.l.b16 %v2364
        %v2881 = vunpack.c.l.b16 %v2365
        %v2882 = vunpack.c.l.b16 %v2366
        %v2883 = vunpack.c.l.b16 %v2367
        %v2884 = vunpack.c.l.b16 %v2368
        %v2885 = vunpack.c.l.b16 %v2369
        %v2886 = vunpack.c.l.b16 %v2370
        %v2887 = vunpack.c.l.b16 %v2371
        %v2888 = vunpack.c.l.b16 %v2372
        %v2889 = vpack.c.b16 %v2634, %v2633
        %v2890 = vpack.c.b16 %v2636, %v2635
        %v2891 = vpack.c.b16 %v2638, %v2637
        %v2892 = vpack.c.b16 %v2640, %v2639
        %v2893 = vpack.c.b16 %v2642, %v2641
        %v2894 = vpack.c.b16 %v2644, %v2643
        %v2895 = vpack.c.b16 %v2646, %v2645
        %v2896 = vpack.c.b16 %v2648, %v2647
        %v2897 = vpack.c.b16 %v2650, %v2649
        %v2898 = vpack.c.b16 %v2652, %v2651
        %v2899 = vpack.c.b16 %v2654, %v2653
        %v2900 = vpack.c.b16 %v2656, %v2655
        %v2901 = vpack.c.b16 %v2658, %v2657
        %v2902 = vpack.c.b16 %v2660, %v2659
        %v2903 = vpack.c.b16 %v2662, %v2661
        %v2904 = vpack.c.b16 %v2664, %v2663
        %v2905 = vpack.c.b16 %v2666, %v2665
        %v2906 = vpack.c.b16 %v2668, %v2667
        %v2907 = vpack.c.b16 %v2670, %v2669
        %v2908 = vpack.c.b16 %v2672, %v2671
        %v2909 = vpack.c.b16 %v2674, %v2673
        %v2910 = vpack.c.b16 %v2676, %v2675
        %v2911 = vpack.c.b16 %v2678, %v2677
        %v2912 = vpack.c.b16 %v2680, %v2679
        %v2913 = vpack.c.b16 %v2682, %v2681
        %v2914 = vpack.c.b16 %v2684, %v2683
        %v2915 = vpack.c.b16 %v2686, %v2685
        %v2916 = vpack.c.b16 %v2688, %v2687
        %v2917 = vpack.c.b16 %v2690, %v2689
        %v2918 = vpack.c.b16 %v2692, %v2691
        %v2919 = vpack.c.b16 %v2694, %v2693
        %v2920 = vpack.c.b16 %v2696, %v2695
        %v2921 = vpack.c.b16 %v2698, %v2697
        %v2922 = vpack.c.b16 %v2700, %v2699
        %v2923 = vpack.c.b16 %v2702, %v2701
        %v2924 = vpack.c.b16 %v2704, %v2703
        %v2925 = vpack.c.b16 %v2706, %v2705
        %v2926 = vpack.c.b16 %v2708, %v2707
        %v2927 = vpack.c.b16 %v2710, %v2709
        %v2928 = vpack.c.b16 %v2712, %v2711
        %v2929 = vpack.c.b16 %v2714, %v2713
        %v2930 = vpack.c.b16 %v2716, %v2715
        %v2931 = vpack.c.b16 %v2718, %v2717
        %v2932 = vpack.c.b16 %v2720, %v2719
        %v2933 = vpack.c.b16 %v2722, %v2721
        %v2934 = vpack.c.b16 %v2724, %v2723
        %v2935 = vpack.c.b16 %v2726, %v2725
        %v2936 = vpack.c.b16 %v2728, %v2727
        %v2937 = vpack.c.b16 %v2730, %v2729
        %v2938 = vpack.c.b16 %v2732, %v2731
        %v2939 = vpack.c.b16 %v2734, %v2733
        %v2940 = vpack.c.b16 %v2736, %v2735
        %v2941 = vpack.c.b16 %v2738, %v2737
        %v2942 = vpack.c.b16 %v2740, %v2739
        %v2943 = vpack.c.b16 %v2742, %v2741
        %v2944 = vpack.c.b16 %v2744, %v2743
        %v2945 = vpack.c.b16 %v2746, %v2745
        %v2946 = vpack.c.b16 %v2748, %v2747
        %v2947 = vpack.c.b16 %v2750, %v2749
        %v2948 = vpack.c.b16 %v2752, %v2751
        %v2949 = vpack.c.b16 %v2754, %v2753
        %v2950 = vpack.c.b16 %v2756, %v2755
        %v2951 = vpack.c.b16 %v2758, %v2757
        %v2952 = vpack.c.b16 %v2760, %v2759
        %v2953 = vpack.c.b16 %v2762, %v2761
        %v2954 = vpack.c.b16 %v2764, %v2763
        %v2955 = vpack.c.b16 %v2766, %v2765
        %v2956 = vpack.c.b16 %v2768, %v2767
        %v2957 = vpack.c.b16 %v2770, %v2769
        %v2958 = vpack.c.b16 %v2772, %v2771
        %v2959 = vpack.c.b16 %v2774, %v2773
        %v2960 = vpack.c.b16 %v2776, %v2775
        %v2961 = vpack.c.b16 %v2778, %v2777
        %v2962 = vpack.c.b16 %v2780, %v2779
        %v2963 = vpack.c.b16 %v2782, %v2781
        %v2964 = vpack.c.b16 %v2784, %v2783
        %v2965 = vpack.c.b16 %v2786, %v2785
        %v2966 = vpack.c.b16 %v2788, %v2787
        %v2967 = vpack.c.b16 %v2790, %v2789
        %v2968 = vpack.c.b16 %v2792, %v2791
        %v2969 = vpack.c.b16 %v2794, %v2793
        %v2970 = vpack.c.b16 %v2796, %v2795
        %v2971 = vpack.c.b16 %v2798, %v2797
        %v2972 = vpack.c.b16 %v2800, %v2799
        %v2973 = vpack.c.b16 %v2802, %v2801
        %v2974 = vpack.c.b16 %v2804, %v2803
        %v2975 = vpack.c.b16 %v2806, %v2805
        %v2976 = vpack.c.b16 %v2808, %v2807
        %v2977 = vpack.c.b16 %v2810, %v2809
        %v2978 = vpack.c.b16 %v2812, %v2811
        %v2979 = vpack.c.b16 %v2814, %v2813
        %v2980 = vpack.c.b16 %v2816, %v2815
        %v2981 = vpack.c.b16 %v2818, %v2817
        %v2982 = vpack.c.b16 %v2820, %v2819
        %v2983 = vpack.c.b16 %v2822, %v2821
        %v2984 = vpack.c.b16 %v2824, %v2823
        %v2985 = vpack.c.b16 %v2826, %v2825
        %v2986 = vpack.c.b16 %v2828, %v2827
        %v2987 = vpack.c.b16 %v2830, %v2829
        %v2988 = vpack.c.b16 %v2832, %v2831
        %v2989 = vpack.c.b16 %v2834, %v2833
        %v2990 = vpack.c.b16 %v2836, %v2835
        %v2991 = vpack.c.b16 %v2838, %v2837
        %v2992 = vpack.c.b16 %v2840, %v2839
        %v2993 = vpack.c.b16 %v2842, %v2841
        %v2994 = vpack.c.b16 %v2844, %v2843
        %v2995 = vpack.c.b16 %v2846, %v2845
        %v2996 = vpack.c.b16 %v2848, %v2847
        %v2997 = vpack.c.b16 %v2850, %v2849
        %v2998 = vpack.c.b16 %v2852, %v2851
        %v2999 = vpack.c.b16 %v2854, %v2853
        %v3000 = vpack.c.b16 %v2856, %v2855
        %v3001 = vpack.c.b16 %v2858, %v2857
        %v3002 = vpack.c.b16 %v2860, %v2859
        %v3003 = vpack.c.b16 %v2862, %v2861
        %v3004 = vpack.c.b16 %v2864, %v2863
        %v3005 = vpack.c.b16 %v2866, %v2865
        %v3006 = vpack.c.b16 %v2868, %v2867
        %v3007 = vpack.c.b16 %v2870, %v2869
        %v3008 = vpack.c.b16 %v2872, %v2871
        %v3009 = vpack.c.b16 %v2874, %v2873
        %v3010 = vpack.c.b16 %v2876, %v2875
        %v3011 = vpack.c.b16 %v2878, %v2877
        %v3012 = vpack.c.b16 %v2880, %v2879
        %v3013 = vpack.c.b16 %v2882, %v2881
        %v3014 = vpack.c.b16 %v2884, %v2883
        %v3015 = vpack.c.b16 %v2886, %v2885
        %v3016 = vpack.c.b16 %v2888, %v2887
        %3145 = vmatpush.bf16.msra.mxu0 %v2896
        %3146 = vmatpush.bf16.msra.mxu0 %v2895
        %3147 = vmatpush.bf16.msra.mxu0 %v2894
        %3148 = vmatpush.bf16.msra.mxu0 %v2893
        %3149 = vmatpush.bf16.msra.mxu0 %v2892
        %3150 = vmatpush.bf16.msra.mxu0 %v2891
        %3151 = vmatpush.bf16.msra.mxu0 %v2890
        %3152 = vmatpush.bf16.msra.mxu0 %v2889
        %3153 = vmatmul.bf16.gmra.mxu0 %v2101
        %v3154 = vpop.f32.mrf.mxu0
        %v3155 = vadd.f32 %v2375, %v3154
        %v3156 = vpop.f32.mrf.mxu0
        %3157 = vdwg.mxu0
        %3158 = vmatpush.bf16.msra.mxu0 %v2904
        %3159 = vmatpush.bf16.msra.mxu0 %v2903
        %3160 = vmatpush.bf16.msra.mxu0 %v2902
        %3161 = vmatpush.bf16.msra.mxu0 %v2901
        %3162 = vmatpush.bf16.msra.mxu0 %v2900
        %3163 = vmatpush.bf16.msra.mxu0 %v2899
        %3164 = vmatpush.bf16.msra.mxu0 %v2898
        %3165 = vmatpush.bf16.msra.mxu0 %v2897
        %3166 = vmatmul.bf16.gmra.mxu0 %v2102
        %v3167 = vpop.f32.mrf.mxu0
        %v3168 = vadd.f32 %v3155, %v3167
        %v3169 = vpop.f32.mrf.mxu0
        %3170 = vdwg.mxu0
        %3171 = vmatpush.bf16.msra.mxu0 %v2912
        %3172 = vmatpush.bf16.msra.mxu0 %v2911
        %3173 = vmatpush.bf16.msra.mxu0 %v2910
        %3174 = vmatpush.bf16.msra.mxu0 %v2909
        %3175 = vmatpush.bf16.msra.mxu0 %v2908
        %3176 = vmatpush.bf16.msra.mxu0 %v2907
        %3177 = vmatpush.bf16.msra.mxu0 %v2906
        %3178 = vmatpush.bf16.msra.mxu0 %v2905
        %3179 = vmatmul.bf16.gmra.mxu0 %v2103
        %v3180 = vpop.f32.mrf.mxu0
        %v3181 = vadd.f32 %v3168, %v3180
        %v3182 = vpop.f32.mrf.mxu0
        %3183 = vdwg.mxu0
        %3184 = vmatpush.bf16.msra.mxu0 %v2920
        %3185 = vmatpush.bf16.msra.mxu0 %v2919
        %3186 = vmatpush.bf16.msra.mxu0 %v2918
        %3187 = vmatpush.bf16.msra.mxu0 %v2917
        %3188 = vmatpush.bf16.msra.mxu0 %v2916
        %3189 = vmatpush.bf16.msra.mxu0 %v2915
        %3190 = vmatpush.bf16.msra.mxu0 %v2914
        %3191 = vmatpush.bf16.msra.mxu0 %v2913
        %3192 = vmatmul.bf16.gmra.mxu0 %v2104
        %v3193 = vpop.f32.mrf.mxu0
        %v3194 = vadd.f32 %v3181, %v3193
        %v3195 = vpop.f32.mrf.mxu0
        %3196 = vdwg.mxu0
        %3197 = vmatpush.bf16.msra.mxu0 %v2928
        %3198 = vmatpush.bf16.msra.mxu0 %v2927
        %3199 = vmatpush.bf16.msra.mxu0 %v2926
        %3200 = vmatpush.bf16.msra.mxu0 %v2925
        %3201 = vmatpush.bf16.msra.mxu0 %v2924
        %3202 = vmatpush.bf16.msra.mxu0 %v2923
        %3203 = vmatpush.bf16.msra.mxu0 %v2922
        %3204 = vmatpush.bf16.msra.mxu0 %v2921
        %3205 = vmatmul.bf16.gmra.mxu0 %v2105
        %v3206 = vpop.f32.mrf.mxu0
        %v3207 = vadd.f32 %v3194, %v3206
        %v3208 = vpop.f32.mrf.mxu0
        %3209 = vdwg.mxu0
        %3210 = vmatpush.bf16.msra.mxu0 %v2936
        %3211 = vmatpush.bf16.msra.mxu0 %v2935
        %3212 = vmatpush.bf16.msra.mxu0 %v2934
        %3213 = vmatpush.bf16.msra.mxu0 %v2933
        %3214 = vmatpush.bf16.msra.mxu0 %v2932
        %3215 = vmatpush.bf16.msra.mxu0 %v2931
        %3216 = vmatpush.bf16.msra.mxu0 %v2930
        %3217 = vmatpush.bf16.msra.mxu0 %v2929
        %3218 = vmatmul.bf16.gmra.mxu0 %v2106
        %v3219 = vpop.f32.mrf.mxu0
        %v3220 = vadd.f32 %v3207, %v3219
        %v3221 = vpop.f32.mrf.mxu0
        %3222 = vdwg.mxu0
        %3223 = vmatpush.bf16.msra.mxu0 %v2944
        %3224 = vmatpush.bf16.msra.mxu0 %v2943
        %3225 = vmatpush.bf16.msra.mxu0 %v2942
        %3226 = vmatpush.bf16.msra.mxu0 %v2941
        %3227 = vmatpush.bf16.msra.mxu0 %v2940
        %3228 = vmatpush.bf16.msra.mxu0 %v2939
        %3229 = vmatpush.bf16.msra.mxu0 %v2938
        %3230 = vmatpush.bf16.msra.mxu0 %v2937
        %3231 = vmatmul.bf16.gmra.mxu0 %v2107
        %v3232 = vpop.f32.mrf.mxu0
        %v3233 = vadd.f32 %v3220, %v3232
        %v3234 = vpop.f32.mrf.mxu0
        %3235 = vdwg.mxu0
        %3236 = vmatpush.bf16.msra.mxu0 %v2952
        %3237 = vmatpush.bf16.msra.mxu0 %v2951
        %3238 = vmatpush.bf16.msra.mxu0 %v2950
        %3239 = vmatpush.bf16.msra.mxu0 %v2949
        %3240 = vmatpush.bf16.msra.mxu0 %v2948
        %3241 = vmatpush.bf16.msra.mxu0 %v2947
        %3242 = vmatpush.bf16.msra.mxu0 %v2946
        %3243 = vmatpush.bf16.msra.mxu0 %v2945
        %3244 = vmatmul.bf16.gmra.mxu0 %v2108
        %v3245 = vpop.f32.mrf.mxu0
        %v3246 = vadd.f32 %v3233, %v3245
        %v3247 = vpop.f32.mrf.mxu0
        %3248 = vdwg.mxu0
        %3249 = vmatpush.bf16.msra.mxu0 %v2960
        %3250 = vmatpush.bf16.msra.mxu0 %v2959
        %3251 = vmatpush.bf16.msra.mxu0 %v2958
        %3252 = vmatpush.bf16.msra.mxu0 %v2957
        %3253 = vmatpush.bf16.msra.mxu0 %v2956
        %3254 = vmatpush.bf16.msra.mxu0 %v2955
        %3255 = vmatpush.bf16.msra.mxu0 %v2954
        %3256 = vmatpush.bf16.msra.mxu0 %v2953
        %3257 = vmatmul.bf16.gmra.mxu0 %v2109
        %v3258 = vpop.f32.mrf.mxu0
        %v3259 = vadd.f32 %v3246, %v3258
        %v3260 = vpop.f32.mrf.mxu0
        %3261 = vdwg.mxu0
        %3262 = vmatpush.bf16.msra.mxu0 %v2968
        %3263 = vmatpush.bf16.msra.mxu0 %v2967
        %3264 = vmatpush.bf16.msra.mxu0 %v2966
        %3265 = vmatpush.bf16.msra.mxu0 %v2965
        %3266 = vmatpush.bf16.msra.mxu0 %v2964
        %3267 = vmatpush.bf16.msra.mxu0 %v2963
        %3268 = vmatpush.bf16.msra.mxu0 %v2962
        %3269 = vmatpush.bf16.msra.mxu0 %v2961
        %3270 = vmatmul.bf16.gmra.mxu0 %v2110
        %v3271 = vpop.f32.mrf.mxu0
        %v3272 = vadd.f32 %v3259, %v3271
        %v3273 = vpop.f32.mrf.mxu0
        %3274 = vdwg.mxu0
        %3275 = vmatpush.bf16.msra.mxu0 %v2976
        %3276 = vmatpush.bf16.msra.mxu0 %v2975
        %3277 = vmatpush.bf16.msra.mxu0 %v2974
        %3278 = vmatpush.bf16.msra.mxu0 %v2973
        %3279 = vmatpush.bf16.msra.mxu0 %v2972
        %3280 = vmatpush.bf16.msra.mxu0 %v2971
        %3281 = vmatpush.bf16.msra.mxu0 %v2970
        %3282 = vmatpush.bf16.msra.mxu0 %v2969
        %3283 = vmatmul.bf16.gmra.mxu0 %v2111
        %v3284 = vpop.f32.mrf.mxu0
        %v3285 = vadd.f32 %v3272, %v3284
        %v3286 = vpop.f32.mrf.mxu0
        %3287 = vdwg.mxu0
        %3288 = vmatpush.bf16.msra.mxu0 %v2984
        %3289 = vmatpush.bf16.msra.mxu0 %v2983
        %3290 = vmatpush.bf16.msra.mxu0 %v2982
        %3291 = vmatpush.bf16.msra.mxu0 %v2981
        %3292 = vmatpush.bf16.msra.mxu0 %v2980
        %3293 = vmatpush.bf16.msra.mxu0 %v2979
        %3294 = vmatpush.bf16.msra.mxu0 %v2978
        %3295 = vmatpush.bf16.msra.mxu0 %v2977
        %3296 = vmatmul.bf16.gmra.mxu0 %v2112
        %v3297 = vpop.f32.mrf.mxu0
        %v3298 = vadd.f32 %v3285, %v3297
        %v3299 = vpop.f32.mrf.mxu0
        %3300 = vdwg.mxu0
        %3301 = vmatpush.bf16.msra.mxu0 %v2992
        %3302 = vmatpush.bf16.msra.mxu0 %v2991
        %3303 = vmatpush.bf16.msra.mxu0 %v2990
        %3304 = vmatpush.bf16.msra.mxu0 %v2989
        %3305 = vmatpush.bf16.msra.mxu0 %v2988
        %3306 = vmatpush.bf16.msra.mxu0 %v2987
        %3307 = vmatpush.bf16.msra.mxu0 %v2986
        %3308 = vmatpush.bf16.msra.mxu0 %v2985
        %3309 = vmatmul.bf16.gmra.mxu0 %v2113
        %v3310 = vpop.f32.mrf.mxu0
        %v3311 = vadd.f32 %v3298, %v3310
        %v3312 = vpop.f32.mrf.mxu0
        %3313 = vdwg.mxu0
        %3314 = vmatpush.bf16.msra.mxu0 %v3000
        %3315 = vmatpush.bf16.msra.mxu0 %v2999
        %3316 = vmatpush.bf16.msra.mxu0 %v2998
        %3317 = vmatpush.bf16.msra.mxu0 %v2997
        %3318 = vmatpush.bf16.msra.mxu0 %v2996
        %3319 = vmatpush.bf16.msra.mxu0 %v2995
        %3320 = vmatpush.bf16.msra.mxu0 %v2994
        %3321 = vmatpush.bf16.msra.mxu0 %v2993
        %3322 = vmatmul.bf16.gmra.mxu0 %v2114
        %v3323 = vpop.f32.mrf.mxu0
        %v3324 = vadd.f32 %v3311, %v3323
        %v3325 = vpop.f32.mrf.mxu0
        %3326 = vdwg.mxu0
        %3327 = vmatpush.bf16.msra.mxu0 %v3008
        %3328 = vmatpush.bf16.msra.mxu0 %v3007
        %3329 = vmatpush.bf16.msra.mxu0 %v3006
        %3330 = vmatpush.bf16.msra.mxu0 %v3005
        %3331 = vmatpush.bf16.msra.mxu0 %v3004
        %3332 = vmatpush.bf16.msra.mxu0 %v3003
        %3333 = vmatpush.bf16.msra.mxu0 %v3002
        %3334 = vmatpush.bf16.msra.mxu0 %v3001
        %3335 = vmatmul.bf16.gmra.mxu0 %v2115
        %v3336 = vpop.f32.mrf.mxu0
        %v3337 = vadd.f32 %v3324, %v3336
        %v3338 = vpop.f32.mrf.mxu0
        %3339 = vdwg.mxu0
        %3340 = vmatpush.bf16.msra.mxu0 %v3016
        %3341 = vmatpush.bf16.msra.mxu0 %v3015
        %3342 = vmatpush.bf16.msra.mxu0 %v3014
        %3343 = vmatpush.bf16.msra.mxu0 %v3013
        %3344 = vmatpush.bf16.msra.mxu0 %v3012
        %3345 = vmatpush.bf16.msra.mxu0 %v3011
        %3346 = vmatpush.bf16.msra.mxu0 %v3010
        %3347 = vmatpush.bf16.msra.mxu0 %v3009
        %3348 = vmatmul.bf16.gmra.mxu0 %v2116
        %v3349 = vpop.f32.mrf.mxu0
        %v3350 = vadd.f32 %v3337, %v3349
        %v3351 = vpop.f32.mrf.mxu0
        %3352 = vdwg.mxu0
        %v3353 = vadd.f32 %v3350, %v1644
        %v3354 = vld [vmem:[%s771] sm:$0x1]
        %v3355 = vld [vmem:[%s774] sm:$0x1]
        %v3356 = vsel %vm807, %v3353, 0.0
        %3357 = vadd.xlane.f32.xlu0 %v3356
        %v3358 = vpop.xlane.xlu0 %3357
        %v3359 = vmul.f32 %v3358, %v1617
        %v3360 = vsub.f32 %v3353, %v3359
        %v3361 = vmul.f32 %v3360, %v3360
        %v3362 = vsel %vm807, %v3361, 0.0
        %3363 = vadd.xlane.f32.xlu0 %v3362
        %v3364 = vpop.xlane.xlu0 %3363
        %v3365 = vmul.f32 %v3364, %v1617
        %v3366 = vadd.f32 %v3365, 1e-05
        %v3367 = vrsqrt.pop %v3366
        %v3368 = vmul.f32 %v3367, %v3366
        %v3369 = vmul.f32 %v3368, %v3367
        %v3370 = vmul.f32 0.5, %v3369
        %v3371 = vsub.f32 1.5, %v3370
        %v3372 = vmul.f32 %v3367, %v3371
        %vm3373 = vweird.f32 %v3366
        %vm3374 = vweird.f32 %v3367
        %vm3375 = vmor %vm3373, %vm3374
        %v3376 = vsel %vm3375, %v3367, %v3372
        %v3377 = vmul.f32 %v3360, %v3376
        %v3379 = vperm.slane %v3354, 0
        %v3381 = vmul.f32 %v3377, %v3379
        %v3383 = vperm.slane %v3355, 0
        %v3385 = vadd.f32 %v3381, %v3383
        %3386 = vst.msk [vmem:[%s713] sm:$0xff] %vm807, %v3385
        %s3387 = sand.u32 %s466, 1
        %s3388 = scalar_lea.sflag [#allocation3], %s3387
        %s3389 = sand.u32 %s466, 1
        %s3390 = smul.addr %s3389, 8
        %s3391 = scalar_lea.vmem [#allocation2], %s3390
        // Predicated region
        $region89: #{tpu_custom_call.1} parent=83 // pred_check
          %p3392 = pneg %p476
        $region90: #{tpu_custom_call.1} parent=83 // pred_check_branch
          %3394 = sbr.rel (%p3392) target = $region92
        $region91: #{tpu_custom_call.1} parent=83 // pred_region
          %3396 = vsyncadd %s3388, 0
          %s3397 = smul.addr %s34, 8
          %s3398 = scalar_lea.hbm %s16, %s3397
          %s3400 = sshll.u32 %s3391, 4
          %s3401 = int_to_ptr.vmem [resolvable:$true] %s3400
          %s3402 = sshll.u32 %s3398, 4
          %s3403 = int_to_ptr.hbm [resolvable:$true] %s3402
          %3405 = dma.vmem_to_hbm [thread:$0]  %s3401, 128, %s3403, %s3388
        $region92: #{tpu_custom_call.1} parent=83 // pred_fallthru
          _
      $region84: #{tpu_custom_call.1} parent=5 // pred_fallthru
        _
      %p3406 = scmp.le.s32.totalorder 2, %s25
      // Predicated region
      $region93: #{tpu_custom_call.1} parent=5 // pred_check
        %p3407 = pneg %p3406
      $region94: #{tpu_custom_call.1} parent=5 // pred_check_branch
        %3409 = sbr.rel (%p3407) target = $region96
      $region95: #{tpu_custom_call.1} parent=5 // pred_region
        %s3410 = ssub.s32 %s25, 2
        // Predicated region
        $region97: #{tpu_custom_call.1} parent=95 // pred_check
          %p3411 = pneg %p482
        $region98: #{tpu_custom_call.1} parent=95 // pred_check_branch
          %3413 = sbr.rel (%p3411) target = $region100
        $region99: #{tpu_custom_call.1} parent=95 // pred_region
          %s3414 = sand.u32 %s467, 1
          %s3415 = scalar_lea.sflag [#allocation3], %s3414
          %s3416 = sand.u32 %s467, 1
          %s3417 = smul.addr %s3416, 8
          %s3418 = scalar_lea.vmem [#allocation2], %s3417
          %3420 = dma.done %s3415, 128
        $region100: #{tpu_custom_call.1} parent=95 // pred_fallthru
          _
      $region96: #{tpu_custom_call.1} parent=5 // pred_fallthru
        _
    $region6: #{tpu_custom_call.1} parent=1 // loop_footer
      %s29 = sadd.s32 1, %s25
    $region7: #{tpu_custom_call.1} parent=1 // loop_footer_branch
      %24 = sbr.rel target = $region3
    $region8: #{tpu_custom_call.1} parent=1 // loop_exit
      _
    %3421 = vsyncpa [#allocation3], 1
    %s3422 = scalar_lea.sflag [#allocation3], 1
    %3423 = vsyncpa %s3422, 1

</llo_original>
